<compile_context>
chip_gen: v5e
topology: v5e:2x2
jax: 0.10.0
libtpu: 0.0.40
codegen_flags: <defaults>
</compile_context>

<pallas_src>
from math import sqrt

import jax
import jax.numpy as jnp
from jax.experimental import pallas as pl
from jax.experimental.pallas import tpu as pltpu

NUMBER = 8   # len(list_desc)
HIDDEN = 32  # hidden_size
LAYERS = 2   # num_layers
K = 4        # len(dict_params[desc]) -- same for every desc (required by torch.cat)


def _controller_kernel(w_ih0_ref, w_hh0_ref, w_ih1_ref, w_hh1_ref,
                       b0_ref, b1_ref, hw_ref, hb_ref,
                       which_ref, u_ref,
                       dec_ref, prob_ref, total_ref):
    H, Kc, N = HIDDEN, K, NUMBER
    f32 = jnp.float32

    # ---- loop-invariant loads, hoisted off the per-step dependence chain -----------
    w_ih0 = w_ih0_ref[...]          # (1, 4H) f32  (scalar-input row; VPU operand)
    w_hh0 = w_hh0_ref[...]          # (H, 4H) bf16
    w_ih1 = w_ih1_ref[...]          # (H, 4H) bf16
    w_hh1 = w_hh1_ref[...]          # (H, 4H) bf16
    b0 = b0_ref[...]                # (1, 4H) f32
    b1 = b1_ref[...]                # (1, 4H) f32
    hws = [hw_ref[i] for i in range(N)]   # per-step (H, K) bf16 head weights
    hbs = [hb_ref[i] for i in range(N)]   # per-step (1, K) f32 head biases
    # per-step SMEM scalars broadcast once, ahead of the serial chain
    u_vec = [jnp.full((1, 1), u_ref[i], f32) for i in range(N)]
    forced = [jnp.full((1, 1), which_ref[i], f32) for i in range(N)]

    h0 = jnp.zeros((1, H), jnp.bfloat16)
    h1 = jnp.zeros((1, H), jnp.bfloat16)
    c0 = jnp.zeros((1, H), f32)
    c1 = jnp.zeros((1, H), f32)
    x = jnp.zeros((1, 1), f32)      # torch.zeros([1,1,1]) scalar input

    for step in range(N):
        # ---- layer 0 LSTM cell (scalar input -> VPU broadcast-mul, no matmul) -------
        gates0 = (x * w_ih0
                  + jnp.dot(h0, w_hh0, preferred_element_type=f32)
                  + b0)                                   # (1,4H), gate order i,f,g,o
        s0 = jax.nn.sigmoid(gates0)                       # single EUP pass over 4H
        g0 = 2.0 * s0[:, 2 * H:3 * H] - 1.0               # tanh(g) = 2*sigmoid(2g) - 1
        c0 = s0[:, H:2 * H] * c0 + s0[:, 0:H] * g0
        h0 = (s0[:, 3 * H:4 * H] * jnp.tanh(c0)).astype(jnp.bfloat16)

        # ---- layer 1 LSTM cell (ih/hh kept separate: hh dot independent of h0) ------
        gates1 = (jnp.dot(h0, w_ih1, preferred_element_type=f32)
                  + jnp.dot(h1, w_hh1, preferred_element_type=f32)
                  + b1)
        s1 = jax.nn.sigmoid(gates1)
        g1 = 2.0 * s1[:, 2 * H:3 * H] - 1.0
        c1 = s1[:, H:2 * H] * c1 + s1[:, 0:H] * g1
        h1 = (s1[:, 3 * H:4 * H] * jnp.tanh(c1)).astype(jnp.bfloat16)   # == h_n[-1,0]

        # ---- per-step linear head + softmax ------------------------------------------
        logits = jnp.dot(h1, hws[step], preferred_element_type=f32) + hbs[step]  # (1,K)
        e = jnp.exp(logits)                       # logits bounded (~|6|): no max-sub
        s = jnp.sum(e, axis=1, keepdims=True)
        r = pl.reciprocal(s, approx=True)
        r = r * (2.0 - s * r)                     # one Newton step: ~f32-accurate, VPU
        probs = e * r                             # (1, K)
        total_ref[step:step + 1, :] = probs

        # ---- categorical sample via inverse CDF (slice adds, no iota/where/reduce) ---
        ps = [probs[:, j:j + 1] for j in range(Kc)]
        u = u_vec[step]
        cdf = ps[0]
        ge = (cdf <= u).astype(f32)
        sampled = ge                                              # float index
        proba = ps[0] + ge * (ps[1] - ps[0])                      # p(sampled)
        for j in range(1, Kc - 1):
            cdf = cdf + ps[j]
            ge = (cdf <= u).astype(f32)
            sampled = sampled + ge
            proba = proba + ge * (ps[j + 1] - ps[j])

        # ---- teacher forcing (torch records proba of the SAMPLED index even if forced)
        idx_f = jnp.where(forced[step] != -1.0, forced[step], sampled)
        dec_ref[:, step:step + 1] = idx_f.astype(jnp.int32)
        prob_ref[:, step:step + 1] = proba
        x = idx_f                                # feed decision to next step


def controller_forward(params, which_to_use, uniforms):
    vmem = pltpu.MemorySpace.VMEM
    smem = pltpu.MemorySpace.SMEM
    out_shapes = (
        jax.ShapeDtypeStruct((1, NUMBER), jnp.int32),
        jax.ShapeDtypeStruct((1, NUMBER), jnp.float32),
        jax.ShapeDtypeStruct((NUMBER, K), jnp.float32),
    )
    dec, probs, total = pl.pallas_call(
        _controller_kernel,
        out_shape=out_shapes,
        in_specs=[pl.BlockSpec(memory_space=vmem)] * 8
                 + [pl.BlockSpec(memory_space=smem)] * 2,
        out_specs=(pl.BlockSpec(memory_space=vmem),) * 3,
    )(params["w_ih0_row"], params["w_hh0_t"], params["w_ih1_t"], params["w_hh1_t"],
      params["b0"], params["b1"], params["head_w"], params["head_b"],
      which_to_use.astype(jnp.float32), uniforms.astype(jnp.float32))
    # matches torch return: (all_decision.int(), all_probs, total_probs)
    return dec.reshape(NUMBER), probs.reshape(NUMBER), total


def init_params(key):
    """Synthetic PyTorch-shaped weights, packed into the kernel layout:
    transposed, g-gate columns pre-scaled by 2 (for the 2*sigmoid(2g)-1 identity),
    MXU operands cast to bf16, head bank stacked (N, H, K)."""
    H, N, Kc = HIDDEN, NUMBER, K
    bound = 1.0 / sqrt(H)
    keys = jax.random.split(key, 8 + 2 * N)
    it = iter(keys)

    def u(shape):
        return jax.random.uniform(next(it), shape, jnp.float32, -bound, bound)

    # layer 0 (input size 1)
    w_ih0 = u((4 * H, 1))                     # PyTorch weight_ih_l0
    w_hh0 = u((4 * H, H))                     # PyTorch weight_hh_l0
    b0 = (u((4 * H,)) + u((4 * H,))).reshape(1, 4 * H)
    # layer 1 (input size H)
    w_ih1 = u((4 * H, H))
    w_hh1 = u((4 * H, H))
    b1 = (u((4 * H,)) + u((4 * H,))).reshape(1, 4 * H)
    # per-step heads: nn.Linear(H, K) each
    head_w = jnp.stack([u((Kc, H)).T for _ in range(N)])               # (N, H, K)
    head_b = jnp.stack([u((Kc,)).reshape(1, Kc) for _ in range(N)])    # (N, 1, K)

    def scale_g(m):        # columns [2H:3H] (g gate) scaled by 2 (exact power of 2)
        return m.at[..., 2 * H:3 * H].multiply(2.0)

    return {
        "w_ih0_row": scale_g(w_ih0.T),                              # (1, 4H) f32
        "w_hh0_t": scale_g(w_hh0.T).astype(jnp.bfloat16),           # (H, 4H) bf16
        "w_ih1_t": scale_g(w_ih1.T).astype(jnp.bfloat16),           # (H, 4H) bf16
        "w_hh1_t": scale_g(w_hh1.T).astype(jnp.bfloat16),           # (H, 4H) bf16
        "b0": scale_g(b0),                                          # (1, 4H) f32
        "b1": scale_g(b1),                                          # (1, 4H) f32
        "head_w": head_w.astype(jnp.bfloat16),                      # (N, H, K) bf16
        "head_b": head_b,                                           # (N, 1, K) f32
    }


def reference_forward(params, which, uniforms):
    """Pure-JAX reference of the same math (canonical tanh-gate form; the 0.5 factor
    exactly undoes the g-column pre-scale, which is a lossless power-of-2 shift)."""
    H, Kc, N = HIDDEN, K, NUMBER
    w_ih0, w_hh0 = params["w_ih0_row"], params["w_hh0_t"]
    w_ih1, w_hh1 = params["w_ih1_t"], params["w_hh1_t"]
    b0, b1 = params["b0"], params["b1"]
    hw, hb = params["head_w"], params["head_b"]
    bf16, f32 = jnp.bfloat16, jnp.float32

    h0 = jnp.zeros((1, H), bf16)
    h1 = jnp.zeros((1, H), bf16)
    c0 = jnp.zeros((1, H), f32)
    c1 = jnp.zeros((1, H), f32)
    x = jnp.zeros((1, 1), f32)
    dec, prb, tot = [], [], []
    for step in range(N):
        ga = x * w_ih0 + jnp.dot(h0, w_hh0, preferred_element_type=f32) + b0
        c0 = (jax.nn.sigmoid(ga[:, H:2 * H]) * c0
              + jax.nn.sigmoid(ga[:, 0:H]) * jnp.tanh(0.5 * ga[:, 2 * H:3 * H]))
        h0 = (jax.nn.sigmoid(ga[:, 3 * H:]) * jnp.tanh(c0)).astype(bf16)
        gb = (jnp.dot(h0, w_ih1, preferred_element_type=f32)
              + jnp.dot(h1, w_hh1, preferred_element_type=f32) + b1)
        c1 = (jax.nn.sigmoid(gb[:, H:2 * H]) * c1
              + jax.nn.sigmoid(gb[:, 0:H]) * jnp.tanh(0.5 * gb[:, 2 * H:3 * H]))
        h1 = (jax.nn.sigmoid(gb[:, 3 * H:]) * jnp.tanh(c1)).astype(bf16)
        logits = jnp.dot(h1, hw[step], preferred_element_type=f32) + hb[step]
        e = jnp.exp(logits)
        p = e / jnp.sum(e, axis=1, keepdims=True)                  # (1, K)
        cdf = jnp.cumsum(p[0])
        sampled = jnp.minimum(jnp.sum((cdf <= uniforms[step]).astype(jnp.int32)), Kc - 1)
        proba = p[0, sampled]
        idx = jnp.where(which[step] != -1.0, which[step], sampled.astype(f32))
        dec.append(idx)
        prb.append(proba)
        tot.append(p[0])
        x = jnp.full((1, 1), idx, f32)
    return (jnp.stack(dec).astype(jnp.int32), jnp.stack(prb), jnp.stack(tot))


if __name__ == "__main__":
    key = jax.random.PRNGKey(0)
    pkey, ukey = jax.random.split(key)
    params = init_params(pkey)

    # which_to_use: -1 means "sample freely", otherwise force that choice index.
    which_to_use = jnp.array([-1.0, 2.0, -1.0, 0.0, -1.0, -1.0, 1.0, -1.0], jnp.float32)
    uniforms = jax.random.uniform(ukey, (NUMBER,), jnp.float32)

    all_decision, all_probs, total_probs = controller_forward(params, which_to_use, uniforms)
    jax.block_until_ready((all_decision, all_probs, total_probs))

    # structural checks
    assert all_decision.shape == (NUMBER,) and all_decision.dtype == jnp.int32
    assert all_probs.shape == (NUMBER,)
    assert total_probs.shape == (NUMBER, K)
    assert int(all_decision[1]) == 2 and int(all_decision[3]) == 0 and int(all_decision[6]) == 1
    assert bool(jnp.all((all_decision >= 0) & (all_decision < K)))
    assert bool(jnp.all(jnp.abs(jnp.sum(total_probs, axis=1) - 1.0) < 1e-3))
    assert bool(jnp.all((all_probs > 0.0) & (all_probs <= 1.0)))

    # numeric check of the LSTM + head + softmax chain: force the reference with the
    # kernel's own decision sequence so the comparison is sampling-independent.
    # (tolerance 3e-3: bf16 MXU operands in both paths + Pallas vs XLA transcendentals)
    ref_dec, _, ref_total = reference_forward(
        params, all_decision.astype(jnp.float32), uniforms)
    assert bool(jnp.all(ref_dec == all_decision))
    assert bool(jnp.allclose(total_probs, ref_total, rtol=3e-3, atol=3e-3))

    print("KERNEL_OK")
</pallas_src>

<mosaic_0001>
module attributes {stable_mosaic.version = 11 : i64} {
  func.func @_controller_kernel(%arg0: memref<1x128xf32, #tpu.memory_space<vmem>>, %arg1: memref<32x128xbf16, #tpu.memory_space<vmem>>, %arg2: memref<32x128xbf16, #tpu.memory_space<vmem>>, %arg3: memref<32x128xbf16, #tpu.memory_space<vmem>>, %arg4: memref<1x128xf32, #tpu.memory_space<vmem>>, %arg5: memref<1x128xf32, #tpu.memory_space<vmem>>, %arg6: memref<8x32x4xbf16, #tpu.memory_space<vmem>>, %arg7: memref<8x1x4xf32, #tpu.memory_space<vmem>>, %arg8: memref<8xf32, #tpu.memory_space<smem>>, %arg9: memref<8xf32, #tpu.memory_space<smem>>, %arg10: memref<1x8xi32, #tpu.memory_space<vmem>>, %arg11: memref<1x8xf32, #tpu.memory_space<vmem>>, %arg12: memref<8x4xf32, #tpu.memory_space<vmem>>) attributes {dimension_semantics = [], scalar_prefetch = 0 : i64, scratch_operands = 0 : i64, tpu.core_type = #tpu.core_type<tc>} {
    %c0 = arith.constant 0 : index
    %c0_0 = arith.constant 0 : index
    %0 = vector.load %arg0[%c0, %c0_0] : memref<1x128xf32, #tpu.memory_space<vmem>>, vector<1x128xf32>
    %c0_1 = arith.constant 0 : index
    %c0_2 = arith.constant 0 : index
    %1 = vector.load %arg1[%c0_1, %c0_2] : memref<32x128xbf16, #tpu.memory_space<vmem>>, vector<32x128xbf16>
    %c0_3 = arith.constant 0 : index
    %c0_4 = arith.constant 0 : index
    %2 = vector.load %arg2[%c0_3, %c0_4] : memref<32x128xbf16, #tpu.memory_space<vmem>>, vector<32x128xbf16>
    %c0_5 = arith.constant 0 : index
    %c0_6 = arith.constant 0 : index
    %3 = vector.load %arg3[%c0_5, %c0_6] : memref<32x128xbf16, #tpu.memory_space<vmem>>, vector<32x128xbf16>
    %c0_7 = arith.constant 0 : index
    %c0_8 = arith.constant 0 : index
    %4 = vector.load %arg4[%c0_7, %c0_8] : memref<1x128xf32, #tpu.memory_space<vmem>>, vector<1x128xf32>
    %c0_9 = arith.constant 0 : index
    %c0_10 = arith.constant 0 : index
    %5 = vector.load %arg5[%c0_9, %c0_10] : memref<1x128xf32, #tpu.memory_space<vmem>>, vector<1x128xf32>
    %c0_11 = arith.constant 0 : index
    %c0_12 = arith.constant 0 : index
    %c0_13 = arith.constant 0 : index
    %6 = vector.load %arg6[%c0_11, %c0_12, %c0_13] : memref<8x32x4xbf16, #tpu.memory_space<vmem>>, vector<1x32x4xbf16>
    %7 = vector.shape_cast %6 : vector<1x32x4xbf16> to vector<32x4xbf16>
    %c1 = arith.constant 1 : index
    %c0_14 = arith.constant 0 : index
    %c0_15 = arith.constant 0 : index
    %8 = vector.load %arg6[%c1, %c0_14, %c0_15] : memref<8x32x4xbf16, #tpu.memory_space<vmem>>, vector<1x32x4xbf16>
    %9 = vector.shape_cast %8 : vector<1x32x4xbf16> to vector<32x4xbf16>
    %c2 = arith.constant 2 : index
    %c0_16 = arith.constant 0 : index
    %c0_17 = arith.constant 0 : index
    %10 = vector.load %arg6[%c2, %c0_16, %c0_17] : memref<8x32x4xbf16, #tpu.memory_space<vmem>>, vector<1x32x4xbf16>
    %11 = vector.shape_cast %10 : vector<1x32x4xbf16> to vector<32x4xbf16>
    %c3 = arith.constant 3 : index
    %c0_18 = arith.constant 0 : index
    %c0_19 = arith.constant 0 : index
    %12 = vector.load %arg6[%c3, %c0_18, %c0_19] : memref<8x32x4xbf16, #tpu.memory_space<vmem>>, vector<1x32x4xbf16>
    %13 = vector.shape_cast %12 : vector<1x32x4xbf16> to vector<32x4xbf16>
    %c4 = arith.constant 4 : index
    %c0_20 = arith.constant 0 : index
    %c0_21 = arith.constant 0 : index
    %14 = vector.load %arg6[%c4, %c0_20, %c0_21] : memref<8x32x4xbf16, #tpu.memory_space<vmem>>, vector<1x32x4xbf16>
    %15 = vector.shape_cast %14 : vector<1x32x4xbf16> to vector<32x4xbf16>
    %c5 = arith.constant 5 : index
    %c0_22 = arith.constant 0 : index
    %c0_23 = arith.constant 0 : index
    %16 = vector.load %arg6[%c5, %c0_22, %c0_23] : memref<8x32x4xbf16, #tpu.memory_space<vmem>>, vector<1x32x4xbf16>
    %17 = vector.shape_cast %16 : vector<1x32x4xbf16> to vector<32x4xbf16>
    %c6 = arith.constant 6 : index
    %c0_24 = arith.constant 0 : index
    %c0_25 = arith.constant 0 : index
    %18 = vector.load %arg6[%c6, %c0_24, %c0_25] : memref<8x32x4xbf16, #tpu.memory_space<vmem>>, vector<1x32x4xbf16>
    %19 = vector.shape_cast %18 : vector<1x32x4xbf16> to vector<32x4xbf16>
    %c7 = arith.constant 7 : index
    %c0_26 = arith.constant 0 : index
    %c0_27 = arith.constant 0 : index
    %20 = vector.load %arg6[%c7, %c0_26, %c0_27] : memref<8x32x4xbf16, #tpu.memory_space<vmem>>, vector<1x32x4xbf16>
    %21 = vector.shape_cast %20 : vector<1x32x4xbf16> to vector<32x4xbf16>
    %c0_28 = arith.constant 0 : index
    %c0_29 = arith.constant 0 : index
    %c0_30 = arith.constant 0 : index
    %22 = vector.load %arg7[%c0_28, %c0_29, %c0_30] : memref<8x1x4xf32, #tpu.memory_space<vmem>>, vector<1x1x4xf32>
    %23 = vector.shape_cast %22 : vector<1x1x4xf32> to vector<1x4xf32>
    %c1_31 = arith.constant 1 : index
    %c0_32 = arith.constant 0 : index
    %c0_33 = arith.constant 0 : index
    %24 = vector.load %arg7[%c1_31, %c0_32, %c0_33] : memref<8x1x4xf32, #tpu.memory_space<vmem>>, vector<1x1x4xf32>
    %25 = vector.shape_cast %24 : vector<1x1x4xf32> to vector<1x4xf32>
    %c2_34 = arith.constant 2 : index
    %c0_35 = arith.constant 0 : index
    %c0_36 = arith.constant 0 : index
    %26 = vector.load %arg7[%c2_34, %c0_35, %c0_36] : memref<8x1x4xf32, #tpu.memory_space<vmem>>, vector<1x1x4xf32>
    %27 = vector.shape_cast %26 : vector<1x1x4xf32> to vector<1x4xf32>
    %c3_37 = arith.constant 3 : index
    %c0_38 = arith.constant 0 : index
    %c0_39 = arith.constant 0 : index
    %28 = vector.load %arg7[%c3_37, %c0_38, %c0_39] : memref<8x1x4xf32, #tpu.memory_space<vmem>>, vector<1x1x4xf32>
    %29 = vector.shape_cast %28 : vector<1x1x4xf32> to vector<1x4xf32>
    %c4_40 = arith.constant 4 : index
    %c0_41 = arith.constant 0 : index
    %c0_42 = arith.constant 0 : index
    %30 = vector.load %arg7[%c4_40, %c0_41, %c0_42] : memref<8x1x4xf32, #tpu.memory_space<vmem>>, vector<1x1x4xf32>
    %31 = vector.shape_cast %30 : vector<1x1x4xf32> to vector<1x4xf32>
    %c5_43 = arith.constant 5 : index
    %c0_44 = arith.constant 0 : index
    %c0_45 = arith.constant 0 : index
    %32 = vector.load %arg7[%c5_43, %c0_44, %c0_45] : memref<8x1x4xf32, #tpu.memory_space<vmem>>, vector<1x1x4xf32>
    %33 = vector.shape_cast %32 : vector<1x1x4xf32> to vector<1x4xf32>
    %c6_46 = arith.constant 6 : index
    %c0_47 = arith.constant 0 : index
    %c0_48 = arith.constant 0 : index
    %34 = vector.load %arg7[%c6_46, %c0_47, %c0_48] : memref<8x1x4xf32, #tpu.memory_space<vmem>>, vector<1x1x4xf32>
    %35 = vector.shape_cast %34 : vector<1x1x4xf32> to vector<1x4xf32>
    %c7_49 = arith.constant 7 : index
    %c0_50 = arith.constant 0 : index
    %c0_51 = arith.constant 0 : index
    %36 = vector.load %arg7[%c7_49, %c0_50, %c0_51] : memref<8x1x4xf32, #tpu.memory_space<vmem>>, vector<1x1x4xf32>
    %37 = vector.shape_cast %36 : vector<1x1x4xf32> to vector<1x4xf32>
    %c0_52 = arith.constant 0 : index
    %38 = memref.load %arg9[%c0_52] : memref<8xf32, #tpu.memory_space<smem>>
    %39 = vector.broadcast %38 : f32 to vector<1x1xf32>
    %c1_53 = arith.constant 1 : index
    %40 = memref.load %arg9[%c1_53] : memref<8xf32, #tpu.memory_space<smem>>
    %41 = vector.broadcast %40 : f32 to vector<1x1xf32>
    %c2_54 = arith.constant 2 : index
    %42 = memref.load %arg9[%c2_54] : memref<8xf32, #tpu.memory_space<smem>>
    %43 = vector.broadcast %42 : f32 to vector<1x1xf32>
    %c3_55 = arith.constant 3 : index
    %44 = memref.load %arg9[%c3_55] : memref<8xf32, #tpu.memory_space<smem>>
    %45 = vector.broadcast %44 : f32 to vector<1x1xf32>
    %c4_56 = arith.constant 4 : index
    %46 = memref.load %arg9[%c4_56] : memref<8xf32, #tpu.memory_space<smem>>
    %47 = vector.broadcast %46 : f32 to vector<1x1xf32>
    %c5_57 = arith.constant 5 : index
    %48 = memref.load %arg9[%c5_57] : memref<8xf32, #tpu.memory_space<smem>>
    %49 = vector.broadcast %48 : f32 to vector<1x1xf32>
    %c6_58 = arith.constant 6 : index
    %50 = memref.load %arg9[%c6_58] : memref<8xf32, #tpu.memory_space<smem>>
    %51 = vector.broadcast %50 : f32 to vector<1x1xf32>
    %c7_59 = arith.constant 7 : index
    %52 = memref.load %arg9[%c7_59] : memref<8xf32, #tpu.memory_space<smem>>
    %53 = vector.broadcast %52 : f32 to vector<1x1xf32>
    %c0_60 = arith.constant 0 : index
    %54 = memref.load %arg8[%c0_60] : memref<8xf32, #tpu.memory_space<smem>>
    %55 = vector.broadcast %54 : f32 to vector<1x1xf32>
    %c1_61 = arith.constant 1 : index
    %56 = memref.load %arg8[%c1_61] : memref<8xf32, #tpu.memory_space<smem>>
    %57 = vector.broadcast %56 : f32 to vector<1x1xf32>
    %c2_62 = arith.constant 2 : index
    %58 = memref.load %arg8[%c2_62] : memref<8xf32, #tpu.memory_space<smem>>
    %59 = vector.broadcast %58 : f32 to vector<1x1xf32>
    %c3_63 = arith.constant 3 : index
    %60 = memref.load %arg8[%c3_63] : memref<8xf32, #tpu.memory_space<smem>>
    %61 = vector.broadcast %60 : f32 to vector<1x1xf32>
    %c4_64 = arith.constant 4 : index
    %62 = memref.load %arg8[%c4_64] : memref<8xf32, #tpu.memory_space<smem>>
    %63 = vector.broadcast %62 : f32 to vector<1x1xf32>
    %c5_65 = arith.constant 5 : index
    %64 = memref.load %arg8[%c5_65] : memref<8xf32, #tpu.memory_space<smem>>
    %65 = vector.broadcast %64 : f32 to vector<1x1xf32>
    %c6_66 = arith.constant 6 : index
    %66 = memref.load %arg8[%c6_66] : memref<8xf32, #tpu.memory_space<smem>>
    %67 = vector.broadcast %66 : f32 to vector<1x1xf32>
    %c7_67 = arith.constant 7 : index
    %68 = memref.load %arg8[%c7_67] : memref<8xf32, #tpu.memory_space<smem>>
    %69 = vector.broadcast %68 : f32 to vector<1x1xf32>
    %cst = arith.constant 0.000000e+00 : bf16
    %70 = vector.broadcast %cst : bf16 to vector<1x32xbf16>
    %cst_68 = arith.constant 0.000000e+00 : bf16
    %71 = vector.broadcast %cst_68 : bf16 to vector<1x32xbf16>
    %cst_69 = arith.constant 0.000000e+00 : f32
    %72 = vector.broadcast %cst_69 : f32 to vector<1x32xf32>
    %cst_70 = arith.constant 0.000000e+00 : f32
    %73 = vector.broadcast %cst_70 : f32 to vector<1x32xf32>
    %cst_71 = arith.constant 0.000000e+00 : f32
    %74 = vector.broadcast %cst_71 : f32 to vector<1x1xf32>
    %75 = vector.broadcast %74 : vector<1x1xf32> to vector<1x128xf32>
    %76 = arith.mulf %75, %0 : vector<1x128xf32>
    %cst_72 = arith.constant dense<0.000000e+00> : vector<1x128xf32>
    %77 = tpu.matmul %70, %1, %cst_72 {dimension_numbers = #tpu.dot_dimension_numbers<[1], [0], [0], [1], [0, 0, 1, 1], [], []>} : vector<1x32xbf16>, vector<32x128xbf16>, vector<1x128xf32> -> vector<1x128xf32>
    %78 = arith.addf %76, %77 : vector<1x128xf32>
    %79 = arith.addf %78, %4 : vector<1x128xf32>
    %80 = arith.negf %79 : vector<1x128xf32>
    %81 = math.exp %80 : vector<1x128xf32>
    %cst_73 = arith.constant 1.000000e+00 : f32
    %82 = vector.broadcast %cst_73 : f32 to vector<1x128xf32>
    %83 = arith.addf %82, %81 : vector<1x128xf32>
    %84 = arith.divf %82, %83 : vector<1x128xf32>
    %85 = vector.extract_strided_slice %84 {offsets = [0, 64], sizes = [1, 32], strides = [1, 1]} : vector<1x128xf32> to vector<1x32xf32>
    %cst_74 = arith.constant 2.000000e+00 : f32
    %86 = vector.broadcast %cst_74 : f32 to vector<1x32xf32>
    %87 = arith.mulf %86, %85 : vector<1x32xf32>
    %cst_75 = arith.constant 1.000000e+00 : f32
    %88 = vector.broadcast %cst_75 : f32 to vector<1x32xf32>
    %89 = arith.subf %87, %88 : vector<1x32xf32>
    %90 = vector.extract_strided_slice %84 {offsets = [0, 32], sizes = [1, 32], strides = [1, 1]} : vector<1x128xf32> to vector<1x32xf32>
    %91 = arith.mulf %90, %72 : vector<1x32xf32>
    %92 = vector.extract_strided_slice %84 {offsets = [0, 0], sizes = [1, 32], strides = [1, 1]} : vector<1x128xf32> to vector<1x32xf32>
    %93 = arith.mulf %92, %89 : vector<1x32xf32>
    %94 = arith.addf %91, %93 : vector<1x32xf32>
    %95 = vector.extract_strided_slice %84 {offsets = [0, 96], sizes = [1, 32], strides = [1, 1]} : vector<1x128xf32> to vector<1x32xf32>
    %96 = math.tanh %94 : vector<1x32xf32>
    %97 = arith.mulf %95, %96 : vector<1x32xf32>
    %98 = arith.truncf %97 : vector<1x32xf32> to vector<1x32xbf16>
    %cst_76 = arith.constant dense<0.000000e+00> : vector<1x128xf32>
    %99 = tpu.matmul %98, %2, %cst_76 {dimension_numbers = #tpu.dot_dimension_numbers<[1], [0], [0], [1], [0, 0, 1, 1], [], []>} : vector<1x32xbf16>, vector<32x128xbf16>, vector<1x128xf32> -> vector<1x128xf32>
    %cst_77 = arith.constant dense<0.000000e+00> : vector<1x128xf32>
    %100 = tpu.matmul %71, %3, %cst_77 {dimension_numbers = #tpu.dot_dimension_numbers<[1], [0], [0], [1], [0, 0, 1, 1], [], []>} : vector<1x32xbf16>, vector<32x128xbf16>, vector<1x128xf32> -> vector<1x128xf32>
    %101 = arith.addf %99, %100 : vector<1x128xf32>
    %102 = arith.addf %101, %5 : vector<1x128xf32>
    %103 = arith.negf %102 : vector<1x128xf32>
    %104 = math.exp %103 : vector<1x128xf32>
    %cst_78 = arith.constant 1.000000e+00 : f32
    %105 = vector.broadcast %cst_78 : f32 to vector<1x128xf32>
    %106 = arith.addf %105, %104 : vector<1x128xf32>
    %107 = arith.divf %105, %106 : vector<1x128xf32>
    %108 = vector.extract_strided_slice %107 {offsets = [0, 64], sizes = [1, 32], strides = [1, 1]} : vector<1x128xf32> to vector<1x32xf32>
    %cst_79 = arith.constant 2.000000e+00 : f32
    %109 = vector.broadcast %cst_79 : f32 to vector<1x32xf32>
    %110 = arith.mulf %109, %108 : vector<1x32xf32>
    %cst_80 = arith.constant 1.000000e+00 : f32
    %111 = vector.broadcast %cst_80 : f32 to vector<1x32xf32>
    %112 = arith.subf %110, %111 : vector<1x32xf32>
    %113 = vector.extract_strided_slice %107 {offsets = [0, 32], sizes = [1, 32], strides = [1, 1]} : vector<1x128xf32> to vector<1x32xf32>
    %114 = arith.mulf %113, %73 : vector<1x32xf32>
    %115 = vector.extract_strided_slice %107 {offsets = [0, 0], sizes = [1, 32], strides = [1, 1]} : vector<1x128xf32> to vector<1x32xf32>
    %116 = arith.mulf %115, %112 : vector<1x32xf32>
    %117 = arith.addf %114, %116 : vector<1x32xf32>
    %118 = vector.extract_strided_slice %107 {offsets = [0, 96], sizes = [1, 32], strides = [1, 1]} : vector<1x128xf32> to vector<1x32xf32>
    %119 = math.tanh %117 : vector<1x32xf32>
    %120 = arith.mulf %118, %119 : vector<1x32xf32>
    %121 = arith.truncf %120 : vector<1x32xf32> to vector<1x32xbf16>
    %cst_81 = arith.constant dense<0.000000e+00> : vector<1x4xf32>
    %122 = tpu.matmul %121, %7, %cst_81 {dimension_numbers = #tpu.dot_dimension_numbers<[1], [0], [0], [1], [0, 0, 1, 1], [], []>} : vector<1x32xbf16>, vector<32x4xbf16>, vector<1x4xf32> -> vector<1x4xf32>
    %123 = arith.addf %122, %23 : vector<1x4xf32>
    %124 = math.exp %123 : vector<1x4xf32>
    %cst_82 = arith.constant dense<0.000000e+00> : vector<1xf32>
    %125 = vector.multi_reduction <add>, %124, %cst_82 [1] : vector<1x4xf32> to vector<1xf32>
    %126 = vector.shape_cast %125 : vector<1xf32> to vector<1x1xf32>
    %127 = tpu.reciprocal %126 {approx = true} : vector<1x1xf32> -> vector<1x1xf32>
    %128 = arith.mulf %126, %127 : vector<1x1xf32>
    %cst_83 = arith.constant 2.000000e+00 : f32
    %129 = vector.broadcast %cst_83 : f32 to vector<1x1xf32>
    %130 = arith.subf %129, %128 : vector<1x1xf32>
    %131 = arith.mulf %127, %130 : vector<1x1xf32>
    %132 = vector.broadcast %131 : vector<1x1xf32> to vector<1x4xf32>
    %133 = arith.mulf %124, %132 : vector<1x4xf32>
    %c0_84 = arith.constant 0 : index
    %c0_85 = arith.constant 0 : index
    %134 = vector.load %arg12[%c0_84, %c0_85] : memref<8x4xf32, #tpu.memory_space<vmem>>, vector<1x4xf32>
    tpu.vector_store %arg12[%c0_84, %c0_85], %133 {strides = array<i32>} : memref<8x4xf32, #tpu.memory_space<vmem>>, vector<1x4xf32>,
    %135 = vector.extract_strided_slice %133 {offsets = [0, 0], sizes = [1, 1], strides = [1, 1]} : vector<1x4xf32> to vector<1x1xf32>
    %136 = vector.extract_strided_slice %133 {offsets = [0, 1], sizes = [1, 1], strides = [1, 1]} : vector<1x4xf32> to vector<1x1xf32>
    %137 = vector.extract_strided_slice %133 {offsets = [0, 2], sizes = [1, 1], strides = [1, 1]} : vector<1x4xf32> to vector<1x1xf32>
    %138 = vector.extract_strided_slice %133 {offsets = [0, 3], sizes = [1, 1], strides = [1, 1]} : vector<1x4xf32> to vector<1x1xf32>
    %139 = arith.cmpf ole, %135, %39 : vector<1x1xf32>
    %140 = arith.extui %139 : vector<1x1xi1> to vector<1x1xi32>
    %141 = arith.sitofp %140 : vector<1x1xi32> to vector<1x1xf32>
    %142 = arith.subf %136, %135 : vector<1x1xf32>
    %143 = arith.mulf %141, %142 : vector<1x1xf32>
    %144 = arith.addf %135, %143 : vector<1x1xf32>
    %145 = arith.addf %135, %136 : vector<1x1xf32>
    %146 = arith.cmpf ole, %145, %39 : vector<1x1xf32>
    %147 = arith.extui %146 : vector<1x1xi1> to vector<1x1xi32>
    %148 = arith.sitofp %147 : vector<1x1xi32> to vector<1x1xf32>
    %149 = arith.addf %141, %148 : vector<1x1xf32>
    %150 = arith.subf %137, %136 : vector<1x1xf32>
    %151 = arith.mulf %148, %150 : vector<1x1xf32>
    %152 = arith.addf %144, %151 : vector<1x1xf32>
    %153 = arith.addf %145, %137 : vector<1x1xf32>
    %154 = arith.cmpf ole, %153, %39 : vector<1x1xf32>
    %155 = arith.extui %154 : vector<1x1xi1> to vector<1x1xi32>
    %156 = arith.sitofp %155 : vector<1x1xi32> to vector<1x1xf32>
    %157 = arith.addf %149, %156 : vector<1x1xf32>
    %158 = arith.subf %138, %137 : vector<1x1xf32>
    %159 = arith.mulf %156, %158 : vector<1x1xf32>
    %160 = arith.addf %152, %159 : vector<1x1xf32>
    %cst_86 = arith.constant -1.000000e+00 : f32
    %161 = vector.broadcast %cst_86 : f32 to vector<1x1xf32>
    %162 = arith.cmpf one, %55, %161 : vector<1x1xf32>
    %163 = arith.select %162, %55, %157 : vector<1x1xi1>, vector<1x1xf32>
    %164 = arith.fptosi %163 : vector<1x1xf32> to vector<1x1xi32>
    %c0_87 = arith.constant 0 : index
    %c0_88 = arith.constant 0 : index
    %165 = vector.load %arg10[%c0_87, %c0_88] : memref<1x8xi32, #tpu.memory_space<vmem>>, vector<1x1xi32>
    tpu.vector_store %arg10[%c0_87, %c0_88], %164 {strides = array<i32>} : memref<1x8xi32, #tpu.memory_space<vmem>>, vector<1x1xi32>,
    %c0_89 = arith.constant 0 : index
    %c0_90 = arith.constant 0 : index
    %166 = vector.load %arg11[%c0_89, %c0_90] : memref<1x8xf32, #tpu.memory_space<vmem>>, vector<1x1xf32>
    tpu.vector_store %arg11[%c0_89, %c0_90], %160 {strides = array<i32>} : memref<1x8xf32, #tpu.memory_space<vmem>>, vector<1x1xf32>,
    %167 = vector.broadcast %163 : vector<1x1xf32> to vector<1x128xf32>
    %168 = arith.mulf %167, %0 : vector<1x128xf32>
    %cst_91 = arith.constant dense<0.000000e+00> : vector<1x128xf32>
    %169 = tpu.matmul %98, %1, %cst_91 {dimension_numbers = #tpu.dot_dimension_numbers<[1], [0], [0], [1], [0, 0, 1, 1], [], []>} : vector<1x32xbf16>, vector<32x128xbf16>, vector<1x128xf32> -> vector<1x128xf32>
    %170 = arith.addf %168, %169 : vector<1x128xf32>
    %171 = arith.addf %170, %4 : vector<1x128xf32>
    %172 = arith.negf %171 : vector<1x128xf32>
    %173 = math.exp %172 : vector<1x128xf32>
    %cst_92 = arith.constant 1.000000e+00 : f32
    %174 = vector.broadcast %cst_92 : f32 to vector<1x128xf32>
    %175 = arith.addf %174, %173 : vector<1x128xf32>
    %176 = arith.divf %174, %175 : vector<1x128xf32>
    %177 = vector.extract_strided_slice %176 {offsets = [0, 64], sizes = [1, 32], strides = [1, 1]} : vector<1x128xf32> to vector<1x32xf32>
    %cst_93 = arith.constant 2.000000e+00 : f32
    %178 = vector.broadcast %cst_93 : f32 to vector<1x32xf32>
    %179 = arith.mulf %178, %177 : vector<1x32xf32>
    %cst_94 = arith.constant 1.000000e+00 : f32
    %180 = vector.broadcast %cst_94 : f32 to vector<1x32xf32>
    %181 = arith.subf %179, %180 : vector<1x32xf32>
    %182 = vector.extract_strided_slice %176 {offsets = [0, 32], sizes = [1, 32], strides = [1, 1]} : vector<1x128xf32> to vector<1x32xf32>
    %183 = arith.mulf %182, %94 : vector<1x32xf32>
    %184 = vector.extract_strided_slice %176 {offsets = [0, 0], sizes = [1, 32], strides = [1, 1]} : vector<1x128xf32> to vector<1x32xf32>
    %185 = arith.mulf %184, %181 : vector<1x32xf32>
    %186 = arith.addf %183, %185 : vector<1x32xf32>
    %187 = vector.extract_strided_slice %176 {offsets = [0, 96], sizes = [1, 32], strides = [1, 1]} : vector<1x128xf32> to vector<1x32xf32>
    %188 = math.tanh %186 : vector<1x32xf32>
    %189 = arith.mulf %187, %188 : vector<1x32xf32>
    %190 = arith.truncf %189 : vector<1x32xf32> to vector<1x32xbf16>
    %cst_95 = arith.constant dense<0.000000e+00> : vector<1x128xf32>
    %191 = tpu.matmul %190, %2, %cst_95 {dimension_numbers = #tpu.dot_dimension_numbers<[1], [0], [0], [1], [0, 0, 1, 1], [], []>} : vector<1x32xbf16>, vector<32x128xbf16>, vector<1x128xf32> -> vector<1x128xf32>
    %cst_96 = arith.constant dense<0.000000e+00> : vector<1x128xf32>
    %192 = tpu.matmul %121, %3, %cst_96 {dimension_numbers = #tpu.dot_dimension_numbers<[1], [0], [0], [1], [0, 0, 1, 1], [], []>} : vector<1x32xbf16>, vector<32x128xbf16>, vector<1x128xf32> -> vector<1x128xf32>
    %193 = arith.addf %191, %192 : vector<1x128xf32>
    %194 = arith.addf %193, %5 : vector<1x128xf32>
    %195 = arith.negf %194 : vector<1x128xf32>
    %196 = math.exp %195 : vector<1x128xf32>
    %cst_97 = arith.constant 1.000000e+00 : f32
    %197 = vector.broadcast %cst_97 : f32 to vector<1x128xf32>
    %198 = arith.addf %197, %196 : vector<1x128xf32>
    %199 = arith.divf %197, %198 : vector<1x128xf32>
    %200 = vector.extract_strided_slice %199 {offsets = [0, 64], sizes = [1, 32], strides = [1, 1]} : vector<1x128xf32> to vector<1x32xf32>
    %cst_98 = arith.constant 2.000000e+00 : f32
    %201 = vector.broadcast %cst_98 : f32 to vector<1x32xf32>
    %202 = arith.mulf %201, %200 : vector<1x32xf32>
    %cst_99 = arith.constant 1.000000e+00 : f32
    %203 = vector.broadcast %cst_99 : f32 to vector<1x32xf32>
    %204 = arith.subf %202, %203 : vector<1x32xf32>
    %205 = vector.extract_strided_slice %199 {offsets = [0, 32], sizes = [1, 32], strides = [1, 1]} : vector<1x128xf32> to vector<1x32xf32>
    %206 = arith.mulf %205, %117 : vector<1x32xf32>
    %207 = vector.extract_strided_slice %199 {offsets = [0, 0], sizes = [1, 32], strides = [1, 1]} : vector<1x128xf32> to vector<1x32xf32>
    %208 = arith.mulf %207, %204 : vector<1x32xf32>
    %209 = arith.addf %206, %208 : vector<1x32xf32>
    %210 = vector.extract_strided_slice %199 {offsets = [0, 96], sizes = [1, 32], strides = [1, 1]} : vector<1x128xf32> to vector<1x32xf32>
    %211 = math.tanh %209 : vector<1x32xf32>
    %212 = arith.mulf %210, %211 : vector<1x32xf32>
    %213 = arith.truncf %212 : vector<1x32xf32> to vector<1x32xbf16>
    %cst_100 = arith.constant dense<0.000000e+00> : vector<1x4xf32>
    %214 = tpu.matmul %213, %9, %cst_100 {dimension_numbers = #tpu.dot_dimension_numbers<[1], [0], [0], [1], [0, 0, 1, 1], [], []>} : vector<1x32xbf16>, vector<32x4xbf16>, vector<1x4xf32> -> vector<1x4xf32>
    %215 = arith.addf %214, %25 : vector<1x4xf32>
    %216 = math.exp %215 : vector<1x4xf32>
    %cst_101 = arith.constant dense<0.000000e+00> : vector<1xf32>
    %217 = vector.multi_reduction <add>, %216, %cst_101 [1] : vector<1x4xf32> to vector<1xf32>
    %218 = vector.shape_cast %217 : vector<1xf32> to vector<1x1xf32>
    %219 = tpu.reciprocal %218 {approx = true} : vector<1x1xf32> -> vector<1x1xf32>
    %220 = arith.mulf %218, %219 : vector<1x1xf32>
    %cst_102 = arith.constant 2.000000e+00 : f32
    %221 = vector.broadcast %cst_102 : f32 to vector<1x1xf32>
    %222 = arith.subf %221, %220 : vector<1x1xf32>
    %223 = arith.mulf %219, %222 : vector<1x1xf32>
    %224 = vector.broadcast %223 : vector<1x1xf32> to vector<1x4xf32>
    %225 = arith.mulf %216, %224 : vector<1x4xf32>
    %c1_103 = arith.constant 1 : index
    %c0_104 = arith.constant 0 : index
    %226 = vector.load %arg12[%c1_103, %c0_104] : memref<8x4xf32, #tpu.memory_space<vmem>>, vector<1x4xf32>
    tpu.vector_store %arg12[%c1_103, %c0_104], %225 {strides = array<i32>} : memref<8x4xf32, #tpu.memory_space<vmem>>, vector<1x4xf32>,
    %227 = vector.extract_strided_slice %225 {offsets = [0, 0], sizes = [1, 1], strides = [1, 1]} : vector<1x4xf32> to vector<1x1xf32>
    %228 = vector.extract_strided_slice %225 {offsets = [0, 1], sizes = [1, 1], strides = [1, 1]} : vector<1x4xf32> to vector<1x1xf32>
    %229 = vector.extract_strided_slice %225 {offsets = [0, 2], sizes = [1, 1], strides = [1, 1]} : vector<1x4xf32> to vector<1x1xf32>
    %230 = vector.extract_strided_slice %225 {offsets = [0, 3], sizes = [1, 1], strides = [1, 1]} : vector<1x4xf32> to vector<1x1xf32>
    %231 = arith.cmpf ole, %227, %41 : vector<1x1xf32>
    %232 = arith.extui %231 : vector<1x1xi1> to vector<1x1xi32>
    %233 = arith.sitofp %232 : vector<1x1xi32> to vector<1x1xf32>
    %234 = arith.subf %228, %227 : vector<1x1xf32>
    %235 = arith.mulf %233, %234 : vector<1x1xf32>
    %236 = arith.addf %227, %235 : vector<1x1xf32>
    %237 = arith.addf %227, %228 : vector<1x1xf32>
    %238 = arith.cmpf ole, %237, %41 : vector<1x1xf32>
    %239 = arith.extui %238 : vector<1x1xi1> to vector<1x1xi32>
    %240 = arith.sitofp %239 : vector<1x1xi32> to vector<1x1xf32>
    %241 = arith.addf %233, %240 : vector<1x1xf32>
    %242 = arith.subf %229, %228 : vector<1x1xf32>
    %243 = arith.mulf %240, %242 : vector<1x1xf32>
    %244 = arith.addf %236, %243 : vector<1x1xf32>
    %245 = arith.addf %237, %229 : vector<1x1xf32>
    %246 = arith.cmpf ole, %245, %41 : vector<1x1xf32>
    %247 = arith.extui %246 : vector<1x1xi1> to vector<1x1xi32>
    %248 = arith.sitofp %247 : vector<1x1xi32> to vector<1x1xf32>
    %249 = arith.addf %241, %248 : vector<1x1xf32>
    %250 = arith.subf %230, %229 : vector<1x1xf32>
    %251 = arith.mulf %248, %250 : vector<1x1xf32>
    %252 = arith.addf %244, %251 : vector<1x1xf32>
    %cst_105 = arith.constant -1.000000e+00 : f32
    %253 = vector.broadcast %cst_105 : f32 to vector<1x1xf32>
    %254 = arith.cmpf one, %57, %253 : vector<1x1xf32>
    %255 = arith.select %254, %57, %249 : vector<1x1xi1>, vector<1x1xf32>
    %256 = arith.fptosi %255 : vector<1x1xf32> to vector<1x1xi32>
    %c0_106 = arith.constant 0 : index
    %c1_107 = arith.constant 1 : index
    %257 = vector.load %arg10[%c0_106, %c1_107] : memref<1x8xi32, #tpu.memory_space<vmem>>, vector<1x1xi32>
    tpu.vector_store %arg10[%c0_106, %c1_107], %256 {strides = array<i32>} : memref<1x8xi32, #tpu.memory_space<vmem>>, vector<1x1xi32>,
    %c0_108 = arith.constant 0 : index
    %c1_109 = arith.constant 1 : index
    %258 = vector.load %arg11[%c0_108, %c1_109] : memref<1x8xf32, #tpu.memory_space<vmem>>, vector<1x1xf32>
    tpu.vector_store %arg11[%c0_108, %c1_109], %252 {strides = array<i32>} : memref<1x8xf32, #tpu.memory_space<vmem>>, vector<1x1xf32>,
    %259 = vector.broadcast %255 : vector<1x1xf32> to vector<1x128xf32>
    %260 = arith.mulf %259, %0 : vector<1x128xf32>
    %cst_110 = arith.constant dense<0.000000e+00> : vector<1x128xf32>
    %261 = tpu.matmul %190, %1, %cst_110 {dimension_numbers = #tpu.dot_dimension_numbers<[1], [0], [0], [1], [0, 0, 1, 1], [], []>} : vector<1x32xbf16>, vector<32x128xbf16>, vector<1x128xf32> -> vector<1x128xf32>
    %262 = arith.addf %260, %261 : vector<1x128xf32>
    %263 = arith.addf %262, %4 : vector<1x128xf32>
    %264 = arith.negf %263 : vector<1x128xf32>
    %265 = math.exp %264 : vector<1x128xf32>
    %cst_111 = arith.constant 1.000000e+00 : f32
    %266 = vector.broadcast %cst_111 : f32 to vector<1x128xf32>
    %267 = arith.addf %266, %265 : vector<1x128xf32>
    %268 = arith.divf %266, %267 : vector<1x128xf32>
    %269 = vector.extract_strided_slice %268 {offsets = [0, 64], sizes = [1, 32], strides = [1, 1]} : vector<1x128xf32> to vector<1x32xf32>
    %cst_112 = arith.constant 2.000000e+00 : f32
    %270 = vector.broadcast %cst_112 : f32 to vector<1x32xf32>
    %271 = arith.mulf %270, %269 : vector<1x32xf32>
    %cst_113 = arith.constant 1.000000e+00 : f32
    %272 = vector.broadcast %cst_113 : f32 to vector<1x32xf32>
    %273 = arith.subf %271, %272 : vector<1x32xf32>
    %274 = vector.extract_strided_slice %268 {offsets = [0, 32], sizes = [1, 32], strides = [1, 1]} : vector<1x128xf32> to vector<1x32xf32>
    %275 = arith.mulf %274, %186 : vector<1x32xf32>
    %276 = vector.extract_strided_slice %268 {offsets = [0, 0], sizes = [1, 32], strides = [1, 1]} : vector<1x128xf32> to vector<1x32xf32>
    %277 = arith.mulf %276, %273 : vector<1x32xf32>
    %278 = arith.addf %275, %277 : vector<1x32xf32>
    %279 = vector.extract_strided_slice %268 {offsets = [0, 96], sizes = [1, 32], strides = [1, 1]} : vector<1x128xf32> to vector<1x32xf32>
    %280 = math.tanh %278 : vector<1x32xf32>
    %281 = arith.mulf %279, %280 : vector<1x32xf32>
    %282 = arith.truncf %281 : vector<1x32xf32> to vector<1x32xbf16>
    %cst_114 = arith.constant dense<0.000000e+00> : vector<1x128xf32>
    %283 = tpu.matmul %282, %2, %cst_114 {dimension_numbers = #tpu.dot_dimension_numbers<[1], [0], [0], [1], [0, 0, 1, 1], [], []>} : vector<1x32xbf16>, vector<32x128xbf16>, vector<1x128xf32> -> vector<1x128xf32>
    %cst_115 = arith.constant dense<0.000000e+00> : vector<1x128xf32>
    %284 = tpu.matmul %213, %3, %cst_115 {dimension_numbers = #tpu.dot_dimension_numbers<[1], [0], [0], [1], [0, 0, 1, 1], [], []>} : vector<1x32xbf16>, vector<32x128xbf16>, vector<1x128xf32> -> vector<1x128xf32>
    %285 = arith.addf %283, %284 : vector<1x128xf32>
    %286 = arith.addf %285, %5 : vector<1x128xf32>
    %287 = arith.negf %286 : vector<1x128xf32>
    %288 = math.exp %287 : vector<1x128xf32>
    %cst_116 = arith.constant 1.000000e+00 : f32
    %289 = vector.broadcast %cst_116 : f32 to vector<1x128xf32>
    %290 = arith.addf %289, %288 : vector<1x128xf32>
    %291 = arith.divf %289, %290 : vector<1x128xf32>
    %292 = vector.extract_strided_slice %291 {offsets = [0, 64], sizes = [1, 32], strides = [1, 1]} : vector<1x128xf32> to vector<1x32xf32>
    %cst_117 = arith.constant 2.000000e+00 : f32
    %293 = vector.broadcast %cst_117 : f32 to vector<1x32xf32>
    %294 = arith.mulf %293, %292 : vector<1x32xf32>
    %cst_118 = arith.constant 1.000000e+00 : f32
    %295 = vector.broadcast %cst_118 : f32 to vector<1x32xf32>
    %296 = arith.subf %294, %295 : vector<1x32xf32>
    %297 = vector.extract_strided_slice %291 {offsets = [0, 32], sizes = [1, 32], strides = [1, 1]} : vector<1x128xf32> to vector<1x32xf32>
    %298 = arith.mulf %297, %209 : vector<1x32xf32>
    %299 = vector.extract_strided_slice %291 {offsets = [0, 0], sizes = [1, 32], strides = [1, 1]} : vector<1x128xf32> to vector<1x32xf32>
    %300 = arith.mulf %299, %296 : vector<1x32xf32>
    %301 = arith.addf %298, %300 : vector<1x32xf32>
    %302 = vector.extract_strided_slice %291 {offsets = [0, 96], sizes = [1, 32], strides = [1, 1]} : vector<1x128xf32> to vector<1x32xf32>
    %303 = math.tanh %301 : vector<1x32xf32>
    %304 = arith.mulf %302, %303 : vector<1x32xf32>
    %305 = arith.truncf %304 : vector<1x32xf32> to vector<1x32xbf16>
    %cst_119 = arith.constant dense<0.000000e+00> : vector<1x4xf32>
    %306 = tpu.matmul %305, %11, %cst_119 {dimension_numbers = #tpu.dot_dimension_numbers<[1], [0], [0], [1], [0, 0, 1, 1], [], []>} : vector<1x32xbf16>, vector<32x4xbf16>, vector<1x4xf32> -> vector<1x4xf32>
    %307 = arith.addf %306, %27 : vector<1x4xf32>
    %308 = math.exp %307 : vector<1x4xf32>
    %cst_120 = arith.constant dense<0.000000e+00> : vector<1xf32>
    %309 = vector.multi_reduction <add>, %308, %cst_120 [1] : vector<1x4xf32> to vector<1xf32>
    %310 = vector.shape_cast %309 : vector<1xf32> to vector<1x1xf32>
    %311 = tpu.reciprocal %310 {approx = true} : vector<1x1xf32> -> vector<1x1xf32>
    %312 = arith.mulf %310, %311 : vector<1x1xf32>
    %cst_121 = arith.constant 2.000000e+00 : f32
    %313 = vector.broadcast %cst_121 : f32 to vector<1x1xf32>
    %314 = arith.subf %313, %312 : vector<1x1xf32>
    %315 = arith.mulf %311, %314 : vector<1x1xf32>
    %316 = vector.broadcast %315 : vector<1x1xf32> to vector<1x4xf32>
    %317 = arith.mulf %308, %316 : vector<1x4xf32>
    %c2_122 = arith.constant 2 : index
    %c0_123 = arith.constant 0 : index
    %318 = vector.load %arg12[%c2_122, %c0_123] : memref<8x4xf32, #tpu.memory_space<vmem>>, vector<1x4xf32>
    tpu.vector_store %arg12[%c2_122, %c0_123], %317 {strides = array<i32>} : memref<8x4xf32, #tpu.memory_space<vmem>>, vector<1x4xf32>,
    %319 = vector.extract_strided_slice %317 {offsets = [0, 0], sizes = [1, 1], strides = [1, 1]} : vector<1x4xf32> to vector<1x1xf32>
    %320 = vector.extract_strided_slice %317 {offsets = [0, 1], sizes = [1, 1], strides = [1, 1]} : vector<1x4xf32> to vector<1x1xf32>
    %321 = vector.extract_strided_slice %317 {offsets = [0, 2], sizes = [1, 1], strides = [1, 1]} : vector<1x4xf32> to vector<1x1xf32>
    %322 = vector.extract_strided_slice %317 {offsets = [0, 3], sizes = [1, 1], strides = [1, 1]} : vector<1x4xf32> to vector<1x1xf32>
    %323 = arith.cmpf ole, %319, %43 : vector<1x1xf32>
    %324 = arith.extui %323 : vector<1x1xi1> to vector<1x1xi32>
    %325 = arith.sitofp %324 : vector<1x1xi32> to vector<1x1xf32>
    %326 = arith.subf %320, %319 : vector<1x1xf32>
    %327 = arith.mulf %325, %326 : vector<1x1xf32>
    %328 = arith.addf %319, %327 : vector<1x1xf32>
    %329 = arith.addf %319, %320 : vector<1x1xf32>
    %330 = arith.cmpf ole, %329, %43 : vector<1x1xf32>
    %331 = arith.extui %330 : vector<1x1xi1> to vector<1x1xi32>
    %332 = arith.sitofp %331 : vector<1x1xi32> to vector<1x1xf32>
    %333 = arith.addf %325, %332 : vector<1x1xf32>
    %334 = arith.subf %321, %320 : vector<1x1xf32>
    %335 = arith.mulf %332, %334 : vector<1x1xf32>
    %336 = arith.addf %328, %335 : vector<1x1xf32>
    %337 = arith.addf %329, %321 : vector<1x1xf32>
    %338 = arith.cmpf ole, %337, %43 : vector<1x1xf32>
    %339 = arith.extui %338 : vector<1x1xi1> to vector<1x1xi32>
    %340 = arith.sitofp %339 : vector<1x1xi32> to vector<1x1xf32>
    %341 = arith.addf %333, %340 : vector<1x1xf32>
    %342 = arith.subf %322, %321 : vector<1x1xf32>
    %343 = arith.mulf %340, %342 : vector<1x1xf32>
    %344 = arith.addf %336, %343 : vector<1x1xf32>
    %cst_124 = arith.constant -1.000000e+00 : f32
    %345 = vector.broadcast %cst_124 : f32 to vector<1x1xf32>
    %346 = arith.cmpf one, %59, %345 : vector<1x1xf32>
    %347 = arith.select %346, %59, %341 : vector<1x1xi1>, vector<1x1xf32>
    %348 = arith.fptosi %347 : vector<1x1xf32> to vector<1x1xi32>
    %c0_125 = arith.constant 0 : index
    %c2_126 = arith.constant 2 : index
    %349 = vector.load %arg10[%c0_125, %c2_126] : memref<1x8xi32, #tpu.memory_space<vmem>>, vector<1x1xi32>
    tpu.vector_store %arg10[%c0_125, %c2_126], %348 {strides = array<i32>} : memref<1x8xi32, #tpu.memory_space<vmem>>, vector<1x1xi32>,
    %c0_127 = arith.constant 0 : index
    %c2_128 = arith.constant 2 : index
    %350 = vector.load %arg11[%c0_127, %c2_128] : memref<1x8xf32, #tpu.memory_space<vmem>>, vector<1x1xf32>
    tpu.vector_store %arg11[%c0_127, %c2_128], %344 {strides = array<i32>} : memref<1x8xf32, #tpu.memory_space<vmem>>, vector<1x1xf32>,
    %351 = vector.broadcast %347 : vector<1x1xf32> to vector<1x128xf32>
    %352 = arith.mulf %351, %0 : vector<1x128xf32>
    %cst_129 = arith.constant dense<0.000000e+00> : vector<1x128xf32>
    %353 = tpu.matmul %282, %1, %cst_129 {dimension_numbers = #tpu.dot_dimension_numbers<[1], [0], [0], [1], [0, 0, 1, 1], [], []>} : vector<1x32xbf16>, vector<32x128xbf16>, vector<1x128xf32> -> vector<1x128xf32>
    %354 = arith.addf %352, %353 : vector<1x128xf32>
    %355 = arith.addf %354, %4 : vector<1x128xf32>
    %356 = arith.negf %355 : vector<1x128xf32>
    %357 = math.exp %356 : vector<1x128xf32>
    %cst_130 = arith.constant 1.000000e+00 : f32
    %358 = vector.broadcast %cst_130 : f32 to vector<1x128xf32>
    %359 = arith.addf %358, %357 : vector<1x128xf32>
    %360 = arith.divf %358, %359 : vector<1x128xf32>
    %361 = vector.extract_strided_slice %360 {offsets = [0, 64], sizes = [1, 32], strides = [1, 1]} : vector<1x128xf32> to vector<1x32xf32>
    %cst_131 = arith.constant 2.000000e+00 : f32
    %362 = vector.broadcast %cst_131 : f32 to vector<1x32xf32>
    %363 = arith.mulf %362, %361 : vector<1x32xf32>
    %cst_132 = arith.constant 1.000000e+00 : f32
    %364 = vector.broadcast %cst_132 : f32 to vector<1x32xf32>
    %365 = arith.subf %363, %364 : vector<1x32xf32>
    %366 = vector.extract_strided_slice %360 {offsets = [0, 32], sizes = [1, 32], strides = [1, 1]} : vector<1x128xf32> to vector<1x32xf32>
    %367 = arith.mulf %366, %278 : vector<1x32xf32>
    %368 = vector.extract_strided_slice %360 {offsets = [0, 0], sizes = [1, 32], strides = [1, 1]} : vector<1x128xf32> to vector<1x32xf32>
    %369 = arith.mulf %368, %365 : vector<1x32xf32>
    %370 = arith.addf %367, %369 : vector<1x32xf32>
    %371 = vector.extract_strided_slice %360 {offsets = [0, 96], sizes = [1, 32], strides = [1, 1]} : vector<1x128xf32> to vector<1x32xf32>
    %372 = math.tanh %370 : vector<1x32xf32>
    %373 = arith.mulf %371, %372 : vector<1x32xf32>
    %374 = arith.truncf %373 : vector<1x32xf32> to vector<1x32xbf16>
    %cst_133 = arith.constant dense<0.000000e+00> : vector<1x128xf32>
    %375 = tpu.matmul %374, %2, %cst_133 {dimension_numbers = #tpu.dot_dimension_numbers<[1], [0], [0], [1], [0, 0, 1, 1], [], []>} : vector<1x32xbf16>, vector<32x128xbf16>, vector<1x128xf32> -> vector<1x128xf32>
    %cst_134 = arith.constant dense<0.000000e+00> : vector<1x128xf32>
    %376 = tpu.matmul %305, %3, %cst_134 {dimension_numbers = #tpu.dot_dimension_numbers<[1], [0], [0], [1], [0, 0, 1, 1], [], []>} : vector<1x32xbf16>, vector<32x128xbf16>, vector<1x128xf32> -> vector<1x128xf32>
    %377 = arith.addf %375, %376 : vector<1x128xf32>
    %378 = arith.addf %377, %5 : vector<1x128xf32>
    %379 = arith.negf %378 : vector<1x128xf32>
    %380 = math.exp %379 : vector<1x128xf32>
    %cst_135 = arith.constant 1.000000e+00 : f32
    %381 = vector.broadcast %cst_135 : f32 to vector<1x128xf32>
    %382 = arith.addf %381, %380 : vector<1x128xf32>
    %383 = arith.divf %381, %382 : vector<1x128xf32>
    %384 = vector.extract_strided_slice %383 {offsets = [0, 64], sizes = [1, 32], strides = [1, 1]} : vector<1x128xf32> to vector<1x32xf32>
    %cst_136 = arith.constant 2.000000e+00 : f32
    %385 = vector.broadcast %cst_136 : f32 to vector<1x32xf32>
    %386 = arith.mulf %385, %384 : vector<1x32xf32>
    %cst_137 = arith.constant 1.000000e+00 : f32
    %387 = vector.broadcast %cst_137 : f32 to vector<1x32xf32>
    %388 = arith.subf %386, %387 : vector<1x32xf32>
    %389 = vector.extract_strided_slice %383 {offsets = [0, 32], sizes = [1, 32], strides = [1, 1]} : vector<1x128xf32> to vector<1x32xf32>
    %390 = arith.mulf %389, %301 : vector<1x32xf32>
    %391 = vector.extract_strided_slice %383 {offsets = [0, 0], sizes = [1, 32], strides = [1, 1]} : vector<1x128xf32> to vector<1x32xf32>
    %392 = arith.mulf %391, %388 : vector<1x32xf32>
    %393 = arith.addf %390, %392 : vector<1x32xf32>
    %394 = vector.extract_strided_slice %383 {offsets = [0, 96], sizes = [1, 32], strides = [1, 1]} : vector<1x128xf32> to vector<1x32xf32>
    %395 = math.tanh %393 : vector<1x32xf32>
    %396 = arith.mulf %394, %395 : vector<1x32xf32>
    %397 = arith.truncf %396 : vector<1x32xf32> to vector<1x32xbf16>
    %cst_138 = arith.constant dense<0.000000e+00> : vector<1x4xf32>
    %398 = tpu.matmul %397, %13, %cst_138 {dimension_numbers = #tpu.dot_dimension_numbers<[1], [0], [0], [1], [0, 0, 1, 1], [], []>} : vector<1x32xbf16>, vector<32x4xbf16>, vector<1x4xf32> -> vector<1x4xf32>
    %399 = arith.addf %398, %29 : vector<1x4xf32>
    %400 = math.exp %399 : vector<1x4xf32>
    %cst_139 = arith.constant dense<0.000000e+00> : vector<1xf32>
    %401 = vector.multi_reduction <add>, %400, %cst_139 [1] : vector<1x4xf32> to vector<1xf32>
    %402 = vector.shape_cast %401 : vector<1xf32> to vector<1x1xf32>
    %403 = tpu.reciprocal %402 {approx = true} : vector<1x1xf32> -> vector<1x1xf32>
    %404 = arith.mulf %402, %403 : vector<1x1xf32>
    %cst_140 = arith.constant 2.000000e+00 : f32
    %405 = vector.broadcast %cst_140 : f32 to vector<1x1xf32>
    %406 = arith.subf %405, %404 : vector<1x1xf32>
    %407 = arith.mulf %403, %406 : vector<1x1xf32>
    %408 = vector.broadcast %407 : vector<1x1xf32> to vector<1x4xf32>
    %409 = arith.mulf %400, %408 : vector<1x4xf32>
    %c3_141 = arith.constant 3 : index
    %c0_142 = arith.constant 0 : index
    %410 = vector.load %arg12[%c3_141, %c0_142] : memref<8x4xf32, #tpu.memory_space<vmem>>, vector<1x4xf32>
    tpu.vector_store %arg12[%c3_141, %c0_142], %409 {strides = array<i32>} : memref<8x4xf32, #tpu.memory_space<vmem>>, vector<1x4xf32>,
    %411 = vector.extract_strided_slice %409 {offsets = [0, 0], sizes = [1, 1], strides = [1, 1]} : vector<1x4xf32> to vector<1x1xf32>
    %412 = vector.extract_strided_slice %409 {offsets = [0, 1], sizes = [1, 1], strides = [1, 1]} : vector<1x4xf32> to vector<1x1xf32>
    %413 = vector.extract_strided_slice %409 {offsets = [0, 2], sizes = [1, 1], strides = [1, 1]} : vector<1x4xf32> to vector<1x1xf32>
    %414 = vector.extract_strided_slice %409 {offsets = [0, 3], sizes = [1, 1], strides = [1, 1]} : vector<1x4xf32> to vector<1x1xf32>
    %415 = arith.cmpf ole, %411, %45 : vector<1x1xf32>
    %416 = arith.extui %415 : vector<1x1xi1> to vector<1x1xi32>
    %417 = arith.sitofp %416 : vector<1x1xi32> to vector<1x1xf32>
    %418 = arith.subf %412, %411 : vector<1x1xf32>
    %419 = arith.mulf %417, %418 : vector<1x1xf32>
    %420 = arith.addf %411, %419 : vector<1x1xf32>
    %421 = arith.addf %411, %412 : vector<1x1xf32>
    %422 = arith.cmpf ole, %421, %45 : vector<1x1xf32>
    %423 = arith.extui %422 : vector<1x1xi1> to vector<1x1xi32>
    %424 = arith.sitofp %423 : vector<1x1xi32> to vector<1x1xf32>
    %425 = arith.addf %417, %424 : vector<1x1xf32>
    %426 = arith.subf %413, %412 : vector<1x1xf32>
    %427 = arith.mulf %424, %426 : vector<1x1xf32>
    %428 = arith.addf %420, %427 : vector<1x1xf32>
    %429 = arith.addf %421, %413 : vector<1x1xf32>
    %430 = arith.cmpf ole, %429, %45 : vector<1x1xf32>
    %431 = arith.extui %430 : vector<1x1xi1> to vector<1x1xi32>
    %432 = arith.sitofp %431 : vector<1x1xi32> to vector<1x1xf32>
    %433 = arith.addf %425, %432 : vector<1x1xf32>
    %434 = arith.subf %414, %413 : vector<1x1xf32>
    %435 = arith.mulf %432, %434 : vector<1x1xf32>
    %436 = arith.addf %428, %435 : vector<1x1xf32>
    %cst_143 = arith.constant -1.000000e+00 : f32
    %437 = vector.broadcast %cst_143 : f32 to vector<1x1xf32>
    %438 = arith.cmpf one, %61, %437 : vector<1x1xf32>
    %439 = arith.select %438, %61, %433 : vector<1x1xi1>, vector<1x1xf32>
    %440 = arith.fptosi %439 : vector<1x1xf32> to vector<1x1xi32>
    %c0_144 = arith.constant 0 : index
    %c3_145 = arith.constant 3 : index
    %441 = vector.load %arg10[%c0_144, %c3_145] : memref<1x8xi32, #tpu.memory_space<vmem>>, vector<1x1xi32>
    tpu.vector_store %arg10[%c0_144, %c3_145], %440 {strides = array<i32>} : memref<1x8xi32, #tpu.memory_space<vmem>>, vector<1x1xi32>,
    %c0_146 = arith.constant 0 : index
    %c3_147 = arith.constant 3 : index
    %442 = vector.load %arg11[%c0_146, %c3_147] : memref<1x8xf32, #tpu.memory_space<vmem>>, vector<1x1xf32>
    tpu.vector_store %arg11[%c0_146, %c3_147], %436 {strides = array<i32>} : memref<1x8xf32, #tpu.memory_space<vmem>>, vector<1x1xf32>,
    %443 = vector.broadcast %439 : vector<1x1xf32> to vector<1x128xf32>
    %444 = arith.mulf %443, %0 : vector<1x128xf32>
    %cst_148 = arith.constant dense<0.000000e+00> : vector<1x128xf32>
    %445 = tpu.matmul %374, %1, %cst_148 {dimension_numbers = #tpu.dot_dimension_numbers<[1], [0], [0], [1], [0, 0, 1, 1], [], []>} : vector<1x32xbf16>, vector<32x128xbf16>, vector<1x128xf32> -> vector<1x128xf32>
    %446 = arith.addf %444, %445 : vector<1x128xf32>
    %447 = arith.addf %446, %4 : vector<1x128xf32>
    %448 = arith.negf %447 : vector<1x128xf32>
    %449 = math.exp %448 : vector<1x128xf32>
    %cst_149 = arith.constant 1.000000e+00 : f32
    %450 = vector.broadcast %cst_149 : f32 to vector<1x128xf32>
    %451 = arith.addf %450, %449 : vector<1x128xf32>
    %452 = arith.divf %450, %451 : vector<1x128xf32>
    %453 = vector.extract_strided_slice %452 {offsets = [0, 64], sizes = [1, 32], strides = [1, 1]} : vector<1x128xf32> to vector<1x32xf32>
    %cst_150 = arith.constant 2.000000e+00 : f32
    %454 = vector.broadcast %cst_150 : f32 to vector<1x32xf32>
    %455 = arith.mulf %454, %453 : vector<1x32xf32>
    %cst_151 = arith.constant 1.000000e+00 : f32
    %456 = vector.broadcast %cst_151 : f32 to vector<1x32xf32>
    %457 = arith.subf %455, %456 : vector<1x32xf32>
    %458 = vector.extract_strided_slice %452 {offsets = [0, 32], sizes = [1, 32], strides = [1, 1]} : vector<1x128xf32> to vector<1x32xf32>
    %459 = arith.mulf %458, %370 : vector<1x32xf32>
    %460 = vector.extract_strided_slice %452 {offsets = [0, 0], sizes = [1, 32], strides = [1, 1]} : vector<1x128xf32> to vector<1x32xf32>
    %461 = arith.mulf %460, %457 : vector<1x32xf32>
    %462 = arith.addf %459, %461 : vector<1x32xf32>
    %463 = vector.extract_strided_slice %452 {offsets = [0, 96], sizes = [1, 32], strides = [1, 1]} : vector<1x128xf32> to vector<1x32xf32>
    %464 = math.tanh %462 : vector<1x32xf32>
    %465 = arith.mulf %463, %464 : vector<1x32xf32>
    %466 = arith.truncf %465 : vector<1x32xf32> to vector<1x32xbf16>
    %cst_152 = arith.constant dense<0.000000e+00> : vector<1x128xf32>
    %467 = tpu.matmul %466, %2, %cst_152 {dimension_numbers = #tpu.dot_dimension_numbers<[1], [0], [0], [1], [0, 0, 1, 1], [], []>} : vector<1x32xbf16>, vector<32x128xbf16>, vector<1x128xf32> -> vector<1x128xf32>
    %cst_153 = arith.constant dense<0.000000e+00> : vector<1x128xf32>
    %468 = tpu.matmul %397, %3, %cst_153 {dimension_numbers = #tpu.dot_dimension_numbers<[1], [0], [0], [1], [0, 0, 1, 1], [], []>} : vector<1x32xbf16>, vector<32x128xbf16>, vector<1x128xf32> -> vector<1x128xf32>
    %469 = arith.addf %467, %468 : vector<1x128xf32>
    %470 = arith.addf %469, %5 : vector<1x128xf32>
    %471 = arith.negf %470 : vector<1x128xf32>
    %472 = math.exp %471 : vector<1x128xf32>
    %cst_154 = arith.constant 1.000000e+00 : f32
    %473 = vector.broadcast %cst_154 : f32 to vector<1x128xf32>
    %474 = arith.addf %473, %472 : vector<1x128xf32>
    %475 = arith.divf %473, %474 : vector<1x128xf32>
    %476 = vector.extract_strided_slice %475 {offsets = [0, 64], sizes = [1, 32], strides = [1, 1]} : vector<1x128xf32> to vector<1x32xf32>
    %cst_155 = arith.constant 2.000000e+00 : f32
    %477 = vector.broadcast %cst_155 : f32 to vector<1x32xf32>
    %478 = arith.mulf %477, %476 : vector<1x32xf32>
    %cst_156 = arith.constant 1.000000e+00 : f32
    %479 = vector.broadcast %cst_156 : f32 to vector<1x32xf32>
    %480 = arith.subf %478, %479 : vector<1x32xf32>
    %481 = vector.extract_strided_slice %475 {offsets = [0, 32], sizes = [1, 32], strides = [1, 1]} : vector<1x128xf32> to vector<1x32xf32>
    %482 = arith.mulf %481, %393 : vector<1x32xf32>
    %483 = vector.extract_strided_slice %475 {offsets = [0, 0], sizes = [1, 32], strides = [1, 1]} : vector<1x128xf32> to vector<1x32xf32>
    %484 = arith.mulf %483, %480 : vector<1x32xf32>
    %485 = arith.addf %482, %484 : vector<1x32xf32>
    %486 = vector.extract_strided_slice %475 {offsets = [0, 96], sizes = [1, 32], strides = [1, 1]} : vector<1x128xf32> to vector<1x32xf32>
    %487 = math.tanh %485 : vector<1x32xf32>
    %488 = arith.mulf %486, %487 : vector<1x32xf32>
    %489 = arith.truncf %488 : vector<1x32xf32> to vector<1x32xbf16>
    %cst_157 = arith.constant dense<0.000000e+00> : vector<1x4xf32>
    %490 = tpu.matmul %489, %15, %cst_157 {dimension_numbers = #tpu.dot_dimension_numbers<[1], [0], [0], [1], [0, 0, 1, 1], [], []>} : vector<1x32xbf16>, vector<32x4xbf16>, vector<1x4xf32> -> vector<1x4xf32>
    %491 = arith.addf %490, %31 : vector<1x4xf32>
    %492 = math.exp %491 : vector<1x4xf32>
    %cst_158 = arith.constant dense<0.000000e+00> : vector<1xf32>
    %493 = vector.multi_reduction <add>, %492, %cst_158 [1] : vector<1x4xf32> to vector<1xf32>
    %494 = vector.shape_cast %493 : vector<1xf32> to vector<1x1xf32>
    %495 = tpu.reciprocal %494 {approx = true} : vector<1x1xf32> -> vector<1x1xf32>
    %496 = arith.mulf %494, %495 : vector<1x1xf32>
    %cst_159 = arith.constant 2.000000e+00 : f32
    %497 = vector.broadcast %cst_159 : f32 to vector<1x1xf32>
    %498 = arith.subf %497, %496 : vector<1x1xf32>
    %499 = arith.mulf %495, %498 : vector<1x1xf32>
    %500 = vector.broadcast %499 : vector<1x1xf32> to vector<1x4xf32>
    %501 = arith.mulf %492, %500 : vector<1x4xf32>
    %c4_160 = arith.constant 4 : index
    %c0_161 = arith.constant 0 : index
    %502 = vector.load %arg12[%c4_160, %c0_161] : memref<8x4xf32, #tpu.memory_space<vmem>>, vector<1x4xf32>
    tpu.vector_store %arg12[%c4_160, %c0_161], %501 {strides = array<i32>} : memref<8x4xf32, #tpu.memory_space<vmem>>, vector<1x4xf32>,
    %503 = vector.extract_strided_slice %501 {offsets = [0, 0], sizes = [1, 1], strides = [1, 1]} : vector<1x4xf32> to vector<1x1xf32>
    %504 = vector.extract_strided_slice %501 {offsets = [0, 1], sizes = [1, 1], strides = [1, 1]} : vector<1x4xf32> to vector<1x1xf32>
    %505 = vector.extract_strided_slice %501 {offsets = [0, 2], sizes = [1, 1], strides = [1, 1]} : vector<1x4xf32> to vector<1x1xf32>
    %506 = vector.extract_strided_slice %501 {offsets = [0, 3], sizes = [1, 1], strides = [1, 1]} : vector<1x4xf32> to vector<1x1xf32>
    %507 = arith.cmpf ole, %503, %47 : vector<1x1xf32>
    %508 = arith.extui %507 : vector<1x1xi1> to vector<1x1xi32>
    %509 = arith.sitofp %508 : vector<1x1xi32> to vector<1x1xf32>
    %510 = arith.subf %504, %503 : vector<1x1xf32>
    %511 = arith.mulf %509, %510 : vector<1x1xf32>
    %512 = arith.addf %503, %511 : vector<1x1xf32>
    %513 = arith.addf %503, %504 : vector<1x1xf32>
    %514 = arith.cmpf ole, %513, %47 : vector<1x1xf32>
    %515 = arith.extui %514 : vector<1x1xi1> to vector<1x1xi32>
    %516 = arith.sitofp %515 : vector<1x1xi32> to vector<1x1xf32>
    %517 = arith.addf %509, %516 : vector<1x1xf32>
    %518 = arith.subf %505, %504 : vector<1x1xf32>
    %519 = arith.mulf %516, %518 : vector<1x1xf32>
    %520 = arith.addf %512, %519 : vector<1x1xf32>
    %521 = arith.addf %513, %505 : vector<1x1xf32>
    %522 = arith.cmpf ole, %521, %47 : vector<1x1xf32>
    %523 = arith.extui %522 : vector<1x1xi1> to vector<1x1xi32>
    %524 = arith.sitofp %523 : vector<1x1xi32> to vector<1x1xf32>
    %525 = arith.addf %517, %524 : vector<1x1xf32>
    %526 = arith.subf %506, %505 : vector<1x1xf32>
    %527 = arith.mulf %524, %526 : vector<1x1xf32>
    %528 = arith.addf %520, %527 : vector<1x1xf32>
    %cst_162 = arith.constant -1.000000e+00 : f32
    %529 = vector.broadcast %cst_162 : f32 to vector<1x1xf32>
    %530 = arith.cmpf one, %63, %529 : vector<1x1xf32>
    %531 = arith.select %530, %63, %525 : vector<1x1xi1>, vector<1x1xf32>
    %532 = arith.fptosi %531 : vector<1x1xf32> to vector<1x1xi32>
    %c0_163 = arith.constant 0 : index
    %c4_164 = arith.constant 4 : index
    %533 = vector.load %arg10[%c0_163, %c4_164] : memref<1x8xi32, #tpu.memory_space<vmem>>, vector<1x1xi32>
    tpu.vector_store %arg10[%c0_163, %c4_164], %532 {strides = array<i32>} : memref<1x8xi32, #tpu.memory_space<vmem>>, vector<1x1xi32>,
    %c0_165 = arith.constant 0 : index
    %c4_166 = arith.constant 4 : index
    %534 = vector.load %arg11[%c0_165, %c4_166] : memref<1x8xf32, #tpu.memory_space<vmem>>, vector<1x1xf32>
    tpu.vector_store %arg11[%c0_165, %c4_166], %528 {strides = array<i32>} : memref<1x8xf32, #tpu.memory_space<vmem>>, vector<1x1xf32>,
    %535 = vector.broadcast %531 : vector<1x1xf32> to vector<1x128xf32>
    %536 = arith.mulf %535, %0 : vector<1x128xf32>
    %cst_167 = arith.constant dense<0.000000e+00> : vector<1x128xf32>
    %537 = tpu.matmul %466, %1, %cst_167 {dimension_numbers = #tpu.dot_dimension_numbers<[1], [0], [0], [1], [0, 0, 1, 1], [], []>} : vector<1x32xbf16>, vector<32x128xbf16>, vector<1x128xf32> -> vector<1x128xf32>
    %538 = arith.addf %536, %537 : vector<1x128xf32>
    %539 = arith.addf %538, %4 : vector<1x128xf32>
    %540 = arith.negf %539 : vector<1x128xf32>
    %541 = math.exp %540 : vector<1x128xf32>
    %cst_168 = arith.constant 1.000000e+00 : f32
    %542 = vector.broadcast %cst_168 : f32 to vector<1x128xf32>
    %543 = arith.addf %542, %541 : vector<1x128xf32>
    %544 = arith.divf %542, %543 : vector<1x128xf32>
    %545 = vector.extract_strided_slice %544 {offsets = [0, 64], sizes = [1, 32], strides = [1, 1]} : vector<1x128xf32> to vector<1x32xf32>
    %cst_169 = arith.constant 2.000000e+00 : f32
    %546 = vector.broadcast %cst_169 : f32 to vector<1x32xf32>
    %547 = arith.mulf %546, %545 : vector<1x32xf32>
    %cst_170 = arith.constant 1.000000e+00 : f32
    %548 = vector.broadcast %cst_170 : f32 to vector<1x32xf32>
    %549 = arith.subf %547, %548 : vector<1x32xf32>
    %550 = vector.extract_strided_slice %544 {offsets = [0, 32], sizes = [1, 32], strides = [1, 1]} : vector<1x128xf32> to vector<1x32xf32>
    %551 = arith.mulf %550, %462 : vector<1x32xf32>
    %552 = vector.extract_strided_slice %544 {offsets = [0, 0], sizes = [1, 32], strides = [1, 1]} : vector<1x128xf32> to vector<1x32xf32>
    %553 = arith.mulf %552, %549 : vector<1x32xf32>
    %554 = arith.addf %551, %553 : vector<1x32xf32>
    %555 = vector.extract_strided_slice %544 {offsets = [0, 96], sizes = [1, 32], strides = [1, 1]} : vector<1x128xf32> to vector<1x32xf32>
    %556 = math.tanh %554 : vector<1x32xf32>
    %557 = arith.mulf %555, %556 : vector<1x32xf32>
    %558 = arith.truncf %557 : vector<1x32xf32> to vector<1x32xbf16>
    %cst_171 = arith.constant dense<0.000000e+00> : vector<1x128xf32>
    %559 = tpu.matmul %558, %2, %cst_171 {dimension_numbers = #tpu.dot_dimension_numbers<[1], [0], [0], [1], [0, 0, 1, 1], [], []>} : vector<1x32xbf16>, vector<32x128xbf16>, vector<1x128xf32> -> vector<1x128xf32>
    %cst_172 = arith.constant dense<0.000000e+00> : vector<1x128xf32>
    %560 = tpu.matmul %489, %3, %cst_172 {dimension_numbers = #tpu.dot_dimension_numbers<[1], [0], [0], [1], [0, 0, 1, 1], [], []>} : vector<1x32xbf16>, vector<32x128xbf16>, vector<1x128xf32> -> vector<1x128xf32>
    %561 = arith.addf %559, %560 : vector<1x128xf32>
    %562 = arith.addf %561, %5 : vector<1x128xf32>
    %563 = arith.negf %562 : vector<1x128xf32>
    %564 = math.exp %563 : vector<1x128xf32>
    %cst_173 = arith.constant 1.000000e+00 : f32
    %565 = vector.broadcast %cst_173 : f32 to vector<1x128xf32>
    %566 = arith.addf %565, %564 : vector<1x128xf32>
    %567 = arith.divf %565, %566 : vector<1x128xf32>
    %568 = vector.extract_strided_slice %567 {offsets = [0, 64], sizes = [1, 32], strides = [1, 1]} : vector<1x128xf32> to vector<1x32xf32>
    %cst_174 = arith.constant 2.000000e+00 : f32
    %569 = vector.broadcast %cst_174 : f32 to vector<1x32xf32>
    %570 = arith.mulf %569, %568 : vector<1x32xf32>
    %cst_175 = arith.constant 1.000000e+00 : f32
    %571 = vector.broadcast %cst_175 : f32 to vector<1x32xf32>
    %572 = arith.subf %570, %571 : vector<1x32xf32>
    %573 = vector.extract_strided_slice %567 {offsets = [0, 32], sizes = [1, 32], strides = [1, 1]} : vector<1x128xf32> to vector<1x32xf32>
    %574 = arith.mulf %573, %485 : vector<1x32xf32>
    %575 = vector.extract_strided_slice %567 {offsets = [0, 0], sizes = [1, 32], strides = [1, 1]} : vector<1x128xf32> to vector<1x32xf32>
    %576 = arith.mulf %575, %572 : vector<1x32xf32>
    %577 = arith.addf %574, %576 : vector<1x32xf32>
    %578 = vector.extract_strided_slice %567 {offsets = [0, 96], sizes = [1, 32], strides = [1, 1]} : vector<1x128xf32> to vector<1x32xf32>
    %579 = math.tanh %577 : vector<1x32xf32>
    %580 = arith.mulf %578, %579 : vector<1x32xf32>
    %581 = arith.truncf %580 : vector<1x32xf32> to vector<1x32xbf16>
    %cst_176 = arith.constant dense<0.000000e+00> : vector<1x4xf32>
    %582 = tpu.matmul %581, %17, %cst_176 {dimension_numbers = #tpu.dot_dimension_numbers<[1], [0], [0], [1], [0, 0, 1, 1], [], []>} : vector<1x32xbf16>, vector<32x4xbf16>, vector<1x4xf32> -> vector<1x4xf32>
    %583 = arith.addf %582, %33 : vector<1x4xf32>
    %584 = math.exp %583 : vector<1x4xf32>
    %cst_177 = arith.constant dense<0.000000e+00> : vector<1xf32>
    %585 = vector.multi_reduction <add>, %584, %cst_177 [1] : vector<1x4xf32> to vector<1xf32>
    %586 = vector.shape_cast %585 : vector<1xf32> to vector<1x1xf32>
    %587 = tpu.reciprocal %586 {approx = true} : vector<1x1xf32> -> vector<1x1xf32>
    %588 = arith.mulf %586, %587 : vector<1x1xf32>
    %cst_178 = arith.constant 2.000000e+00 : f32
    %589 = vector.broadcast %cst_178 : f32 to vector<1x1xf32>
    %590 = arith.subf %589, %588 : vector<1x1xf32>
    %591 = arith.mulf %587, %590 : vector<1x1xf32>
    %592 = vector.broadcast %591 : vector<1x1xf32> to vector<1x4xf32>
    %593 = arith.mulf %584, %592 : vector<1x4xf32>
    %c5_179 = arith.constant 5 : index
    %c0_180 = arith.constant 0 : index
    %594 = vector.load %arg12[%c5_179, %c0_180] : memref<8x4xf32, #tpu.memory_space<vmem>>, vector<1x4xf32>
    tpu.vector_store %arg12[%c5_179, %c0_180], %593 {strides = array<i32>} : memref<8x4xf32, #tpu.memory_space<vmem>>, vector<1x4xf32>,
    %595 = vector.extract_strided_slice %593 {offsets = [0, 0], sizes = [1, 1], strides = [1, 1]} : vector<1x4xf32> to vector<1x1xf32>
    %596 = vector.extract_strided_slice %593 {offsets = [0, 1], sizes = [1, 1], strides = [1, 1]} : vector<1x4xf32> to vector<1x1xf32>
    %597 = vector.extract_strided_slice %593 {offsets = [0, 2], sizes = [1, 1], strides = [1, 1]} : vector<1x4xf32> to vector<1x1xf32>
    %598 = vector.extract_strided_slice %593 {offsets = [0, 3], sizes = [1, 1], strides = [1, 1]} : vector<1x4xf32> to vector<1x1xf32>
    %599 = arith.cmpf ole, %595, %49 : vector<1x1xf32>
    %600 = arith.extui %599 : vector<1x1xi1> to vector<1x1xi32>
    %601 = arith.sitofp %600 : vector<1x1xi32> to vector<1x1xf32>
    %602 = arith.subf %596, %595 : vector<1x1xf32>
    %603 = arith.mulf %601, %602 : vector<1x1xf32>
    %604 = arith.addf %595, %603 : vector<1x1xf32>
    %605 = arith.addf %595, %596 : vector<1x1xf32>
    %606 = arith.cmpf ole, %605, %49 : vector<1x1xf32>
    %607 = arith.extui %606 : vector<1x1xi1> to vector<1x1xi32>
    %608 = arith.sitofp %607 : vector<1x1xi32> to vector<1x1xf32>
    %609 = arith.addf %601, %608 : vector<1x1xf32>
    %610 = arith.subf %597, %596 : vector<1x1xf32>
    %611 = arith.mulf %608, %610 : vector<1x1xf32>
    %612 = arith.addf %604, %611 : vector<1x1xf32>
    %613 = arith.addf %605, %597 : vector<1x1xf32>
    %614 = arith.cmpf ole, %613, %49 : vector<1x1xf32>
    %615 = arith.extui %614 : vector<1x1xi1> to vector<1x1xi32>
    %616 = arith.sitofp %615 : vector<1x1xi32> to vector<1x1xf32>
    %617 = arith.addf %609, %616 : vector<1x1xf32>
    %618 = arith.subf %598, %597 : vector<1x1xf32>
    %619 = arith.mulf %616, %618 : vector<1x1xf32>
    %620 = arith.addf %612, %619 : vector<1x1xf32>
    %cst_181 = arith.constant -1.000000e+00 : f32
    %621 = vector.broadcast %cst_181 : f32 to vector<1x1xf32>
    %622 = arith.cmpf one, %65, %621 : vector<1x1xf32>
    %623 = arith.select %622, %65, %617 : vector<1x1xi1>, vector<1x1xf32>
    %624 = arith.fptosi %623 : vector<1x1xf32> to vector<1x1xi32>
    %c0_182 = arith.constant 0 : index
    %c5_183 = arith.constant 5 : index
    %625 = vector.load %arg10[%c0_182, %c5_183] : memref<1x8xi32, #tpu.memory_space<vmem>>, vector<1x1xi32>
    tpu.vector_store %arg10[%c0_182, %c5_183], %624 {strides = array<i32>} : memref<1x8xi32, #tpu.memory_space<vmem>>, vector<1x1xi32>,
    %c0_184 = arith.constant 0 : index
    %c5_185 = arith.constant 5 : index
    %626 = vector.load %arg11[%c0_184, %c5_185] : memref<1x8xf32, #tpu.memory_space<vmem>>, vector<1x1xf32>
    tpu.vector_store %arg11[%c0_184, %c5_185], %620 {strides = array<i32>} : memref<1x8xf32, #tpu.memory_space<vmem>>, vector<1x1xf32>,
    %627 = vector.broadcast %623 : vector<1x1xf32> to vector<1x128xf32>
    %628 = arith.mulf %627, %0 : vector<1x128xf32>
    %cst_186 = arith.constant dense<0.000000e+00> : vector<1x128xf32>
    %629 = tpu.matmul %558, %1, %cst_186 {dimension_numbers = #tpu.dot_dimension_numbers<[1], [0], [0], [1], [0, 0, 1, 1], [], []>} : vector<1x32xbf16>, vector<32x128xbf16>, vector<1x128xf32> -> vector<1x128xf32>
    %630 = arith.addf %628, %629 : vector<1x128xf32>
    %631 = arith.addf %630, %4 : vector<1x128xf32>
    %632 = arith.negf %631 : vector<1x128xf32>
    %633 = math.exp %632 : vector<1x128xf32>
    %cst_187 = arith.constant 1.000000e+00 : f32
    %634 = vector.broadcast %cst_187 : f32 to vector<1x128xf32>
    %635 = arith.addf %634, %633 : vector<1x128xf32>
    %636 = arith.divf %634, %635 : vector<1x128xf32>
    %637 = vector.extract_strided_slice %636 {offsets = [0, 64], sizes = [1, 32], strides = [1, 1]} : vector<1x128xf32> to vector<1x32xf32>
    %cst_188 = arith.constant 2.000000e+00 : f32
    %638 = vector.broadcast %cst_188 : f32 to vector<1x32xf32>
    %639 = arith.mulf %638, %637 : vector<1x32xf32>
    %cst_189 = arith.constant 1.000000e+00 : f32
    %640 = vector.broadcast %cst_189 : f32 to vector<1x32xf32>
    %641 = arith.subf %639, %640 : vector<1x32xf32>
    %642 = vector.extract_strided_slice %636 {offsets = [0, 32], sizes = [1, 32], strides = [1, 1]} : vector<1x128xf32> to vector<1x32xf32>
    %643 = arith.mulf %642, %554 : vector<1x32xf32>
    %644 = vector.extract_strided_slice %636 {offsets = [0, 0], sizes = [1, 32], strides = [1, 1]} : vector<1x128xf32> to vector<1x32xf32>
    %645 = arith.mulf %644, %641 : vector<1x32xf32>
    %646 = arith.addf %643, %645 : vector<1x32xf32>
    %647 = vector.extract_strided_slice %636 {offsets = [0, 96], sizes = [1, 32], strides = [1, 1]} : vector<1x128xf32> to vector<1x32xf32>
    %648 = math.tanh %646 : vector<1x32xf32>
    %649 = arith.mulf %647, %648 : vector<1x32xf32>
    %650 = arith.truncf %649 : vector<1x32xf32> to vector<1x32xbf16>
    %cst_190 = arith.constant dense<0.000000e+00> : vector<1x128xf32>
    %651 = tpu.matmul %650, %2, %cst_190 {dimension_numbers = #tpu.dot_dimension_numbers<[1], [0], [0], [1], [0, 0, 1, 1], [], []>} : vector<1x32xbf16>, vector<32x128xbf16>, vector<1x128xf32> -> vector<1x128xf32>
    %cst_191 = arith.constant dense<0.000000e+00> : vector<1x128xf32>
    %652 = tpu.matmul %581, %3, %cst_191 {dimension_numbers = #tpu.dot_dimension_numbers<[1], [0], [0], [1], [0, 0, 1, 1], [], []>} : vector<1x32xbf16>, vector<32x128xbf16>, vector<1x128xf32> -> vector<1x128xf32>
    %653 = arith.addf %651, %652 : vector<1x128xf32>
    %654 = arith.addf %653, %5 : vector<1x128xf32>
    %655 = arith.negf %654 : vector<1x128xf32>
    %656 = math.exp %655 : vector<1x128xf32>
    %cst_192 = arith.constant 1.000000e+00 : f32
    %657 = vector.broadcast %cst_192 : f32 to vector<1x128xf32>
    %658 = arith.addf %657, %656 : vector<1x128xf32>
    %659 = arith.divf %657, %658 : vector<1x128xf32>
    %660 = vector.extract_strided_slice %659 {offsets = [0, 64], sizes = [1, 32], strides = [1, 1]} : vector<1x128xf32> to vector<1x32xf32>
    %cst_193 = arith.constant 2.000000e+00 : f32
    %661 = vector.broadcast %cst_193 : f32 to vector<1x32xf32>
    %662 = arith.mulf %661, %660 : vector<1x32xf32>
    %cst_194 = arith.constant 1.000000e+00 : f32
    %663 = vector.broadcast %cst_194 : f32 to vector<1x32xf32>
    %664 = arith.subf %662, %663 : vector<1x32xf32>
    %665 = vector.extract_strided_slice %659 {offsets = [0, 32], sizes = [1, 32], strides = [1, 1]} : vector<1x128xf32> to vector<1x32xf32>
    %666 = arith.mulf %665, %577 : vector<1x32xf32>
    %667 = vector.extract_strided_slice %659 {offsets = [0, 0], sizes = [1, 32], strides = [1, 1]} : vector<1x128xf32> to vector<1x32xf32>
    %668 = arith.mulf %667, %664 : vector<1x32xf32>
    %669 = arith.addf %666, %668 : vector<1x32xf32>
    %670 = vector.extract_strided_slice %659 {offsets = [0, 96], sizes = [1, 32], strides = [1, 1]} : vector<1x128xf32> to vector<1x32xf32>
    %671 = math.tanh %669 : vector<1x32xf32>
    %672 = arith.mulf %670, %671 : vector<1x32xf32>
    %673 = arith.truncf %672 : vector<1x32xf32> to vector<1x32xbf16>
    %cst_195 = arith.constant dense<0.000000e+00> : vector<1x4xf32>
    %674 = tpu.matmul %673, %19, %cst_195 {dimension_numbers = #tpu.dot_dimension_numbers<[1], [0], [0], [1], [0, 0, 1, 1], [], []>} : vector<1x32xbf16>, vector<32x4xbf16>, vector<1x4xf32> -> vector<1x4xf32>
    %675 = arith.addf %674, %35 : vector<1x4xf32>
    %676 = math.exp %675 : vector<1x4xf32>
    %cst_196 = arith.constant dense<0.000000e+00> : vector<1xf32>
    %677 = vector.multi_reduction <add>, %676, %cst_196 [1] : vector<1x4xf32> to vector<1xf32>
    %678 = vector.shape_cast %677 : vector<1xf32> to vector<1x1xf32>
    %679 = tpu.reciprocal %678 {approx = true} : vector<1x1xf32> -> vector<1x1xf32>
    %680 = arith.mulf %678, %679 : vector<1x1xf32>
    %cst_197 = arith.constant 2.000000e+00 : f32
    %681 = vector.broadcast %cst_197 : f32 to vector<1x1xf32>
    %682 = arith.subf %681, %680 : vector<1x1xf32>
    %683 = arith.mulf %679, %682 : vector<1x1xf32>
    %684 = vector.broadcast %683 : vector<1x1xf32> to vector<1x4xf32>
    %685 = arith.mulf %676, %684 : vector<1x4xf32>
    %c6_198 = arith.constant 6 : index
    %c0_199 = arith.constant 0 : index
    %686 = vector.load %arg12[%c6_198, %c0_199] : memref<8x4xf32, #tpu.memory_space<vmem>>, vector<1x4xf32>
    tpu.vector_store %arg12[%c6_198, %c0_199], %685 {strides = array<i32>} : memref<8x4xf32, #tpu.memory_space<vmem>>, vector<1x4xf32>,
    %687 = vector.extract_strided_slice %685 {offsets = [0, 0], sizes = [1, 1], strides = [1, 1]} : vector<1x4xf32> to vector<1x1xf32>
    %688 = vector.extract_strided_slice %685 {offsets = [0, 1], sizes = [1, 1], strides = [1, 1]} : vector<1x4xf32> to vector<1x1xf32>
    %689 = vector.extract_strided_slice %685 {offsets = [0, 2], sizes = [1, 1], strides = [1, 1]} : vector<1x4xf32> to vector<1x1xf32>
    %690 = vector.extract_strided_slice %685 {offsets = [0, 3], sizes = [1, 1], strides = [1, 1]} : vector<1x4xf32> to vector<1x1xf32>
    %691 = arith.cmpf ole, %687, %51 : vector<1x1xf32>
    %692 = arith.extui %691 : vector<1x1xi1> to vector<1x1xi32>
    %693 = arith.sitofp %692 : vector<1x1xi32> to vector<1x1xf32>
    %694 = arith.subf %688, %687 : vector<1x1xf32>
    %695 = arith.mulf %693, %694 : vector<1x1xf32>
    %696 = arith.addf %687, %695 : vector<1x1xf32>
    %697 = arith.addf %687, %688 : vector<1x1xf32>
    %698 = arith.cmpf ole, %697, %51 : vector<1x1xf32>
    %699 = arith.extui %698 : vector<1x1xi1> to vector<1x1xi32>
    %700 = arith.sitofp %699 : vector<1x1xi32> to vector<1x1xf32>
    %701 = arith.addf %693, %700 : vector<1x1xf32>
    %702 = arith.subf %689, %688 : vector<1x1xf32>
    %703 = arith.mulf %700, %702 : vector<1x1xf32>
    %704 = arith.addf %696, %703 : vector<1x1xf32>
    %705 = arith.addf %697, %689 : vector<1x1xf32>
    %706 = arith.cmpf ole, %705, %51 : vector<1x1xf32>
    %707 = arith.extui %706 : vector<1x1xi1> to vector<1x1xi32>
    %708 = arith.sitofp %707 : vector<1x1xi32> to vector<1x1xf32>
    %709 = arith.addf %701, %708 : vector<1x1xf32>
    %710 = arith.subf %690, %689 : vector<1x1xf32>
    %711 = arith.mulf %708, %710 : vector<1x1xf32>
    %712 = arith.addf %704, %711 : vector<1x1xf32>
    %cst_200 = arith.constant -1.000000e+00 : f32
    %713 = vector.broadcast %cst_200 : f32 to vector<1x1xf32>
    %714 = arith.cmpf one, %67, %713 : vector<1x1xf32>
    %715 = arith.select %714, %67, %709 : vector<1x1xi1>, vector<1x1xf32>
    %716 = arith.fptosi %715 : vector<1x1xf32> to vector<1x1xi32>
    %c0_201 = arith.constant 0 : index
    %c6_202 = arith.constant 6 : index
    %717 = vector.load %arg10[%c0_201, %c6_202] : memref<1x8xi32, #tpu.memory_space<vmem>>, vector<1x1xi32>
    tpu.vector_store %arg10[%c0_201, %c6_202], %716 {strides = array<i32>} : memref<1x8xi32, #tpu.memory_space<vmem>>, vector<1x1xi32>,
    %c0_203 = arith.constant 0 : index
    %c6_204 = arith.constant 6 : index
    %718 = vector.load %arg11[%c0_203, %c6_204] : memref<1x8xf32, #tpu.memory_space<vmem>>, vector<1x1xf32>
    tpu.vector_store %arg11[%c0_203, %c6_204], %712 {strides = array<i32>} : memref<1x8xf32, #tpu.memory_space<vmem>>, vector<1x1xf32>,
    %719 = vector.broadcast %715 : vector<1x1xf32> to vector<1x128xf32>
    %720 = arith.mulf %719, %0 : vector<1x128xf32>
    %cst_205 = arith.constant dense<0.000000e+00> : vector<1x128xf32>
    %721 = tpu.matmul %650, %1, %cst_205 {dimension_numbers = #tpu.dot_dimension_numbers<[1], [0], [0], [1], [0, 0, 1, 1], [], []>} : vector<1x32xbf16>, vector<32x128xbf16>, vector<1x128xf32> -> vector<1x128xf32>
    %722 = arith.addf %720, %721 : vector<1x128xf32>
    %723 = arith.addf %722, %4 : vector<1x128xf32>
    %724 = arith.negf %723 : vector<1x128xf32>
    %725 = math.exp %724 : vector<1x128xf32>
    %cst_206 = arith.constant 1.000000e+00 : f32
    %726 = vector.broadcast %cst_206 : f32 to vector<1x128xf32>
    %727 = arith.addf %726, %725 : vector<1x128xf32>
    %728 = arith.divf %726, %727 : vector<1x128xf32>
    %729 = vector.extract_strided_slice %728 {offsets = [0, 64], sizes = [1, 32], strides = [1, 1]} : vector<1x128xf32> to vector<1x32xf32>
    %cst_207 = arith.constant 2.000000e+00 : f32
    %730 = vector.broadcast %cst_207 : f32 to vector<1x32xf32>
    %731 = arith.mulf %730, %729 : vector<1x32xf32>
    %cst_208 = arith.constant 1.000000e+00 : f32
    %732 = vector.broadcast %cst_208 : f32 to vector<1x32xf32>
    %733 = arith.subf %731, %732 : vector<1x32xf32>
    %734 = vector.extract_strided_slice %728 {offsets = [0, 32], sizes = [1, 32], strides = [1, 1]} : vector<1x128xf32> to vector<1x32xf32>
    %735 = arith.mulf %734, %646 : vector<1x32xf32>
    %736 = vector.extract_strided_slice %728 {offsets = [0, 0], sizes = [1, 32], strides = [1, 1]} : vector<1x128xf32> to vector<1x32xf32>
    %737 = arith.mulf %736, %733 : vector<1x32xf32>
    %738 = arith.addf %735, %737 : vector<1x32xf32>
    %739 = vector.extract_strided_slice %728 {offsets = [0, 96], sizes = [1, 32], strides = [1, 1]} : vector<1x128xf32> to vector<1x32xf32>
    %740 = math.tanh %738 : vector<1x32xf32>
    %741 = arith.mulf %739, %740 : vector<1x32xf32>
    %742 = arith.truncf %741 : vector<1x32xf32> to vector<1x32xbf16>
    %cst_209 = arith.constant dense<0.000000e+00> : vector<1x128xf32>
    %743 = tpu.matmul %742, %2, %cst_209 {dimension_numbers = #tpu.dot_dimension_numbers<[1], [0], [0], [1], [0, 0, 1, 1], [], []>} : vector<1x32xbf16>, vector<32x128xbf16>, vector<1x128xf32> -> vector<1x128xf32>
    %cst_210 = arith.constant dense<0.000000e+00> : vector<1x128xf32>
    %744 = tpu.matmul %673, %3, %cst_210 {dimension_numbers = #tpu.dot_dimension_numbers<[1], [0], [0], [1], [0, 0, 1, 1], [], []>} : vector<1x32xbf16>, vector<32x128xbf16>, vector<1x128xf32> -> vector<1x128xf32>
    %745 = arith.addf %743, %744 : vector<1x128xf32>
    %746 = arith.addf %745, %5 : vector<1x128xf32>
    %747 = arith.negf %746 : vector<1x128xf32>
    %748 = math.exp %747 : vector<1x128xf32>
    %cst_211 = arith.constant 1.000000e+00 : f32
    %749 = vector.broadcast %cst_211 : f32 to vector<1x128xf32>
    %750 = arith.addf %749, %748 : vector<1x128xf32>
    %751 = arith.divf %749, %750 : vector<1x128xf32>
    %752 = vector.extract_strided_slice %751 {offsets = [0, 64], sizes = [1, 32], strides = [1, 1]} : vector<1x128xf32> to vector<1x32xf32>
    %cst_212 = arith.constant 2.000000e+00 : f32
    %753 = vector.broadcast %cst_212 : f32 to vector<1x32xf32>
    %754 = arith.mulf %753, %752 : vector<1x32xf32>
    %cst_213 = arith.constant 1.000000e+00 : f32
    %755 = vector.broadcast %cst_213 : f32 to vector<1x32xf32>
    %756 = arith.subf %754, %755 : vector<1x32xf32>
    %757 = vector.extract_strided_slice %751 {offsets = [0, 32], sizes = [1, 32], strides = [1, 1]} : vector<1x128xf32> to vector<1x32xf32>
    %758 = arith.mulf %757, %669 : vector<1x32xf32>
    %759 = vector.extract_strided_slice %751 {offsets = [0, 0], sizes = [1, 32], strides = [1, 1]} : vector<1x128xf32> to vector<1x32xf32>
    %760 = arith.mulf %759, %756 : vector<1x32xf32>
    %761 = arith.addf %758, %760 : vector<1x32xf32>
    %762 = vector.extract_strided_slice %751 {offsets = [0, 96], sizes = [1, 32], strides = [1, 1]} : vector<1x128xf32> to vector<1x32xf32>
    %763 = math.tanh %761 : vector<1x32xf32>
    %764 = arith.mulf %762, %763 : vector<1x32xf32>
    %765 = arith.truncf %764 : vector<1x32xf32> to vector<1x32xbf16>
    %cst_214 = arith.constant dense<0.000000e+00> : vector<1x4xf32>
    %766 = tpu.matmul %765, %21, %cst_214 {dimension_numbers = #tpu.dot_dimension_numbers<[1], [0], [0], [1], [0, 0, 1, 1], [], []>} : vector<1x32xbf16>, vector<32x4xbf16>, vector<1x4xf32> -> vector<1x4xf32>
    %767 = arith.addf %766, %37 : vector<1x4xf32>
    %768 = math.exp %767 : vector<1x4xf32>
    %cst_215 = arith.constant dense<0.000000e+00> : vector<1xf32>
    %769 = vector.multi_reduction <add>, %768, %cst_215 [1] : vector<1x4xf32> to vector<1xf32>
    %770 = vector.shape_cast %769 : vector<1xf32> to vector<1x1xf32>
    %771 = tpu.reciprocal %770 {approx = true} : vector<1x1xf32> -> vector<1x1xf32>
    %772 = arith.mulf %770, %771 : vector<1x1xf32>
    %cst_216 = arith.constant 2.000000e+00 : f32
    %773 = vector.broadcast %cst_216 : f32 to vector<1x1xf32>
    %774 = arith.subf %773, %772 : vector<1x1xf32>
    %775 = arith.mulf %771, %774 : vector<1x1xf32>
    %776 = vector.broadcast %775 : vector<1x1xf32> to vector<1x4xf32>
    %777 = arith.mulf %768, %776 : vector<1x4xf32>
    %c7_217 = arith.constant 7 : index
    %c0_218 = arith.constant 0 : index
    %778 = vector.load %arg12[%c7_217, %c0_218] : memref<8x4xf32, #tpu.memory_space<vmem>>, vector<1x4xf32>
    tpu.vector_store %arg12[%c7_217, %c0_218], %777 {strides = array<i32>} : memref<8x4xf32, #tpu.memory_space<vmem>>, vector<1x4xf32>,
    %779 = vector.extract_strided_slice %777 {offsets = [0, 0], sizes = [1, 1], strides = [1, 1]} : vector<1x4xf32> to vector<1x1xf32>
    %780 = vector.extract_strided_slice %777 {offsets = [0, 1], sizes = [1, 1], strides = [1, 1]} : vector<1x4xf32> to vector<1x1xf32>
    %781 = vector.extract_strided_slice %777 {offsets = [0, 2], sizes = [1, 1], strides = [1, 1]} : vector<1x4xf32> to vector<1x1xf32>
    %782 = vector.extract_strided_slice %777 {offsets = [0, 3], sizes = [1, 1], strides = [1, 1]} : vector<1x4xf32> to vector<1x1xf32>
    %783 = arith.cmpf ole, %779, %53 : vector<1x1xf32>
    %784 = arith.extui %783 : vector<1x1xi1> to vector<1x1xi32>
    %785 = arith.sitofp %784 : vector<1x1xi32> to vector<1x1xf32>
    %786 = arith.subf %780, %779 : vector<1x1xf32>
    %787 = arith.mulf %785, %786 : vector<1x1xf32>
    %788 = arith.addf %779, %787 : vector<1x1xf32>
    %789 = arith.addf %779, %780 : vector<1x1xf32>
    %790 = arith.cmpf ole, %789, %53 : vector<1x1xf32>
    %791 = arith.extui %790 : vector<1x1xi1> to vector<1x1xi32>
    %792 = arith.sitofp %791 : vector<1x1xi32> to vector<1x1xf32>
    %793 = arith.addf %785, %792 : vector<1x1xf32>
    %794 = arith.subf %781, %780 : vector<1x1xf32>
    %795 = arith.mulf %792, %794 : vector<1x1xf32>
    %796 = arith.addf %788, %795 : vector<1x1xf32>
    %797 = arith.addf %789, %781 : vector<1x1xf32>
    %798 = arith.cmpf ole, %797, %53 : vector<1x1xf32>
    %799 = arith.extui %798 : vector<1x1xi1> to vector<1x1xi32>
    %800 = arith.sitofp %799 : vector<1x1xi32> to vector<1x1xf32>
    %801 = arith.addf %793, %800 : vector<1x1xf32>
    %802 = arith.subf %782, %781 : vector<1x1xf32>
    %803 = arith.mulf %800, %802 : vector<1x1xf32>
    %804 = arith.addf %796, %803 : vector<1x1xf32>
    %cst_219 = arith.constant -1.000000e+00 : f32
    %805 = vector.broadcast %cst_219 : f32 to vector<1x1xf32>
    %806 = arith.cmpf one, %69, %805 : vector<1x1xf32>
    %807 = arith.select %806, %69, %801 : vector<1x1xi1>, vector<1x1xf32>
    %808 = arith.fptosi %807 : vector<1x1xf32> to vector<1x1xi32>
    %c0_220 = arith.constant 0 : index
    %c7_221 = arith.constant 7 : index
    %809 = vector.load %arg10[%c0_220, %c7_221] : memref<1x8xi32, #tpu.memory_space<vmem>>, vector<1x1xi32>
    tpu.vector_store %arg10[%c0_220, %c7_221], %808 {strides = array<i32>} : memref<1x8xi32, #tpu.memory_space<vmem>>, vector<1x1xi32>,
    %c0_222 = arith.constant 0 : index
    %c7_223 = arith.constant 7 : index
    %810 = vector.load %arg11[%c0_222, %c7_223] : memref<1x8xf32, #tpu.memory_space<vmem>>, vector<1x1xf32>
    tpu.vector_store %arg11[%c0_222, %c7_223], %804 {strides = array<i32>} : memref<1x8xf32, #tpu.memory_space<vmem>>, vector<1x1xf32>,
    return
  }
}

</mosaic_0001>

<llo_original>
// kernel: tpu_custom_call.1
$region0: #{tpu_custom_call.1}
  #allocation0 [shape = 'u32[]', space=smem, size = 0x4, offset = 0x4, fixed_abs, tag = 'smem constant byte address 0x4 - core index']
  #allocation1 [shape = 'u32[72,128]{1,0:T(1,128)}', space=vmem, size = 0x9000, scoped, tag = 'internal scratch']
  %s0 = inlined_call_operand.vmem [shape: f32[1,128], index: 0, kind: input, shape index: {}]
  %s1 = inlined_call_operand.vmem [shape: bf16[32,128], index: 1, kind: input, shape index: {}]
  %s2 = inlined_call_operand.vmem [shape: bf16[32,128], index: 2, kind: input, shape index: {}]
  %s3 = inlined_call_operand.vmem [shape: bf16[32,128], index: 3, kind: input, shape index: {}]
  %s4 = inlined_call_operand.vmem [shape: f32[1,128], index: 4, kind: input, shape index: {}]
  %s5 = inlined_call_operand.vmem [shape: f32[1,128], index: 5, kind: input, shape index: {}]
  %s6 = inlined_call_operand.vmem [shape: bf16[8,32,4], index: 6, kind: input, shape index: {}]
  %s7 = inlined_call_operand.vmem [shape: f32[8,1,4], index: 7, kind: input, shape index: {}]
  %s8 = inlined_call_operand.vmem [shape: f32[8], index: 8, kind: input, shape index: {}]
  %s9 = inlined_call_operand.vmem [shape: f32[8], index: 9, kind: input, shape index: {}]
  %s10 = inlined_call_operand.hbm [shape: s32[1,8], index: 10, kind: output, shape index: {0}]
  %s11 = inlined_call_operand.hbm [shape: f32[1,8], index: 11, kind: output, shape index: {1}]
  %s12 = inlined_call_operand.vmem [shape: f32[8,4], index: 12, kind: output, shape index: {2}]
  %13 = xla_tuple %s10, %s11, %s12
  %s14 = sld [smem:[#allocation0]]
  $region74: #{tpu_custom_call.1} parent=0
    _
  %s16 = ssub.s32 1, %s14
  %s17 = scalar_select 0, %s16, %s14
  $region1: #{tpu_custom_call.1} parent=0
    #allocation2 [shape = 'u8[512]{0}', space=smem, size = 0x200, scoped, tag = 'input window, operand 8, single buffered']
    #allocation3 [shape = 's32[1]{0}', space=sflag, size = 0x4, scoped, tag = 'scoped memory for tpu_custom_call.1']
    #allocation4 [shape = 's32[1]{0}', space=sflag, size = 0x4, scoped, tag = 'scoped memory for tpu_custom_call.1']
    #allocation5 [shape = 'u8[512]{0}', space=smem, size = 0x200, scoped, tag = 'input window, operand 9, single buffered']
    #allocation6 [shape = 's32[1]{0}', space=sflag, size = 0x4, scoped, tag = 'scoped memory for tpu_custom_call.1']
    #allocation7 [shape = 'u8[512]{0}', space=vmem, size = 0x400, scoped, tag = 'output window, operand 0, single buffered']
    #allocation8 [shape = 'u8[512]{0}', space=vmem, size = 0x400, scoped, tag = 'output window, operand 1, single buffered']
    #allocation9 [shape = 's32[1]{0}', space=sflag, size = 0x4, scoped, tag = 'scoped memory for tpu_custom_call.1']
    %18 = vsyncpa [#allocation4], 0
    %19 = vsyncpa [#allocation6], 0
    %20 = vsyncpa [#allocation3], 0
    %21 = vsyncpa [#allocation9], 0
    // Predicated region
    $region2: #{tpu_custom_call.1} parent=1 // pred_check
      _
    $region3: #{tpu_custom_call.1} parent=1 // pred_check_branch
      %23 = sbr.rel (0) target = $region5
    $region4: #{tpu_custom_call.1} parent=1 // pred_region
      _
    $region5: #{tpu_custom_call.1} parent=1 // pred_fallthru
      _
    // Predicated region
    $region6: #{tpu_custom_call.1} parent=1 // pred_check
      _
    $region7: #{tpu_custom_call.1} parent=1 // pred_check_branch
      %25 = sbr.rel (0) target = $region9
    $region8: #{tpu_custom_call.1} parent=1 // pred_region
      _
    $region9: #{tpu_custom_call.1} parent=1 // pred_fallthru
      _
    // Predicated region
    $region10: #{tpu_custom_call.1} parent=1 // pred_check
      _
    $region11: #{tpu_custom_call.1} parent=1 // pred_check_branch
      %27 = sbr.rel (0) target = $region13
    $region12: #{tpu_custom_call.1} parent=1 // pred_region
      _
    $region13: #{tpu_custom_call.1} parent=1 // pred_fallthru
      _
    // Predicated region
    $region14: #{tpu_custom_call.1} parent=1 // pred_check
      _
    $region15: #{tpu_custom_call.1} parent=1 // pred_check_branch
      %29 = sbr.rel (0) target = $region17
    $region16: #{tpu_custom_call.1} parent=1 // pred_region
      _
    $region17: #{tpu_custom_call.1} parent=1 // pred_fallthru
      _
    // Predicated region
    $region18: #{tpu_custom_call.1} parent=1 // pred_check
      _
    $region19: #{tpu_custom_call.1} parent=1 // pred_check_branch
      %31 = sbr.rel (0) target = $region21
    $region20: #{tpu_custom_call.1} parent=1 // pred_region
      _
    $region21: #{tpu_custom_call.1} parent=1 // pred_fallthru
      _
    // Predicated region
    $region22: #{tpu_custom_call.1} parent=1 // pred_check
      _
    $region23: #{tpu_custom_call.1} parent=1 // pred_check_branch
      %33 = sbr.rel (0) target = $region25
    $region24: #{tpu_custom_call.1} parent=1 // pred_region
      _
    $region25: #{tpu_custom_call.1} parent=1 // pred_fallthru
      _
    // Predicated region
    $region26: #{tpu_custom_call.1} parent=1 // pred_check
      _
    $region27: #{tpu_custom_call.1} parent=1 // pred_check_branch
      %35 = sbr.rel (0) target = $region29
    $region28: #{tpu_custom_call.1} parent=1 // pred_region
      _
    $region29: #{tpu_custom_call.1} parent=1 // pred_fallthru
      _
    // Predicated region
    $region30: #{tpu_custom_call.1} parent=1 // pred_check
      _
    $region31: #{tpu_custom_call.1} parent=1 // pred_check_branch
      %37 = sbr.rel (0) target = $region33
    $region32: #{tpu_custom_call.1} parent=1 // pred_region
      _
    $region33: #{tpu_custom_call.1} parent=1 // pred_fallthru
      _
    // Predicated region
    $region34: #{tpu_custom_call.1} parent=1 // pred_check
      _
    $region35: #{tpu_custom_call.1} parent=1 // pred_check_branch
      %39 = sbr.rel (0) target = $region37
    $region36: #{tpu_custom_call.1} parent=1 // pred_region
      %41 = vsyncadd [#allocation4], 0
      %s43 = sshll.u32 %s8, 4
      %s44 = int_to_ptr.vmem [resolvable:$true] %s43
      %46 = dma.vmem_to_smem %s44, 16, [#allocation2], [#allocation4]
    $region37: #{tpu_custom_call.1} parent=1 // pred_fallthru
      _
    // Predicated region
    $region38: #{tpu_custom_call.1} parent=1 // pred_check
      _
    $region39: #{tpu_custom_call.1} parent=1 // pred_check_branch
      %48 = sbr.rel (0) target = $region41
    $region40: #{tpu_custom_call.1} parent=1 // pred_region
      %50 = vsyncadd [#allocation6], 0
      %s52 = sshll.u32 %s9, 4
      %s53 = int_to_ptr.vmem [resolvable:$true] %s52
      %55 = dma.vmem_to_smem %s53, 16, [#allocation5], [#allocation6]
    $region41: #{tpu_custom_call.1} parent=1 // pred_fallthru
      _
    // Predicated region
    $region42: #{tpu_custom_call.1} parent=1 // pred_check
      _
    $region43: #{tpu_custom_call.1} parent=1 // pred_check_branch
      %57 = sbr.rel (0) target = $region45
    $region44: #{tpu_custom_call.1} parent=1 // pred_region
      %59 = dma.done [#allocation4], 16
    $region45: #{tpu_custom_call.1} parent=1 // pred_fallthru
      _
    // Predicated region
    $region46: #{tpu_custom_call.1} parent=1 // pred_check
      _
    $region47: #{tpu_custom_call.1} parent=1 // pred_check_branch
      %61 = sbr.rel (0) target = $region49
    $region48: #{tpu_custom_call.1} parent=1 // pred_region
      %63 = dma.done [#allocation6], 16
    $region49: #{tpu_custom_call.1} parent=1 // pred_fallthru
      _
    %64 = sfence
    %v66 = vld [vmem:[%s0] sm:$0x1]
    %v67 = vld [vmem:[%s1] sm:$0xf]
    %v68 = vld [vmem:[%s1 + $0x4] sm:$0xf]
    %v69 = vld [vmem:[%s1 + $0x8] sm:$0xf]
    %v70 = vld [vmem:[%s1 + $0xc] sm:$0xf]
    %v71 = vld [vmem:[%s2] sm:$0xf]
    %v72 = vld [vmem:[%s2 + $0x4] sm:$0xf]
    %v73 = vld [vmem:[%s2 + $0x8] sm:$0xf]
    %v74 = vld [vmem:[%s2 + $0xc] sm:$0xf]
    %v75 = vld [vmem:[%s3] sm:$0xf]
    %v76 = vld [vmem:[%s3 + $0x4] sm:$0xf]
    %v77 = vld [vmem:[%s3 + $0x8] sm:$0xf]
    %v78 = vld [vmem:[%s3 + $0xc] sm:$0xf]
    %v79 = vld [vmem:[%s4] sm:$0x1]
    %v80 = vld [vmem:[%s5] sm:$0x1]
    %v81 = vld [vmem:[%s6] sm:$0xf]
    %v82 = vld [vmem:[%s6 + $0x4] sm:$0xf]
    %v83 = vld [vmem:[%s6 + $0x8] sm:$0xf]
    %v84 = vld [vmem:[%s6 + $0xc] sm:$0xf]
    %s85 = scalar_lea.vmem %s6, 16
    %v86 = vld [vmem:[%s85] sm:$0xf]
    %v87 = vld [vmem:[%s85 + $0x4] sm:$0xf]
    %v88 = vld [vmem:[%s85 + $0x8] sm:$0xf]
    %v89 = vld [vmem:[%s85 + $0xc] sm:$0xf]
    %s90 = scalar_lea.vmem %s6, 32
    %v91 = vld [vmem:[%s90] sm:$0xf]
    %v92 = vld [vmem:[%s90 + $0x4] sm:$0xf]
    %v93 = vld [vmem:[%s90 + $0x8] sm:$0xf]
    %v94 = vld [vmem:[%s90 + $0xc] sm:$0xf]
    %s95 = scalar_lea.vmem %s6, 48
    %v96 = vld [vmem:[%s95] sm:$0xf]
    %v97 = vld [vmem:[%s95 + $0x4] sm:$0xf]
    %v98 = vld [vmem:[%s95 + $0x8] sm:$0xf]
    %v99 = vld [vmem:[%s95 + $0xc] sm:$0xf]
    %s100 = scalar_lea.vmem %s6, 64
    %v101 = vld [vmem:[%s100] sm:$0xf]
    %v102 = vld [vmem:[%s100 + $0x4] sm:$0xf]
    %v103 = vld [vmem:[%s100 + $0x8] sm:$0xf]
    %v104 = vld [vmem:[%s100 + $0xc] sm:$0xf]
    %s105 = scalar_lea.vmem %s6, 80
    %v106 = vld [vmem:[%s105] sm:$0xf]
    %v107 = vld [vmem:[%s105 + $0x4] sm:$0xf]
    %v108 = vld [vmem:[%s105 + $0x8] sm:$0xf]
    %v109 = vld [vmem:[%s105 + $0xc] sm:$0xf]
    %s110 = scalar_lea.vmem %s6, 96
    %v111 = vld [vmem:[%s110] sm:$0xf]
    %v112 = vld [vmem:[%s110 + $0x4] sm:$0xf]
    %v113 = vld [vmem:[%s110 + $0x8] sm:$0xf]
    %v114 = vld [vmem:[%s110 + $0xc] sm:$0xf]
    %s115 = scalar_lea.vmem %s6, 112
    %v116 = vld [vmem:[%s115] sm:$0xf]
    %v117 = vld [vmem:[%s115 + $0x4] sm:$0xf]
    %v118 = vld [vmem:[%s115 + $0x8] sm:$0xf]
    %v119 = vld [vmem:[%s115 + $0xc] sm:$0xf]
    %v120 = vld [vmem:[%s7] sm:$0x1]
    %s121 = scalar_lea.vmem %s7, 1
    %v122 = vld [vmem:[%s121] sm:$0x1]
    %s123 = scalar_lea.vmem %s7, 2
    %v124 = vld [vmem:[%s123] sm:$0x1]
    %s125 = scalar_lea.vmem %s7, 3
    %v126 = vld [vmem:[%s125] sm:$0x1]
    %s127 = scalar_lea.vmem %s7, 4
    %v128 = vld [vmem:[%s127] sm:$0x1]
    %s129 = scalar_lea.vmem %s7, 5
    %v130 = vld [vmem:[%s129] sm:$0x1]
    %s131 = scalar_lea.vmem %s7, 6
    %v132 = vld [vmem:[%s131] sm:$0x1]
    %s133 = scalar_lea.vmem %s7, 7
    %v134 = vld [vmem:[%s133] sm:$0x1]
    %s135 = sld [smem:[#allocation5]]
    %v136 = vstv %s135
    %s137 = sld [smem:[#allocation5 + $0x1]]
    %v138 = vstv %s137
    %s139 = sld [smem:[#allocation5 + $0x2]]
    %v140 = vstv %s139
    %s141 = sld [smem:[#allocation5 + $0x3]]
    %v142 = vstv %s141
    %s143 = sld [smem:[#allocation5 + $0x4]]
    %v144 = vstv %s143
    %s145 = sld [smem:[#allocation5 + $0x5]]
    %v146 = vstv %s145
    %s147 = sld [smem:[#allocation5 + $0x6]]
    %v148 = vstv %s147
    %s149 = sld [smem:[#allocation5 + $0x7]]
    %v150 = vstv %s149
    %s151 = sld [smem:[#allocation2]]
    %v152 = vstv %s151
    %s153 = sld [smem:[#allocation2 + $0x1]]
    %v154 = vstv %s153
    %s155 = sld [smem:[#allocation2 + $0x2]]
    %v156 = vstv %s155
    %s157 = sld [smem:[#allocation2 + $0x3]]
    %v158 = vstv %s157
    %s159 = sld [smem:[#allocation2 + $0x4]]
    %v160 = vstv %s159
    %s161 = sld [smem:[#allocation2 + $0x5]]
    %v162 = vstv %s161
    %s163 = sld [smem:[#allocation2 + $0x6]]
    %v164 = vstv %s163
    %s165 = sld [smem:[#allocation2 + $0x7]]
    %v166 = vstv %s165
    %v167 = vmul.f32 %v66, 0.0
    %v172 = vunpack.c.l.b16 %v67
    %v173 = vunpack.c.l.b16 %v68
    %v174 = vunpack.c.l.b16 %v69
    %v175 = vunpack.c.l.b16 %v70
    %v176 = vpack.c.b16 %v173, %v172
    %v177 = vpack.c.b16 %v175, %v174
    %vm180 = vcmask 261120
    %v182 = vsel %vm180, 0, 0
    %184 = vmatpush.bf16.msra.mxu0 0
    %185 = vmatpush.bf16.msra.mxu0 0
    %186 = vmatpush.bf16.msra.mxu0 0
    %187 = vmatpush.bf16.msra.mxu0 0
    %188 = vmatpush.bf16.msra.mxu0 0
    %189 = vmatpush.bf16.msra.mxu0 0
    %190 = vmatpush.bf16.msra.mxu0 %v177
    %191 = vmatpush.bf16.msra.mxu0 %v176
    %192 = vmatmul.bf16.gmra.mxu0 %v182
    %v193 = vpop.f32.mrf.mxu0
    %v194 = vadd.f32 0.0, %v193
    %v195 = vpop.f32.mrf.mxu0
    %196 = vdwg.mxu0
    %v197 = vadd.f32 %v167, %v194
    %v198 = vadd.f32 %v197, %v79
    %v199 = vxor.u32 %v198, 2147483648
    %v200 = vmul.f32 %v199, 1.442695
    %v201 = vpow.pop %v200
    %v202 = vadd.f32 %v201, 1.0
    %v203 = vrcp.pop %v202
    %v204 = vmul.f32 %v202, %v203
    %v205 = vsub.f32 1.0, %v204
    %v206 = vmul.f32 %v203, %v205
    %v207 = vadd.f32 %v203, %v206
    %vm208 = vweird.f32 %v202
    %vm209 = vweird.f32 %v203
    %vm210 = vmor %vm208, %vm209
    %v211 = vsel %vm210, %v203, %v207
    %v212 = vand.u32 2147483647, %v202
    %vm213 = vcmp.eq.f32.partialorder %v212, 8.507059e+37
    %v214 = vand.u32 %v202, 2147483648
    %v215 = vor.u32 1.1754944e-38, %v214
    %v216 = vsel %vm213, %v215, %v211
    %v217 = vmul.f32 1.0, %v216
    %v218 = vmul.f32 %v217, 2.0
    %v219 = vsub.f32 %v218, 1.0
    %v220 = vmul.f32 %v217, 0.0
    %222 = vrot.lane.b32.xlu0 %v219, 64
    %v223 = vpop.permute.xlu0 %222
    %v225 = vmul.f32 %v217, %v223
    %227 = vrot.lane.b32.xlu0 %v225, 32
    %v228 = vpop.permute.xlu0 %227
    %v230 = vadd.f32 %v220, %v228
    %v231 = vtanh.pop %v230
    %233 = vrot.lane.b32.xlu0 %v231, 64
    %v234 = vpop.permute.xlu0 %233
    %v236 = vmul.f32 %v217, %v234
    %v237 = vpack.c.bf16 %v236, %v236
    %v242 = vunpack.c.l.b16 %v75
    %v243 = vunpack.c.l.b16 %v76
    %v244 = vunpack.c.l.b16 %v77
    %v245 = vunpack.c.l.b16 %v78
    %v246 = vpack.c.b16 %v243, %v242
    %v247 = vpack.c.b16 %v245, %v244
    %250 = vmatpush.bf16.msra.mxu0 0
    %251 = vmatpush.bf16.msra.mxu0 0
    %252 = vmatpush.bf16.msra.mxu0 0
    %253 = vmatpush.bf16.msra.mxu0 0
    %254 = vmatpush.bf16.msra.mxu0 0
    %255 = vmatpush.bf16.msra.mxu0 0
    %256 = vmatpush.bf16.msra.mxu0 %v247
    %257 = vmatpush.bf16.msra.mxu0 %v246
    %258 = vmatmul.bf16.gmra.mxu0 %v182
    %v259 = vpop.f32.mrf.mxu0
    %v260 = vadd.f32 0.0, %v259
    %v261 = vpop.f32.mrf.mxu0
    %262 = vdwg.mxu0
    %264 = vrot.lane.b32.xlu0 %v237, 32
    %v265 = vpop.permute.xlu0 %264
    %v270 = vunpack.c.l.b16 %v71
    %v271 = vunpack.c.l.b16 %v72
    %v272 = vunpack.c.l.b16 %v73
    %v273 = vunpack.c.l.b16 %v74
    %v274 = vpack.c.b16 %v271, %v270
    %v275 = vpack.c.b16 %v273, %v272
    %v279 = vsel %vm180, %v265, 0
    %281 = vmatpush.bf16.msra.mxu0 0
    %282 = vmatpush.bf16.msra.mxu0 0
    %283 = vmatpush.bf16.msra.mxu0 0
    %284 = vmatpush.bf16.msra.mxu0 0
    %285 = vmatpush.bf16.msra.mxu0 0
    %286 = vmatpush.bf16.msra.mxu0 0
    %287 = vmatpush.bf16.msra.mxu0 %v275
    %288 = vmatpush.bf16.msra.mxu0 %v274
    %289 = vmatmul.bf16.gmra.mxu0 %v279
    %v290 = vpop.f32.mrf.mxu0
    %v291 = vadd.f32 %v260, %v290
    %v292 = vpop.f32.mrf.mxu0
    %293 = vdwg.mxu0
    %v294 = vadd.f32 %v291, %v80
    %v295 = vxor.u32 %v294, 2147483648
    %v296 = vmul.f32 %v295, 1.442695
    %v297 = vpow.pop %v296
    %v298 = vadd.f32 %v297, 1.0
    %v299 = vrcp.pop %v298
    %v300 = vmul.f32 %v298, %v299
    %v301 = vsub.f32 1.0, %v300
    %v302 = vmul.f32 %v299, %v301
    %v303 = vadd.f32 %v299, %v302
    %vm304 = vweird.f32 %v298
    %vm305 = vweird.f32 %v299
    %vm306 = vmor %vm304, %vm305
    %v307 = vsel %vm306, %v299, %v303
    %v308 = vand.u32 2147483647, %v298
    %vm309 = vcmp.eq.f32.partialorder %v308, 8.507059e+37
    %v310 = vand.u32 %v298, 2147483648
    %v311 = vor.u32 1.1754944e-38, %v310
    %v312 = vsel %vm309, %v311, %v307
    %v313 = vmul.f32 1.0, %v312
    %v314 = vmul.f32 %v313, 2.0
    %v315 = vsub.f32 %v314, 1.0
    %v316 = vmul.f32 %v313, 0.0
    %318 = vrot.lane.b32.xlu0 %v315, 64
    %v319 = vpop.permute.xlu0 %318
    %v321 = vmul.f32 %v313, %v319
    %323 = vrot.lane.b32.xlu0 %v321, 32
    %v324 = vpop.permute.xlu0 %323
    %v326 = vadd.f32 %v316, %v324
    %v327 = vtanh.pop %v326
    %329 = vrot.lane.b32.xlu0 %v327, 64
    %v330 = vpop.permute.xlu0 %329
    %v332 = vmul.f32 %v313, %v330
    %v333 = vpack.c.bf16 %v332, %v332
    %335 = vrot.lane.b32.xlu0 %v333, 32
    %v336 = vpop.permute.xlu0 %335
    %v341 = vunpack.c.l.b16 %v81
    %v342 = vunpack.c.l.b16 %v82
    %v343 = vunpack.c.l.b16 %v83
    %v344 = vunpack.c.l.b16 %v84
    %v345 = vpack.c.b16 %v342, %v341
    %v346 = vpack.c.b16 %v344, %v343
    %v350 = vsel %vm180, %v336, 0
    %352 = vmatpush.bf16.msra.mxu0 0
    %353 = vmatpush.bf16.msra.mxu0 0
    %354 = vmatpush.bf16.msra.mxu0 0
    %355 = vmatpush.bf16.msra.mxu0 0
    %356 = vmatpush.bf16.msra.mxu0 0
    %357 = vmatpush.bf16.msra.mxu0 0
    %358 = vmatpush.bf16.msra.mxu0 %v346
    %359 = vmatpush.bf16.msra.mxu0 %v345
    %360 = vmatmul.bf16.gmra.mxu0 %v350
    %v361 = vpop.f32.mrf.mxu0
    %v362 = vadd.f32 %v120, %v361
    %v363 = vpop.f32.mrf.mxu0
    %364 = vdwg.mxu0
    %v365 = vmul.f32 %v362, 1.442695
    %v366 = vpow.pop %v365
    %vm367 = vcmask 24576
    %v368 = vsel %vm367, %v366, 0.0
    %369 = vadd.xlane.f32.xlu0 %v368
    %v370 = vpop.xlane.xlu0 %369
    %v371 = vrcp.pop %v370
    %v372 = vmul.f32 %v370, %v371
    %v373 = vsub.f32 2.0, %v372
    %v374 = vmul.f32 %v371, %v373
    %v375 = vmul.f32 %v366, %v374
    %376 = vst.msk [vmem:[%s12] sm:$0x1] %vm367, %v375
    %vm377 = vcmp.le.f32.partialorder %v375, %v136
    %v378 = vsel %vm377, 1, 0
    %v379 = vcvt.s32.f32 %v378
    %381 = vrot.lane.b32.xlu0 %v375, 1
    %v382 = vpop.permute.xlu0 %381
    %v384 = vsub.f32 %v375, %v382
    %386 = vrot.lane.b32.xlu0 %v384, 127
    %v387 = vpop.permute.xlu0 %386
    %v389 = vmul.f32 %v379, %v387
    %v390 = vadd.f32 %v375, %v389
    %391 = vrot.lane.b32.xlu0 %v375, 127
    %v392 = vpop.permute.xlu0 %391
    %v394 = vadd.f32 %v375, %v392
    %vm395 = vcmp.le.f32.partialorder %v394, %v136
    %v396 = vsel %vm395, 1, 0
    %v397 = vcvt.s32.f32 %v396
    %v398 = vadd.f32 %v379, %v397
    %399 = vrot.lane.b32.xlu0 %v384, 126
    %v400 = vpop.permute.xlu0 %399
    %v402 = vmul.f32 %v397, %v400
    %v403 = vadd.f32 %v390, %v402
    %404 = vrot.lane.b32.xlu0 %v375, 126
    %v405 = vpop.permute.xlu0 %404
    %v407 = vadd.f32 %v394, %v405
    %vm408 = vcmp.le.f32.partialorder %v407, %v136
    %v409 = vsel %vm408, 1, 0
    %v410 = vcvt.s32.f32 %v409
    %v411 = vadd.f32 %v398, %v410
    %412 = vrot.lane.b32.xlu0 %v384, 125
    %v413 = vpop.permute.xlu0 %412
    %v415 = vmul.f32 %v410, %v413
    %v416 = vadd.f32 %v403, %v415
    %vm417 = vcmp.ne.f32.partialorder %v152, -1.0
    %v418 = vsel %vm417, %v152, %v411
    %v419 = vcvt.f32.s32.to.zero.pseudo %v418
    %vm420 = vcmask 0
    %421 = vst.msk [vmem:[#allocation7] sm:$0x1] %vm420, %v419
    %422 = vst.msk [vmem:[#allocation8] sm:$0x1] %vm420, %v416
    %424 = vset.pattern.permute.xlu0 0
    %425 = vperm.xlu0 %424, %v418
    %v426 = vpop.permute.xlu0 %425
    %v428 = vmul.f32 %v426, %v66
    %429 = vmatpush.bf16.msra.mxu0 0
    %430 = vmatpush.bf16.msra.mxu0 0
    %431 = vmatpush.bf16.msra.mxu0 0
    %432 = vmatpush.bf16.msra.mxu0 0
    %433 = vmatpush.bf16.msra.mxu0 0
    %434 = vmatpush.bf16.msra.mxu0 0
    %435 = vmatpush.bf16.msra.mxu0 %v177
    %436 = vmatpush.bf16.msra.mxu0 %v176
    %437 = vmatmul.bf16.gmra.mxu0 %v279
    %v438 = vpop.f32.mrf.mxu0
    %v439 = vadd.f32 0.0, %v438
    %v440 = vpop.f32.mrf.mxu0
    %441 = vdwg.mxu0
    %v442 = vadd.f32 %v428, %v439
    %v443 = vadd.f32 %v442, %v79
    %v444 = vxor.u32 %v443, 2147483648
    %v445 = vmul.f32 %v444, 1.442695
    %v446 = vpow.pop %v445
    %v447 = vadd.f32 %v446, 1.0
    %v448 = vrcp.pop %v447
    %v449 = vmul.f32 %v447, %v448
    %v450 = vsub.f32 1.0, %v449
    %v451 = vmul.f32 %v448, %v450
    %v452 = vadd.f32 %v448, %v451
    %vm453 = vweird.f32 %v447
    %vm454 = vweird.f32 %v448
    %vm455 = vmor %vm453, %vm454
    %v456 = vsel %vm455, %v448, %v452
    %v457 = vand.u32 2147483647, %v447
    %vm458 = vcmp.eq.f32.partialorder %v457, 8.507059e+37
    %v459 = vand.u32 %v447, 2147483648
    %v460 = vor.u32 1.1754944e-38, %v459
    %v461 = vsel %vm458, %v460, %v456
    %v462 = vmul.f32 1.0, %v461
    %v463 = vmul.f32 %v462, 2.0
    %v464 = vsub.f32 %v463, 1.0
    %v465 = vmul.f32 %v462, %v230
    %467 = vrot.lane.b32.xlu0 %v464, 64
    %v468 = vpop.permute.xlu0 %467
    %v470 = vmul.f32 %v462, %v468
    %472 = vrot.lane.b32.xlu0 %v470, 32
    %v473 = vpop.permute.xlu0 %472
    %v475 = vadd.f32 %v465, %v473
    %v476 = vtanh.pop %v475
    %478 = vrot.lane.b32.xlu0 %v476, 64
    %v479 = vpop.permute.xlu0 %478
    %v481 = vmul.f32 %v462, %v479
    %v482 = vpack.c.bf16 %v481, %v481
    %483 = vmatpush.bf16.msra.mxu0 0
    %484 = vmatpush.bf16.msra.mxu0 0
    %485 = vmatpush.bf16.msra.mxu0 0
    %486 = vmatpush.bf16.msra.mxu0 0
    %487 = vmatpush.bf16.msra.mxu0 0
    %488 = vmatpush.bf16.msra.mxu0 0
    %489 = vmatpush.bf16.msra.mxu0 %v247
    %490 = vmatpush.bf16.msra.mxu0 %v246
    %491 = vmatmul.bf16.gmra.mxu0 %v350
    %v492 = vpop.f32.mrf.mxu0
    %v493 = vadd.f32 0.0, %v492
    %v494 = vpop.f32.mrf.mxu0
    %495 = vdwg.mxu0
    %497 = vrot.lane.b32.xlu0 %v482, 32
    %v498 = vpop.permute.xlu0 %497
    %v500 = vsel %vm180, %v498, 0
    %502 = vmatpush.bf16.msra.mxu0 0
    %503 = vmatpush.bf16.msra.mxu0 0
    %504 = vmatpush.bf16.msra.mxu0 0
    %505 = vmatpush.bf16.msra.mxu0 0
    %506 = vmatpush.bf16.msra.mxu0 0
    %507 = vmatpush.bf16.msra.mxu0 0
    %508 = vmatpush.bf16.msra.mxu0 %v275
    %509 = vmatpush.bf16.msra.mxu0 %v274
    %510 = vmatmul.bf16.gmra.mxu0 %v500
    %v511 = vpop.f32.mrf.mxu0
    %v512 = vadd.f32 %v493, %v511
    %v513 = vpop.f32.mrf.mxu0
    %514 = vdwg.mxu0
    %v515 = vadd.f32 %v512, %v80
    %v516 = vxor.u32 %v515, 2147483648
    %v517 = vmul.f32 %v516, 1.442695
    %v518 = vpow.pop %v517
    %v519 = vadd.f32 %v518, 1.0
    %v520 = vrcp.pop %v519
    %v521 = vmul.f32 %v519, %v520
    %v522 = vsub.f32 1.0, %v521
    %v523 = vmul.f32 %v520, %v522
    %v524 = vadd.f32 %v520, %v523
    %vm525 = vweird.f32 %v519
    %vm526 = vweird.f32 %v520
    %vm527 = vmor %vm525, %vm526
    %v528 = vsel %vm527, %v520, %v524
    %v529 = vand.u32 2147483647, %v519
    %vm530 = vcmp.eq.f32.partialorder %v529, 8.507059e+37
    %v531 = vand.u32 %v519, 2147483648
    %v532 = vor.u32 1.1754944e-38, %v531
    %v533 = vsel %vm530, %v532, %v528
    %v534 = vmul.f32 1.0, %v533
    %v535 = vmul.f32 %v534, 2.0
    %v536 = vsub.f32 %v535, 1.0
    %v537 = vmul.f32 %v534, %v326
    %539 = vrot.lane.b32.xlu0 %v536, 64
    %v540 = vpop.permute.xlu0 %539
    %v542 = vmul.f32 %v534, %v540
    %544 = vrot.lane.b32.xlu0 %v542, 32
    %v545 = vpop.permute.xlu0 %544
    %v547 = vadd.f32 %v537, %v545
    %v548 = vtanh.pop %v547
    %550 = vrot.lane.b32.xlu0 %v548, 64
    %v551 = vpop.permute.xlu0 %550
    %v553 = vmul.f32 %v534, %v551
    %v554 = vpack.c.bf16 %v553, %v553
    %556 = vrot.lane.b32.xlu0 %v554, 32
    %v557 = vpop.permute.xlu0 %556
    %v562 = vunpack.c.l.b16 %v86
    %v563 = vunpack.c.l.b16 %v87
    %v564 = vunpack.c.l.b16 %v88
    %v565 = vunpack.c.l.b16 %v89
    %v566 = vpack.c.b16 %v563, %v562
    %v567 = vpack.c.b16 %v565, %v564
    %v571 = vsel %vm180, %v557, 0
    %573 = vmatpush.bf16.msra.mxu0 0
    %574 = vmatpush.bf16.msra.mxu0 0
    %575 = vmatpush.bf16.msra.mxu0 0
    %576 = vmatpush.bf16.msra.mxu0 0
    %577 = vmatpush.bf16.msra.mxu0 0
    %578 = vmatpush.bf16.msra.mxu0 0
    %579 = vmatpush.bf16.msra.mxu0 %v567
    %580 = vmatpush.bf16.msra.mxu0 %v566
    %581 = vmatmul.bf16.gmra.mxu0 %v571
    %v582 = vpop.f32.mrf.mxu0
    %v583 = vadd.f32 %v122, %v582
    %v584 = vpop.f32.mrf.mxu0
    %585 = vdwg.mxu0
    %v586 = vmul.f32 %v583, 1.442695
    %v587 = vpow.pop %v586
    %v588 = vsel %vm367, %v587, 0.0
    %589 = vadd.xlane.f32.xlu0 %v588
    %v590 = vpop.xlane.xlu0 %589
    %v591 = vrcp.pop %v590
    %v592 = vmul.f32 %v590, %v591
    %v593 = vsub.f32 2.0, %v592
    %v594 = vmul.f32 %v591, %v593
    %v595 = vmul.f32 %v587, %v594
    %596 = vst.msk [vmem:[%s12 + $0x1] sm:$0x1] %vm367, %v595
    %vm597 = vcmp.le.f32.partialorder %v595, %v138
    %v598 = vsel %vm597, 1, 0
    %v599 = vcvt.s32.f32 %v598
    %601 = vrot.lane.b32.xlu0 %v595, 1
    %v602 = vpop.permute.xlu0 %601
    %v604 = vsub.f32 %v595, %v602
    %606 = vrot.lane.b32.xlu0 %v604, 127
    %v607 = vpop.permute.xlu0 %606
    %v609 = vmul.f32 %v599, %v607
    %v610 = vadd.f32 %v595, %v609
    %611 = vrot.lane.b32.xlu0 %v595, 127
    %v612 = vpop.permute.xlu0 %611
    %v614 = vadd.f32 %v595, %v612
    %vm615 = vcmp.le.f32.partialorder %v614, %v138
    %v616 = vsel %vm615, 1, 0
    %v617 = vcvt.s32.f32 %v616
    %v618 = vadd.f32 %v599, %v617
    %619 = vrot.lane.b32.xlu0 %v604, 126
    %v620 = vpop.permute.xlu0 %619
    %v622 = vmul.f32 %v617, %v620
    %v623 = vadd.f32 %v610, %v622
    %624 = vrot.lane.b32.xlu0 %v595, 126
    %v625 = vpop.permute.xlu0 %624
    %v627 = vadd.f32 %v614, %v625
    %vm628 = vcmp.le.f32.partialorder %v627, %v138
    %v629 = vsel %vm628, 1, 0
    %v630 = vcvt.s32.f32 %v629
    %v631 = vadd.f32 %v618, %v630
    %632 = vrot.lane.b32.xlu0 %v604, 125
    %v633 = vpop.permute.xlu0 %632
    %v635 = vmul.f32 %v630, %v633
    %v636 = vadd.f32 %v623, %v635
    %vm637 = vcmp.ne.f32.partialorder %v154, -1.0
    %v638 = vsel %vm637, %v154, %v631
    %v639 = vcvt.f32.s32.to.zero.pseudo %v638
    %640 = vrot.lane.b32.xlu0 %v639, 1
    %v641 = vpop.permute.xlu0 %640
    %vm642 = vcmask 8200
    %643 = vst.msk [vmem:[#allocation7] sm:$0x1] %vm642, %v641
    %645 = vrot.lane.b32.xlu0 %v636, 1
    %v646 = vpop.permute.xlu0 %645
    %648 = vst.msk [vmem:[#allocation8] sm:$0x1] %vm642, %v646
    %650 = vset.pattern.permute.xlu0 0
    %651 = vperm.xlu0 %650, %v638
    %v652 = vpop.permute.xlu0 %651
    %v654 = vmul.f32 %v652, %v66
    %655 = vmatpush.bf16.msra.mxu0 0
    %656 = vmatpush.bf16.msra.mxu0 0
    %657 = vmatpush.bf16.msra.mxu0 0
    %658 = vmatpush.bf16.msra.mxu0 0
    %659 = vmatpush.bf16.msra.mxu0 0
    %660 = vmatpush.bf16.msra.mxu0 0
    %661 = vmatpush.bf16.msra.mxu0 %v177
    %662 = vmatpush.bf16.msra.mxu0 %v176
    %663 = vmatmul.bf16.gmra.mxu0 %v500
    %v664 = vpop.f32.mrf.mxu0
    %v665 = vadd.f32 0.0, %v664
    %v666 = vpop.f32.mrf.mxu0
    %667 = vdwg.mxu0
    %v668 = vadd.f32 %v654, %v665
    %v669 = vadd.f32 %v668, %v79
    %v670 = vxor.u32 %v669, 2147483648
    %v671 = vmul.f32 %v670, 1.442695
    %v672 = vpow.pop %v671
    %v673 = vadd.f32 %v672, 1.0
    %v674 = vrcp.pop %v673
    %v675 = vmul.f32 %v673, %v674
    %v676 = vsub.f32 1.0, %v675
    %v677 = vmul.f32 %v674, %v676
    %v678 = vadd.f32 %v674, %v677
    %vm679 = vweird.f32 %v673
    %vm680 = vweird.f32 %v674
    %vm681 = vmor %vm679, %vm680
    %v682 = vsel %vm681, %v674, %v678
    %v683 = vand.u32 2147483647, %v673
    %vm684 = vcmp.eq.f32.partialorder %v683, 8.507059e+37
    %v685 = vand.u32 %v673, 2147483648
    %v686 = vor.u32 1.1754944e-38, %v685
    %v687 = vsel %vm684, %v686, %v682
    %v688 = vmul.f32 1.0, %v687
    %v689 = vmul.f32 %v688, 2.0
    %v690 = vsub.f32 %v689, 1.0
    %v691 = vmul.f32 %v688, %v475
    %693 = vrot.lane.b32.xlu0 %v690, 64
    %v694 = vpop.permute.xlu0 %693
    %v696 = vmul.f32 %v688, %v694
    %698 = vrot.lane.b32.xlu0 %v696, 32
    %v699 = vpop.permute.xlu0 %698
    %v701 = vadd.f32 %v691, %v699
    %v702 = vtanh.pop %v701
    %704 = vrot.lane.b32.xlu0 %v702, 64
    %v705 = vpop.permute.xlu0 %704
    %v707 = vmul.f32 %v688, %v705
    %v708 = vpack.c.bf16 %v707, %v707
    %709 = vmatpush.bf16.msra.mxu0 0
    %710 = vmatpush.bf16.msra.mxu0 0
    %711 = vmatpush.bf16.msra.mxu0 0
    %712 = vmatpush.bf16.msra.mxu0 0
    %713 = vmatpush.bf16.msra.mxu0 0
    %714 = vmatpush.bf16.msra.mxu0 0
    %715 = vmatpush.bf16.msra.mxu0 %v247
    %716 = vmatpush.bf16.msra.mxu0 %v246
    %717 = vmatmul.bf16.gmra.mxu0 %v571
    %v718 = vpop.f32.mrf.mxu0
    %v719 = vadd.f32 0.0, %v718
    %v720 = vpop.f32.mrf.mxu0
    %721 = vdwg.mxu0
    %723 = vrot.lane.b32.xlu0 %v708, 32
    %v724 = vpop.permute.xlu0 %723
    %v726 = vsel %vm180, %v724, 0
    %728 = vmatpush.bf16.msra.mxu0 0
    %729 = vmatpush.bf16.msra.mxu0 0
    %730 = vmatpush.bf16.msra.mxu0 0
    %731 = vmatpush.bf16.msra.mxu0 0
    %732 = vmatpush.bf16.msra.mxu0 0
    %733 = vmatpush.bf16.msra.mxu0 0
    %734 = vmatpush.bf16.msra.mxu0 %v275
    %735 = vmatpush.bf16.msra.mxu0 %v274
    %736 = vmatmul.bf16.gmra.mxu0 %v726
    %v737 = vpop.f32.mrf.mxu0
    %v738 = vadd.f32 %v719, %v737
    %v739 = vpop.f32.mrf.mxu0
    %740 = vdwg.mxu0
    %v741 = vadd.f32 %v738, %v80
    %v742 = vxor.u32 %v741, 2147483648
    %v743 = vmul.f32 %v742, 1.442695
    %v744 = vpow.pop %v743
    %v745 = vadd.f32 %v744, 1.0
    %v746 = vrcp.pop %v745
    %v747 = vmul.f32 %v745, %v746
    %v748 = vsub.f32 1.0, %v747
    %v749 = vmul.f32 %v746, %v748
    %v750 = vadd.f32 %v746, %v749
    %vm751 = vweird.f32 %v745
    %vm752 = vweird.f32 %v746
    %vm753 = vmor %vm751, %vm752
    %v754 = vsel %vm753, %v746, %v750
    %v755 = vand.u32 2147483647, %v745
    %vm756 = vcmp.eq.f32.partialorder %v755, 8.507059e+37
    %v757 = vand.u32 %v745, 2147483648
    %v758 = vor.u32 1.1754944e-38, %v757
    %v759 = vsel %vm756, %v758, %v754
    %v760 = vmul.f32 1.0, %v759
    %v761 = vmul.f32 %v760, 2.0
    %v762 = vsub.f32 %v761, 1.0
    %v763 = vmul.f32 %v760, %v547
    %765 = vrot.lane.b32.xlu0 %v762, 64
    %v766 = vpop.permute.xlu0 %765
    %v768 = vmul.f32 %v760, %v766
    %770 = vrot.lane.b32.xlu0 %v768, 32
    %v771 = vpop.permute.xlu0 %770
    %v773 = vadd.f32 %v763, %v771
    %v774 = vtanh.pop %v773
    %776 = vrot.lane.b32.xlu0 %v774, 64
    %v777 = vpop.permute.xlu0 %776
    %v779 = vmul.f32 %v760, %v777
    %v780 = vpack.c.bf16 %v779, %v779
    %782 = vrot.lane.b32.xlu0 %v780, 32
    %v783 = vpop.permute.xlu0 %782
    %v788 = vunpack.c.l.b16 %v91
    %v789 = vunpack.c.l.b16 %v92
    %v790 = vunpack.c.l.b16 %v93
    %v791 = vunpack.c.l.b16 %v94
    %v792 = vpack.c.b16 %v789, %v788
    %v793 = vpack.c.b16 %v791, %v790
    %v797 = vsel %vm180, %v783, 0
    %799 = vmatpush.bf16.msra.mxu0 0
    %800 = vmatpush.bf16.msra.mxu0 0
    %801 = vmatpush.bf16.msra.mxu0 0
    %802 = vmatpush.bf16.msra.mxu0 0
    %803 = vmatpush.bf16.msra.mxu0 0
    %804 = vmatpush.bf16.msra.mxu0 0
    %805 = vmatpush.bf16.msra.mxu0 %v793
    %806 = vmatpush.bf16.msra.mxu0 %v792
    %807 = vmatmul.bf16.gmra.mxu0 %v797
    %v808 = vpop.f32.mrf.mxu0
    %v809 = vadd.f32 %v124, %v808
    %v810 = vpop.f32.mrf.mxu0
    %811 = vdwg.mxu0
    %v812 = vmul.f32 %v809, 1.442695
    %v813 = vpow.pop %v812
    %v814 = vsel %vm367, %v813, 0.0
    %815 = vadd.xlane.f32.xlu0 %v814
    %v816 = vpop.xlane.xlu0 %815
    %v817 = vrcp.pop %v816
    %v818 = vmul.f32 %v816, %v817
    %v819 = vsub.f32 2.0, %v818
    %v820 = vmul.f32 %v817, %v819
    %v821 = vmul.f32 %v813, %v820
    %822 = vst.msk [vmem:[%s12 + $0x2] sm:$0x1] %vm367, %v821
    %vm823 = vcmp.le.f32.partialorder %v821, %v140
    %v824 = vsel %vm823, 1, 0
    %v825 = vcvt.s32.f32 %v824
    %827 = vrot.lane.b32.xlu0 %v821, 1
    %v828 = vpop.permute.xlu0 %827
    %v830 = vsub.f32 %v821, %v828
    %832 = vrot.lane.b32.xlu0 %v830, 127
    %v833 = vpop.permute.xlu0 %832
    %v835 = vmul.f32 %v825, %v833
    %v836 = vadd.f32 %v821, %v835
    %837 = vrot.lane.b32.xlu0 %v821, 127
    %v838 = vpop.permute.xlu0 %837
    %v840 = vadd.f32 %v821, %v838
    %vm841 = vcmp.le.f32.partialorder %v840, %v140
    %v842 = vsel %vm841, 1, 0
    %v843 = vcvt.s32.f32 %v842
    %v844 = vadd.f32 %v825, %v843
    %845 = vrot.lane.b32.xlu0 %v830, 126
    %v846 = vpop.permute.xlu0 %845
    %v848 = vmul.f32 %v843, %v846
    %v849 = vadd.f32 %v836, %v848
    %850 = vrot.lane.b32.xlu0 %v821, 126
    %v851 = vpop.permute.xlu0 %850
    %v853 = vadd.f32 %v840, %v851
    %vm854 = vcmp.le.f32.partialorder %v853, %v140
    %v855 = vsel %vm854, 1, 0
    %v856 = vcvt.s32.f32 %v855
    %v857 = vadd.f32 %v844, %v856
    %858 = vrot.lane.b32.xlu0 %v830, 125
    %v859 = vpop.permute.xlu0 %858
    %v861 = vmul.f32 %v856, %v859
    %v862 = vadd.f32 %v849, %v861
    %vm863 = vcmp.ne.f32.partialorder %v156, -1.0
    %v864 = vsel %vm863, %v156, %v857
    %v865 = vcvt.f32.s32.to.zero.pseudo %v864
    %866 = vrot.lane.b32.xlu0 %v865, 2
    %v867 = vpop.permute.xlu0 %866
    %vm868 = vcmask 16400
    %869 = vst.msk [vmem:[#allocation7] sm:$0x1] %vm868, %v867
    %871 = vrot.lane.b32.xlu0 %v862, 2
    %v872 = vpop.permute.xlu0 %871
    %874 = vst.msk [vmem:[#allocation8] sm:$0x1] %vm868, %v872
    %876 = vset.pattern.permute.xlu0 0
    %877 = vperm.xlu0 %876, %v864
    %v878 = vpop.permute.xlu0 %877
    %v880 = vmul.f32 %v878, %v66
    %881 = vmatpush.bf16.msra.mxu0 0
    %882 = vmatpush.bf16.msra.mxu0 0
    %883 = vmatpush.bf16.msra.mxu0 0
    %884 = vmatpush.bf16.msra.mxu0 0
    %885 = vmatpush.bf16.msra.mxu0 0
    %886 = vmatpush.bf16.msra.mxu0 0
    %887 = vmatpush.bf16.msra.mxu0 %v177
    %888 = vmatpush.bf16.msra.mxu0 %v176
    %889 = vmatmul.bf16.gmra.mxu0 %v726
    %v890 = vpop.f32.mrf.mxu0
    %v891 = vadd.f32 0.0, %v890
    %v892 = vpop.f32.mrf.mxu0
    %893 = vdwg.mxu0
    %v894 = vadd.f32 %v880, %v891
    %v895 = vadd.f32 %v894, %v79
    %v896 = vxor.u32 %v895, 2147483648
    %v897 = vmul.f32 %v896, 1.442695
    %v898 = vpow.pop %v897
    %v899 = vadd.f32 %v898, 1.0
    %v900 = vrcp.pop %v899
    %v901 = vmul.f32 %v899, %v900
    %v902 = vsub.f32 1.0, %v901
    %v903 = vmul.f32 %v900, %v902
    %v904 = vadd.f32 %v900, %v903
    %vm905 = vweird.f32 %v899
    %vm906 = vweird.f32 %v900
    %vm907 = vmor %vm905, %vm906
    %v908 = vsel %vm907, %v900, %v904
    %v909 = vand.u32 2147483647, %v899
    %vm910 = vcmp.eq.f32.partialorder %v909, 8.507059e+37
    %v911 = vand.u32 %v899, 2147483648
    %v912 = vor.u32 1.1754944e-38, %v911
    %v913 = vsel %vm910, %v912, %v908
    %v914 = vmul.f32 1.0, %v913
    %v915 = vmul.f32 %v914, 2.0
    %v916 = vsub.f32 %v915, 1.0
    %v917 = vmul.f32 %v914, %v701
    %919 = vrot.lane.b32.xlu0 %v916, 64
    %v920 = vpop.permute.xlu0 %919
    %v922 = vmul.f32 %v914, %v920
    %924 = vrot.lane.b32.xlu0 %v922, 32
    %v925 = vpop.permute.xlu0 %924
    %v927 = vadd.f32 %v917, %v925
    %v928 = vtanh.pop %v927
    %930 = vrot.lane.b32.xlu0 %v928, 64
    %v931 = vpop.permute.xlu0 %930
    %v933 = vmul.f32 %v914, %v931
    %v934 = vpack.c.bf16 %v933, %v933
    %935 = vmatpush.bf16.msra.mxu0 0
    %936 = vmatpush.bf16.msra.mxu0 0
    %937 = vmatpush.bf16.msra.mxu0 0
    %938 = vmatpush.bf16.msra.mxu0 0
    %939 = vmatpush.bf16.msra.mxu0 0
    %940 = vmatpush.bf16.msra.mxu0 0
    %941 = vmatpush.bf16.msra.mxu0 %v247
    %942 = vmatpush.bf16.msra.mxu0 %v246
    %943 = vmatmul.bf16.gmra.mxu0 %v797
    %v944 = vpop.f32.mrf.mxu0
    %v945 = vadd.f32 0.0, %v944
    %v946 = vpop.f32.mrf.mxu0
    %947 = vdwg.mxu0
    %949 = vrot.lane.b32.xlu0 %v934, 32
    %v950 = vpop.permute.xlu0 %949
    %v952 = vsel %vm180, %v950, 0
    %954 = vmatpush.bf16.msra.mxu0 0
    %955 = vmatpush.bf16.msra.mxu0 0
    %956 = vmatpush.bf16.msra.mxu0 0
    %957 = vmatpush.bf16.msra.mxu0 0
    %958 = vmatpush.bf16.msra.mxu0 0
    %959 = vmatpush.bf16.msra.mxu0 0
    %960 = vmatpush.bf16.msra.mxu0 %v275
    %961 = vmatpush.bf16.msra.mxu0 %v274
    %962 = vmatmul.bf16.gmra.mxu0 %v952
    %v963 = vpop.f32.mrf.mxu0
    %v964 = vadd.f32 %v945, %v963
    %v965 = vpop.f32.mrf.mxu0
    %966 = vdwg.mxu0
    %v967 = vadd.f32 %v964, %v80
    %v968 = vxor.u32 %v967, 2147483648
    %v969 = vmul.f32 %v968, 1.442695
    %v970 = vpow.pop %v969
    %v971 = vadd.f32 %v970, 1.0
    %v972 = vrcp.pop %v971
    %v973 = vmul.f32 %v971, %v972
    %v974 = vsub.f32 1.0, %v973
    %v975 = vmul.f32 %v972, %v974
    %v976 = vadd.f32 %v972, %v975
    %vm977 = vweird.f32 %v971
    %vm978 = vweird.f32 %v972
    %vm979 = vmor %vm977, %vm978
    %v980 = vsel %vm979, %v972, %v976
    %v981 = vand.u32 2147483647, %v971
    %vm982 = vcmp.eq.f32.partialorder %v981, 8.507059e+37
    %v983 = vand.u32 %v971, 2147483648
    %v984 = vor.u32 1.1754944e-38, %v983
    %v985 = vsel %vm982, %v984, %v980
    %v986 = vmul.f32 1.0, %v985
    %v987 = vmul.f32 %v986, 2.0
    %v988 = vsub.f32 %v987, 1.0
    %v989 = vmul.f32 %v986, %v773
    %991 = vrot.lane.b32.xlu0 %v988, 64
    %v992 = vpop.permute.xlu0 %991
    %v994 = vmul.f32 %v986, %v992
    %996 = vrot.lane.b32.xlu0 %v994, 32
    %v997 = vpop.permute.xlu0 %996
    %v999 = vadd.f32 %v989, %v997
    %v1000 = vtanh.pop %v999
    %1002 = vrot.lane.b32.xlu0 %v1000, 64
    %v1003 = vpop.permute.xlu0 %1002
    %v1005 = vmul.f32 %v986, %v1003
    %v1006 = vpack.c.bf16 %v1005, %v1005
    %1008 = vrot.lane.b32.xlu0 %v1006, 32
    %v1009 = vpop.permute.xlu0 %1008
    %v1014 = vunpack.c.l.b16 %v96
    %v1015 = vunpack.c.l.b16 %v97
    %v1016 = vunpack.c.l.b16 %v98
    %v1017 = vunpack.c.l.b16 %v99
    %v1018 = vpack.c.b16 %v1015, %v1014
    %v1019 = vpack.c.b16 %v1017, %v1016
    %v1023 = vsel %vm180, %v1009, 0
    %1025 = vmatpush.bf16.msra.mxu0 0
    %1026 = vmatpush.bf16.msra.mxu0 0
    %1027 = vmatpush.bf16.msra.mxu0 0
    %1028 = vmatpush.bf16.msra.mxu0 0
    %1029 = vmatpush.bf16.msra.mxu0 0
    %1030 = vmatpush.bf16.msra.mxu0 0
    %1031 = vmatpush.bf16.msra.mxu0 %v1019
    %1032 = vmatpush.bf16.msra.mxu0 %v1018
    %1033 = vmatmul.bf16.gmra.mxu0 %v1023
    %v1034 = vpop.f32.mrf.mxu0
    %v1035 = vadd.f32 %v126, %v1034
    %v1036 = vpop.f32.mrf.mxu0
    %1037 = vdwg.mxu0
    %v1038 = vmul.f32 %v1035, 1.442695
    %v1039 = vpow.pop %v1038
    %v1040 = vsel %vm367, %v1039, 0.0
    %1041 = vadd.xlane.f32.xlu0 %v1040
    %v1042 = vpop.xlane.xlu0 %1041
    %v1043 = vrcp.pop %v1042
    %v1044 = vmul.f32 %v1042, %v1043
    %v1045 = vsub.f32 2.0, %v1044
    %v1046 = vmul.f32 %v1043, %v1045
    %v1047 = vmul.f32 %v1039, %v1046
    %1048 = vst.msk [vmem:[%s12 + $0x3] sm:$0x1] %vm367, %v1047
    %vm1049 = vcmp.le.f32.partialorder %v1047, %v142
    %v1050 = vsel %vm1049, 1, 0
    %v1051 = vcvt.s32.f32 %v1050
    %1053 = vrot.lane.b32.xlu0 %v1047, 1
    %v1054 = vpop.permute.xlu0 %1053
    %v1056 = vsub.f32 %v1047, %v1054
    %1058 = vrot.lane.b32.xlu0 %v1056, 127
    %v1059 = vpop.permute.xlu0 %1058
    %v1061 = vmul.f32 %v1051, %v1059
    %v1062 = vadd.f32 %v1047, %v1061
    %1063 = vrot.lane.b32.xlu0 %v1047, 127
    %v1064 = vpop.permute.xlu0 %1063
    %v1066 = vadd.f32 %v1047, %v1064
    %vm1067 = vcmp.le.f32.partialorder %v1066, %v142
    %v1068 = vsel %vm1067, 1, 0
    %v1069 = vcvt.s32.f32 %v1068
    %v1070 = vadd.f32 %v1051, %v1069
    %1071 = vrot.lane.b32.xlu0 %v1056, 126
    %v1072 = vpop.permute.xlu0 %1071
    %v1074 = vmul.f32 %v1069, %v1072
    %v1075 = vadd.f32 %v1062, %v1074
    %1076 = vrot.lane.b32.xlu0 %v1047, 126
    %v1077 = vpop.permute.xlu0 %1076
    %v1079 = vadd.f32 %v1066, %v1077
    %vm1080 = vcmp.le.f32.partialorder %v1079, %v142
    %v1081 = vsel %vm1080, 1, 0
    %v1082 = vcvt.s32.f32 %v1081
    %v1083 = vadd.f32 %v1070, %v1082
    %1084 = vrot.lane.b32.xlu0 %v1056, 125
    %v1085 = vpop.permute.xlu0 %1084
    %v1087 = vmul.f32 %v1082, %v1085
    %v1088 = vadd.f32 %v1075, %v1087
    %vm1089 = vcmp.ne.f32.partialorder %v158, -1.0
    %v1090 = vsel %vm1089, %v158, %v1083
    %v1091 = vcvt.f32.s32.to.zero.pseudo %v1090
    %1092 = vrot.lane.b32.xlu0 %v1091, 3
    %v1093 = vpop.permute.xlu0 %1092
    %vm1094 = vcmask 24600
    %1095 = vst.msk [vmem:[#allocation7] sm:$0x1] %vm1094, %v1093
    %1097 = vrot.lane.b32.xlu0 %v1088, 3
    %v1098 = vpop.permute.xlu0 %1097
    %1100 = vst.msk [vmem:[#allocation8] sm:$0x1] %vm1094, %v1098
    %1102 = vset.pattern.permute.xlu0 0
    %1103 = vperm.xlu0 %1102, %v1090
    %v1104 = vpop.permute.xlu0 %1103
    %v1106 = vmul.f32 %v1104, %v66
    %1107 = vmatpush.bf16.msra.mxu0 0
    %1108 = vmatpush.bf16.msra.mxu0 0
    %1109 = vmatpush.bf16.msra.mxu0 0
    %1110 = vmatpush.bf16.msra.mxu0 0
    %1111 = vmatpush.bf16.msra.mxu0 0
    %1112 = vmatpush.bf16.msra.mxu0 0
    %1113 = vmatpush.bf16.msra.mxu0 %v177
    %1114 = vmatpush.bf16.msra.mxu0 %v176
    %1115 = vmatmul.bf16.gmra.mxu0 %v952
    %v1116 = vpop.f32.mrf.mxu0
    %v1117 = vadd.f32 0.0, %v1116
    %v1118 = vpop.f32.mrf.mxu0
    %1119 = vdwg.mxu0
    %v1120 = vadd.f32 %v1106, %v1117
    %v1121 = vadd.f32 %v1120, %v79
    %v1122 = vxor.u32 %v1121, 2147483648
    %v1123 = vmul.f32 %v1122, 1.442695
    %v1124 = vpow.pop %v1123
    %v1125 = vadd.f32 %v1124, 1.0
    %v1126 = vrcp.pop %v1125
    %v1127 = vmul.f32 %v1125, %v1126
    %v1128 = vsub.f32 1.0, %v1127
    %v1129 = vmul.f32 %v1126, %v1128
    %v1130 = vadd.f32 %v1126, %v1129
    %vm1131 = vweird.f32 %v1125
    %vm1132 = vweird.f32 %v1126
    %vm1133 = vmor %vm1131, %vm1132
    %v1134 = vsel %vm1133, %v1126, %v1130
    %v1135 = vand.u32 2147483647, %v1125
    %vm1136 = vcmp.eq.f32.partialorder %v1135, 8.507059e+37
    %v1137 = vand.u32 %v1125, 2147483648
    %v1138 = vor.u32 1.1754944e-38, %v1137
    %v1139 = vsel %vm1136, %v1138, %v1134
    %v1140 = vmul.f32 1.0, %v1139
    %v1141 = vmul.f32 %v1140, 2.0
    %v1142 = vsub.f32 %v1141, 1.0
    %v1143 = vmul.f32 %v1140, %v927
    %1145 = vrot.lane.b32.xlu0 %v1142, 64
    %v1146 = vpop.permute.xlu0 %1145
    %v1148 = vmul.f32 %v1140, %v1146
    %1150 = vrot.lane.b32.xlu0 %v1148, 32
    %v1151 = vpop.permute.xlu0 %1150
    %v1153 = vadd.f32 %v1143, %v1151
    %v1154 = vtanh.pop %v1153
    %1156 = vrot.lane.b32.xlu0 %v1154, 64
    %v1157 = vpop.permute.xlu0 %1156
    %v1159 = vmul.f32 %v1140, %v1157
    %v1160 = vpack.c.bf16 %v1159, %v1159
    %1161 = vmatpush.bf16.msra.mxu0 0
    %1162 = vmatpush.bf16.msra.mxu0 0
    %1163 = vmatpush.bf16.msra.mxu0 0
    %1164 = vmatpush.bf16.msra.mxu0 0
    %1165 = vmatpush.bf16.msra.mxu0 0
    %1166 = vmatpush.bf16.msra.mxu0 0
    %1167 = vmatpush.bf16.msra.mxu0 %v247
    %1168 = vmatpush.bf16.msra.mxu0 %v246
    %1169 = vmatmul.bf16.gmra.mxu0 %v1023
    %v1170 = vpop.f32.mrf.mxu0
    %v1171 = vadd.f32 0.0, %v1170
    %v1172 = vpop.f32.mrf.mxu0
    %1173 = vdwg.mxu0
    %1175 = vrot.lane.b32.xlu0 %v1160, 32
    %v1176 = vpop.permute.xlu0 %1175
    %v1178 = vsel %vm180, %v1176, 0
    %1180 = vmatpush.bf16.msra.mxu0 0
    %1181 = vmatpush.bf16.msra.mxu0 0
    %1182 = vmatpush.bf16.msra.mxu0 0
    %1183 = vmatpush.bf16.msra.mxu0 0
    %1184 = vmatpush.bf16.msra.mxu0 0
    %1185 = vmatpush.bf16.msra.mxu0 0
    %1186 = vmatpush.bf16.msra.mxu0 %v275
    %1187 = vmatpush.bf16.msra.mxu0 %v274
    %1188 = vmatmul.bf16.gmra.mxu0 %v1178
    %v1189 = vpop.f32.mrf.mxu0
    %v1190 = vadd.f32 %v1171, %v1189
    %v1191 = vpop.f32.mrf.mxu0
    %1192 = vdwg.mxu0
    %v1193 = vadd.f32 %v1190, %v80
    %v1194 = vxor.u32 %v1193, 2147483648
    %v1195 = vmul.f32 %v1194, 1.442695
    %v1196 = vpow.pop %v1195
    %v1197 = vadd.f32 %v1196, 1.0
    %v1198 = vrcp.pop %v1197
    %v1199 = vmul.f32 %v1197, %v1198
    %v1200 = vsub.f32 1.0, %v1199
    %v1201 = vmul.f32 %v1198, %v1200
    %v1202 = vadd.f32 %v1198, %v1201
    %vm1203 = vweird.f32 %v1197
    %vm1204 = vweird.f32 %v1198
    %vm1205 = vmor %vm1203, %vm1204
    %v1206 = vsel %vm1205, %v1198, %v1202
    %v1207 = vand.u32 2147483647, %v1197
    %vm1208 = vcmp.eq.f32.partialorder %v1207, 8.507059e+37
    %v1209 = vand.u32 %v1197, 2147483648
    %v1210 = vor.u32 1.1754944e-38, %v1209
    %v1211 = vsel %vm1208, %v1210, %v1206
    %v1212 = vmul.f32 1.0, %v1211
    %v1213 = vmul.f32 %v1212, 2.0
    %v1214 = vsub.f32 %v1213, 1.0
    %v1215 = vmul.f32 %v1212, %v999
    %1217 = vrot.lane.b32.xlu0 %v1214, 64
    %v1218 = vpop.permute.xlu0 %1217
    %v1220 = vmul.f32 %v1212, %v1218
    %1222 = vrot.lane.b32.xlu0 %v1220, 32
    %v1223 = vpop.permute.xlu0 %1222
    %v1225 = vadd.f32 %v1215, %v1223
    %v1226 = vtanh.pop %v1225
    %1228 = vrot.lane.b32.xlu0 %v1226, 64
    %v1229 = vpop.permute.xlu0 %1228
    %v1231 = vmul.f32 %v1212, %v1229
    %v1232 = vpack.c.bf16 %v1231, %v1231
    %1234 = vrot.lane.b32.xlu0 %v1232, 32
    %v1235 = vpop.permute.xlu0 %1234
    %v1240 = vunpack.c.l.b16 %v101
    %v1241 = vunpack.c.l.b16 %v102
    %v1242 = vunpack.c.l.b16 %v103
    %v1243 = vunpack.c.l.b16 %v104
    %v1244 = vpack.c.b16 %v1241, %v1240
    %v1245 = vpack.c.b16 %v1243, %v1242
    %v1249 = vsel %vm180, %v1235, 0
    %1251 = vmatpush.bf16.msra.mxu0 0
    %1252 = vmatpush.bf16.msra.mxu0 0
    %1253 = vmatpush.bf16.msra.mxu0 0
    %1254 = vmatpush.bf16.msra.mxu0 0
    %1255 = vmatpush.bf16.msra.mxu0 0
    %1256 = vmatpush.bf16.msra.mxu0 0
    %1257 = vmatpush.bf16.msra.mxu0 %v1245
    %1258 = vmatpush.bf16.msra.mxu0 %v1244
    %1259 = vmatmul.bf16.gmra.mxu0 %v1249
    %v1260 = vpop.f32.mrf.mxu0
    %v1261 = vadd.f32 %v128, %v1260
    %v1262 = vpop.f32.mrf.mxu0
    %1263 = vdwg.mxu0
    %v1264 = vmul.f32 %v1261, 1.442695
    %v1265 = vpow.pop %v1264
    %v1266 = vsel %vm367, %v1265, 0.0
    %1267 = vadd.xlane.f32.xlu0 %v1266
    %v1268 = vpop.xlane.xlu0 %1267
    %v1269 = vrcp.pop %v1268
    %v1270 = vmul.f32 %v1268, %v1269
    %v1271 = vsub.f32 2.0, %v1270
    %v1272 = vmul.f32 %v1269, %v1271
    %v1273 = vmul.f32 %v1265, %v1272
    %1274 = vst.msk [vmem:[%s12 + $0x4] sm:$0x1] %vm367, %v1273
    %vm1275 = vcmp.le.f32.partialorder %v1273, %v144
    %v1276 = vsel %vm1275, 1, 0
    %v1277 = vcvt.s32.f32 %v1276
    %1279 = vrot.lane.b32.xlu0 %v1273, 1
    %v1280 = vpop.permute.xlu0 %1279
    %v1282 = vsub.f32 %v1273, %v1280
    %1284 = vrot.lane.b32.xlu0 %v1282, 127
    %v1285 = vpop.permute.xlu0 %1284
    %v1287 = vmul.f32 %v1277, %v1285
    %v1288 = vadd.f32 %v1273, %v1287
    %1289 = vrot.lane.b32.xlu0 %v1273, 127
    %v1290 = vpop.permute.xlu0 %1289
    %v1292 = vadd.f32 %v1273, %v1290
    %vm1293 = vcmp.le.f32.partialorder %v1292, %v144
    %v1294 = vsel %vm1293, 1, 0
    %v1295 = vcvt.s32.f32 %v1294
    %v1296 = vadd.f32 %v1277, %v1295
    %1297 = vrot.lane.b32.xlu0 %v1282, 126
    %v1298 = vpop.permute.xlu0 %1297
    %v1300 = vmul.f32 %v1295, %v1298
    %v1301 = vadd.f32 %v1288, %v1300
    %1302 = vrot.lane.b32.xlu0 %v1273, 126
    %v1303 = vpop.permute.xlu0 %1302
    %v1305 = vadd.f32 %v1292, %v1303
    %vm1306 = vcmp.le.f32.partialorder %v1305, %v144
    %v1307 = vsel %vm1306, 1, 0
    %v1308 = vcvt.s32.f32 %v1307
    %v1309 = vadd.f32 %v1296, %v1308
    %1310 = vrot.lane.b32.xlu0 %v1282, 125
    %v1311 = vpop.permute.xlu0 %1310
    %v1313 = vmul.f32 %v1308, %v1311
    %v1314 = vadd.f32 %v1301, %v1313
    %vm1315 = vcmp.ne.f32.partialorder %v160, -1.0
    %v1316 = vsel %vm1315, %v160, %v1309
    %v1317 = vcvt.f32.s32.to.zero.pseudo %v1316
    %1318 = vrot.lane.b32.xlu0 %v1317, 4
    %v1319 = vpop.permute.xlu0 %1318
    %vm1320 = vcmask 32800
    %1321 = vst.msk [vmem:[#allocation7] sm:$0x1] %vm1320, %v1319
    %1323 = vrot.lane.b32.xlu0 %v1314, 4
    %v1324 = vpop.permute.xlu0 %1323
    %1326 = vst.msk [vmem:[#allocation8] sm:$0x1] %vm1320, %v1324
    %1328 = vset.pattern.permute.xlu0 0
    %1329 = vperm.xlu0 %1328, %v1316
    %v1330 = vpop.permute.xlu0 %1329
    %v1332 = vmul.f32 %v1330, %v66
    %1333 = vmatpush.bf16.msra.mxu0 0
    %1334 = vmatpush.bf16.msra.mxu0 0
    %1335 = vmatpush.bf16.msra.mxu0 0
    %1336 = vmatpush.bf16.msra.mxu0 0
    %1337 = vmatpush.bf16.msra.mxu0 0
    %1338 = vmatpush.bf16.msra.mxu0 0
    %1339 = vmatpush.bf16.msra.mxu0 %v177
    %1340 = vmatpush.bf16.msra.mxu0 %v176
    %1341 = vmatmul.bf16.gmra.mxu0 %v1178
    %v1342 = vpop.f32.mrf.mxu0
    %v1343 = vadd.f32 0.0, %v1342
    %v1344 = vpop.f32.mrf.mxu0
    %1345 = vdwg.mxu0
    %v1346 = vadd.f32 %v1332, %v1343
    %v1347 = vadd.f32 %v1346, %v79
    %v1348 = vxor.u32 %v1347, 2147483648
    %v1349 = vmul.f32 %v1348, 1.442695
    %v1350 = vpow.pop %v1349
    %v1351 = vadd.f32 %v1350, 1.0
    %v1352 = vrcp.pop %v1351
    %v1353 = vmul.f32 %v1351, %v1352
    %v1354 = vsub.f32 1.0, %v1353
    %v1355 = vmul.f32 %v1352, %v1354
    %v1356 = vadd.f32 %v1352, %v1355
    %vm1357 = vweird.f32 %v1351
    %vm1358 = vweird.f32 %v1352
    %vm1359 = vmor %vm1357, %vm1358
    %v1360 = vsel %vm1359, %v1352, %v1356
    %v1361 = vand.u32 2147483647, %v1351
    %vm1362 = vcmp.eq.f32.partialorder %v1361, 8.507059e+37
    %v1363 = vand.u32 %v1351, 2147483648
    %v1364 = vor.u32 1.1754944e-38, %v1363
    %v1365 = vsel %vm1362, %v1364, %v1360
    %v1366 = vmul.f32 1.0, %v1365
    %v1367 = vmul.f32 %v1366, 2.0
    %v1368 = vsub.f32 %v1367, 1.0
    %v1369 = vmul.f32 %v1366, %v1153
    %1371 = vrot.lane.b32.xlu0 %v1368, 64
    %v1372 = vpop.permute.xlu0 %1371
    %v1374 = vmul.f32 %v1366, %v1372
    %1376 = vrot.lane.b32.xlu0 %v1374, 32
    %v1377 = vpop.permute.xlu0 %1376
    %v1379 = vadd.f32 %v1369, %v1377
    %v1380 = vtanh.pop %v1379
    %1382 = vrot.lane.b32.xlu0 %v1380, 64
    %v1383 = vpop.permute.xlu0 %1382
    %v1385 = vmul.f32 %v1366, %v1383
    %v1386 = vpack.c.bf16 %v1385, %v1385
    %1387 = vmatpush.bf16.msra.mxu0 0
    %1388 = vmatpush.bf16.msra.mxu0 0
    %1389 = vmatpush.bf16.msra.mxu0 0
    %1390 = vmatpush.bf16.msra.mxu0 0
    %1391 = vmatpush.bf16.msra.mxu0 0
    %1392 = vmatpush.bf16.msra.mxu0 0
    %1393 = vmatpush.bf16.msra.mxu0 %v247
    %1394 = vmatpush.bf16.msra.mxu0 %v246
    %1395 = vmatmul.bf16.gmra.mxu0 %v1249
    %v1396 = vpop.f32.mrf.mxu0
    %v1397 = vadd.f32 0.0, %v1396
    %v1398 = vpop.f32.mrf.mxu0
    %1399 = vdwg.mxu0
    %1401 = vrot.lane.b32.xlu0 %v1386, 32
    %v1402 = vpop.permute.xlu0 %1401
    %v1404 = vsel %vm180, %v1402, 0
    %1406 = vmatpush.bf16.msra.mxu0 0
    %1407 = vmatpush.bf16.msra.mxu0 0
    %1408 = vmatpush.bf16.msra.mxu0 0
    %1409 = vmatpush.bf16.msra.mxu0 0
    %1410 = vmatpush.bf16.msra.mxu0 0
    %1411 = vmatpush.bf16.msra.mxu0 0
    %1412 = vmatpush.bf16.msra.mxu0 %v275
    %1413 = vmatpush.bf16.msra.mxu0 %v274
    %1414 = vmatmul.bf16.gmra.mxu0 %v1404
    %v1415 = vpop.f32.mrf.mxu0
    %v1416 = vadd.f32 %v1397, %v1415
    %v1417 = vpop.f32.mrf.mxu0
    %1418 = vdwg.mxu0
    %v1419 = vadd.f32 %v1416, %v80
    %v1420 = vxor.u32 %v1419, 2147483648
    %v1421 = vmul.f32 %v1420, 1.442695
    %v1422 = vpow.pop %v1421
    %v1423 = vadd.f32 %v1422, 1.0
    %v1424 = vrcp.pop %v1423
    %v1425 = vmul.f32 %v1423, %v1424
    %v1426 = vsub.f32 1.0, %v1425
    %v1427 = vmul.f32 %v1424, %v1426
    %v1428 = vadd.f32 %v1424, %v1427
    %vm1429 = vweird.f32 %v1423
    %vm1430 = vweird.f32 %v1424
    %vm1431 = vmor %vm1429, %vm1430
    %v1432 = vsel %vm1431, %v1424, %v1428
    %v1433 = vand.u32 2147483647, %v1423
    %vm1434 = vcmp.eq.f32.partialorder %v1433, 8.507059e+37
    %v1435 = vand.u32 %v1423, 2147483648
    %v1436 = vor.u32 1.1754944e-38, %v1435
    %v1437 = vsel %vm1434, %v1436, %v1432
    %v1438 = vmul.f32 1.0, %v1437
    %v1439 = vmul.f32 %v1438, 2.0
    %v1440 = vsub.f32 %v1439, 1.0
    %v1441 = vmul.f32 %v1438, %v1225
    %1443 = vrot.lane.b32.xlu0 %v1440, 64
    %v1444 = vpop.permute.xlu0 %1443
    %v1446 = vmul.f32 %v1438, %v1444
    %1448 = vrot.lane.b32.xlu0 %v1446, 32
    %v1449 = vpop.permute.xlu0 %1448
    %v1451 = vadd.f32 %v1441, %v1449
    %v1452 = vtanh.pop %v1451
    %1454 = vrot.lane.b32.xlu0 %v1452, 64
    %v1455 = vpop.permute.xlu0 %1454
    %v1457 = vmul.f32 %v1438, %v1455
    %v1458 = vpack.c.bf16 %v1457, %v1457
    %1460 = vrot.lane.b32.xlu0 %v1458, 32
    %v1461 = vpop.permute.xlu0 %1460
    %v1466 = vunpack.c.l.b16 %v106
    %v1467 = vunpack.c.l.b16 %v107
    %v1468 = vunpack.c.l.b16 %v108
    %v1469 = vunpack.c.l.b16 %v109
    %v1470 = vpack.c.b16 %v1467, %v1466
    %v1471 = vpack.c.b16 %v1469, %v1468
    %v1475 = vsel %vm180, %v1461, 0
    %1477 = vmatpush.bf16.msra.mxu0 0
    %1478 = vmatpush.bf16.msra.mxu0 0
    %1479 = vmatpush.bf16.msra.mxu0 0
    %1480 = vmatpush.bf16.msra.mxu0 0
    %1481 = vmatpush.bf16.msra.mxu0 0
    %1482 = vmatpush.bf16.msra.mxu0 0
    %1483 = vmatpush.bf16.msra.mxu0 %v1471
    %1484 = vmatpush.bf16.msra.mxu0 %v1470
    %1485 = vmatmul.bf16.gmra.mxu0 %v1475
    %v1486 = vpop.f32.mrf.mxu0
    %v1487 = vadd.f32 %v130, %v1486
    %v1488 = vpop.f32.mrf.mxu0
    %1489 = vdwg.mxu0
    %v1490 = vmul.f32 %v1487, 1.442695
    %v1491 = vpow.pop %v1490
    %v1492 = vsel %vm367, %v1491, 0.0
    %1493 = vadd.xlane.f32.xlu0 %v1492
    %v1494 = vpop.xlane.xlu0 %1493
    %v1495 = vrcp.pop %v1494
    %v1496 = vmul.f32 %v1494, %v1495
    %v1497 = vsub.f32 2.0, %v1496
    %v1498 = vmul.f32 %v1495, %v1497
    %v1499 = vmul.f32 %v1491, %v1498
    %1500 = vst.msk [vmem:[%s12 + $0x5] sm:$0x1] %vm367, %v1499
    %vm1501 = vcmp.le.f32.partialorder %v1499, %v146
    %v1502 = vsel %vm1501, 1, 0
    %v1503 = vcvt.s32.f32 %v1502
    %1505 = vrot.lane.b32.xlu0 %v1499, 1
    %v1506 = vpop.permute.xlu0 %1505
    %v1508 = vsub.f32 %v1499, %v1506
    %1510 = vrot.lane.b32.xlu0 %v1508, 127
    %v1511 = vpop.permute.xlu0 %1510
    %v1513 = vmul.f32 %v1503, %v1511
    %v1514 = vadd.f32 %v1499, %v1513
    %1515 = vrot.lane.b32.xlu0 %v1499, 127
    %v1516 = vpop.permute.xlu0 %1515
    %v1518 = vadd.f32 %v1499, %v1516
    %vm1519 = vcmp.le.f32.partialorder %v1518, %v146
    %v1520 = vsel %vm1519, 1, 0
    %v1521 = vcvt.s32.f32 %v1520
    %v1522 = vadd.f32 %v1503, %v1521
    %1523 = vrot.lane.b32.xlu0 %v1508, 126
    %v1524 = vpop.permute.xlu0 %1523
    %v1526 = vmul.f32 %v1521, %v1524
    %v1527 = vadd.f32 %v1514, %v1526
    %1528 = vrot.lane.b32.xlu0 %v1499, 126
    %v1529 = vpop.permute.xlu0 %1528
    %v1531 = vadd.f32 %v1518, %v1529
    %vm1532 = vcmp.le.f32.partialorder %v1531, %v146
    %v1533 = vsel %vm1532, 1, 0
    %v1534 = vcvt.s32.f32 %v1533
    %v1535 = vadd.f32 %v1522, %v1534
    %1536 = vrot.lane.b32.xlu0 %v1508, 125
    %v1537 = vpop.permute.xlu0 %1536
    %v1539 = vmul.f32 %v1534, %v1537
    %v1540 = vadd.f32 %v1527, %v1539
    %vm1541 = vcmp.ne.f32.partialorder %v162, -1.0
    %v1542 = vsel %vm1541, %v162, %v1535
    %v1543 = vcvt.f32.s32.to.zero.pseudo %v1542
    %1544 = vrot.lane.b32.xlu0 %v1543, 5
    %v1545 = vpop.permute.xlu0 %1544
    %vm1546 = vcmask 41000
    %1547 = vst.msk [vmem:[#allocation7] sm:$0x1] %vm1546, %v1545
    %1549 = vrot.lane.b32.xlu0 %v1540, 5
    %v1550 = vpop.permute.xlu0 %1549
    %1552 = vst.msk [vmem:[#allocation8] sm:$0x1] %vm1546, %v1550
    %1554 = vset.pattern.permute.xlu0 0
    %1555 = vperm.xlu0 %1554, %v1542
    %v1556 = vpop.permute.xlu0 %1555
    %v1558 = vmul.f32 %v1556, %v66
    %1559 = vmatpush.bf16.msra.mxu0 0
    %1560 = vmatpush.bf16.msra.mxu0 0
    %1561 = vmatpush.bf16.msra.mxu0 0
    %1562 = vmatpush.bf16.msra.mxu0 0
    %1563 = vmatpush.bf16.msra.mxu0 0
    %1564 = vmatpush.bf16.msra.mxu0 0
    %1565 = vmatpush.bf16.msra.mxu0 %v177
    %1566 = vmatpush.bf16.msra.mxu0 %v176
    %1567 = vmatmul.bf16.gmra.mxu0 %v1404
    %v1568 = vpop.f32.mrf.mxu0
    %v1569 = vadd.f32 0.0, %v1568
    %v1570 = vpop.f32.mrf.mxu0
    %1571 = vdwg.mxu0
    %v1572 = vadd.f32 %v1558, %v1569
    %v1573 = vadd.f32 %v1572, %v79
    %v1574 = vxor.u32 %v1573, 2147483648
    %v1575 = vmul.f32 %v1574, 1.442695
    %v1576 = vpow.pop %v1575
    %v1577 = vadd.f32 %v1576, 1.0
    %v1578 = vrcp.pop %v1577
    %v1579 = vmul.f32 %v1577, %v1578
    %v1580 = vsub.f32 1.0, %v1579
    %v1581 = vmul.f32 %v1578, %v1580
    %v1582 = vadd.f32 %v1578, %v1581
    %vm1583 = vweird.f32 %v1577
    %vm1584 = vweird.f32 %v1578
    %vm1585 = vmor %vm1583, %vm1584
    %v1586 = vsel %vm1585, %v1578, %v1582
    %v1587 = vand.u32 2147483647, %v1577
    %vm1588 = vcmp.eq.f32.partialorder %v1587, 8.507059e+37
    %v1589 = vand.u32 %v1577, 2147483648
    %v1590 = vor.u32 1.1754944e-38, %v1589
    %v1591 = vsel %vm1588, %v1590, %v1586
    %v1592 = vmul.f32 1.0, %v1591
    %v1593 = vmul.f32 %v1592, 2.0
    %v1594 = vsub.f32 %v1593, 1.0
    %v1595 = vmul.f32 %v1592, %v1379
    %1597 = vrot.lane.b32.xlu0 %v1594, 64
    %v1598 = vpop.permute.xlu0 %1597
    %v1600 = vmul.f32 %v1592, %v1598
    %1602 = vrot.lane.b32.xlu0 %v1600, 32
    %v1603 = vpop.permute.xlu0 %1602
    %v1605 = vadd.f32 %v1595, %v1603
    %v1606 = vtanh.pop %v1605
    %1608 = vrot.lane.b32.xlu0 %v1606, 64
    %v1609 = vpop.permute.xlu0 %1608
    %v1611 = vmul.f32 %v1592, %v1609
    %v1612 = vpack.c.bf16 %v1611, %v1611
    %1613 = vmatpush.bf16.msra.mxu0 0
    %1614 = vmatpush.bf16.msra.mxu0 0
    %1615 = vmatpush.bf16.msra.mxu0 0
    %1616 = vmatpush.bf16.msra.mxu0 0
    %1617 = vmatpush.bf16.msra.mxu0 0
    %1618 = vmatpush.bf16.msra.mxu0 0
    %1619 = vmatpush.bf16.msra.mxu0 %v247
    %1620 = vmatpush.bf16.msra.mxu0 %v246
    %1621 = vmatmul.bf16.gmra.mxu0 %v1475
    %v1622 = vpop.f32.mrf.mxu0
    %v1623 = vadd.f32 0.0, %v1622
    %v1624 = vpop.f32.mrf.mxu0
    %1625 = vdwg.mxu0
    %1627 = vrot.lane.b32.xlu0 %v1612, 32
    %v1628 = vpop.permute.xlu0 %1627
    %v1630 = vsel %vm180, %v1628, 0
    %1632 = vmatpush.bf16.msra.mxu0 0
    %1633 = vmatpush.bf16.msra.mxu0 0
    %1634 = vmatpush.bf16.msra.mxu0 0
    %1635 = vmatpush.bf16.msra.mxu0 0
    %1636 = vmatpush.bf16.msra.mxu0 0
    %1637 = vmatpush.bf16.msra.mxu0 0
    %1638 = vmatpush.bf16.msra.mxu0 %v275
    %1639 = vmatpush.bf16.msra.mxu0 %v274
    %1640 = vmatmul.bf16.gmra.mxu0 %v1630
    %v1641 = vpop.f32.mrf.mxu0
    %v1642 = vadd.f32 %v1623, %v1641
    %v1643 = vpop.f32.mrf.mxu0
    %1644 = vdwg.mxu0
    %v1645 = vadd.f32 %v1642, %v80
    %v1646 = vxor.u32 %v1645, 2147483648
    %v1647 = vmul.f32 %v1646, 1.442695
    %v1648 = vpow.pop %v1647
    %v1649 = vadd.f32 %v1648, 1.0
    %v1650 = vrcp.pop %v1649
    %v1651 = vmul.f32 %v1649, %v1650
    %v1652 = vsub.f32 1.0, %v1651
    %v1653 = vmul.f32 %v1650, %v1652
    %v1654 = vadd.f32 %v1650, %v1653
    %vm1655 = vweird.f32 %v1649
    %vm1656 = vweird.f32 %v1650
    %vm1657 = vmor %vm1655, %vm1656
    %v1658 = vsel %vm1657, %v1650, %v1654
    %v1659 = vand.u32 2147483647, %v1649
    %vm1660 = vcmp.eq.f32.partialorder %v1659, 8.507059e+37
    %v1661 = vand.u32 %v1649, 2147483648
    %v1662 = vor.u32 1.1754944e-38, %v1661
    %v1663 = vsel %vm1660, %v1662, %v1658
    %v1664 = vmul.f32 1.0, %v1663
    %v1665 = vmul.f32 %v1664, 2.0
    %v1666 = vsub.f32 %v1665, 1.0
    %v1667 = vmul.f32 %v1664, %v1451
    %1669 = vrot.lane.b32.xlu0 %v1666, 64
    %v1670 = vpop.permute.xlu0 %1669
    %v1672 = vmul.f32 %v1664, %v1670
    %1674 = vrot.lane.b32.xlu0 %v1672, 32
    %v1675 = vpop.permute.xlu0 %1674
    %v1677 = vadd.f32 %v1667, %v1675
    %v1678 = vtanh.pop %v1677
    %1680 = vrot.lane.b32.xlu0 %v1678, 64
    %v1681 = vpop.permute.xlu0 %1680
    %v1683 = vmul.f32 %v1664, %v1681
    %v1684 = vpack.c.bf16 %v1683, %v1683
    %1686 = vrot.lane.b32.xlu0 %v1684, 32
    %v1687 = vpop.permute.xlu0 %1686
    %v1692 = vunpack.c.l.b16 %v111
    %v1693 = vunpack.c.l.b16 %v112
    %v1694 = vunpack.c.l.b16 %v113
    %v1695 = vunpack.c.l.b16 %v114
    %v1696 = vpack.c.b16 %v1693, %v1692
    %v1697 = vpack.c.b16 %v1695, %v1694
    %v1701 = vsel %vm180, %v1687, 0
    %1703 = vmatpush.bf16.msra.mxu0 0
    %1704 = vmatpush.bf16.msra.mxu0 0
    %1705 = vmatpush.bf16.msra.mxu0 0
    %1706 = vmatpush.bf16.msra.mxu0 0
    %1707 = vmatpush.bf16.msra.mxu0 0
    %1708 = vmatpush.bf16.msra.mxu0 0
    %1709 = vmatpush.bf16.msra.mxu0 %v1697
    %1710 = vmatpush.bf16.msra.mxu0 %v1696
    %1711 = vmatmul.bf16.gmra.mxu0 %v1701
    %v1712 = vpop.f32.mrf.mxu0
    %v1713 = vadd.f32 %v132, %v1712
    %v1714 = vpop.f32.mrf.mxu0
    %1715 = vdwg.mxu0
    %v1716 = vmul.f32 %v1713, 1.442695
    %v1717 = vpow.pop %v1716
    %v1718 = vsel %vm367, %v1717, 0.0
    %1719 = vadd.xlane.f32.xlu0 %v1718
    %v1720 = vpop.xlane.xlu0 %1719
    %v1721 = vrcp.pop %v1720
    %v1722 = vmul.f32 %v1720, %v1721
    %v1723 = vsub.f32 2.0, %v1722
    %v1724 = vmul.f32 %v1721, %v1723
    %v1725 = vmul.f32 %v1717, %v1724
    %1726 = vst.msk [vmem:[%s12 + $0x6] sm:$0x1] %vm367, %v1725
    %vm1727 = vcmp.le.f32.partialorder %v1725, %v148
    %v1728 = vsel %vm1727, 1, 0
    %v1729 = vcvt.s32.f32 %v1728
    %1731 = vrot.lane.b32.xlu0 %v1725, 1
    %v1732 = vpop.permute.xlu0 %1731
    %v1734 = vsub.f32 %v1725, %v1732
    %1736 = vrot.lane.b32.xlu0 %v1734, 127
    %v1737 = vpop.permute.xlu0 %1736
    %v1739 = vmul.f32 %v1729, %v1737
    %v1740 = vadd.f32 %v1725, %v1739
    %1741 = vrot.lane.b32.xlu0 %v1725, 127
    %v1742 = vpop.permute.xlu0 %1741
    %v1744 = vadd.f32 %v1725, %v1742
    %vm1745 = vcmp.le.f32.partialorder %v1744, %v148
    %v1746 = vsel %vm1745, 1, 0
    %v1747 = vcvt.s32.f32 %v1746
    %v1748 = vadd.f32 %v1729, %v1747
    %1749 = vrot.lane.b32.xlu0 %v1734, 126
    %v1750 = vpop.permute.xlu0 %1749
    %v1752 = vmul.f32 %v1747, %v1750
    %v1753 = vadd.f32 %v1740, %v1752
    %1754 = vrot.lane.b32.xlu0 %v1725, 126
    %v1755 = vpop.permute.xlu0 %1754
    %v1757 = vadd.f32 %v1744, %v1755
    %vm1758 = vcmp.le.f32.partialorder %v1757, %v148
    %v1759 = vsel %vm1758, 1, 0
    %v1760 = vcvt.s32.f32 %v1759
    %v1761 = vadd.f32 %v1748, %v1760
    %1762 = vrot.lane.b32.xlu0 %v1734, 125
    %v1763 = vpop.permute.xlu0 %1762
    %v1765 = vmul.f32 %v1760, %v1763
    %v1766 = vadd.f32 %v1753, %v1765
    %vm1767 = vcmp.ne.f32.partialorder %v164, -1.0
    %v1768 = vsel %vm1767, %v164, %v1761
    %v1769 = vcvt.f32.s32.to.zero.pseudo %v1768
    %1770 = vrot.lane.b32.xlu0 %v1769, 6
    %v1771 = vpop.permute.xlu0 %1770
    %vm1772 = vcmask 49200
    %1773 = vst.msk [vmem:[#allocation7] sm:$0x1] %vm1772, %v1771
    %1775 = vrot.lane.b32.xlu0 %v1766, 6
    %v1776 = vpop.permute.xlu0 %1775
    %1778 = vst.msk [vmem:[#allocation8] sm:$0x1] %vm1772, %v1776
    %1780 = vset.pattern.permute.xlu0 0
    %1781 = vperm.xlu0 %1780, %v1768
    %v1782 = vpop.permute.xlu0 %1781
    %v1784 = vmul.f32 %v1782, %v66
    %1785 = vmatpush.bf16.msra.mxu0 0
    %1786 = vmatpush.bf16.msra.mxu0 0
    %1787 = vmatpush.bf16.msra.mxu0 0
    %1788 = vmatpush.bf16.msra.mxu0 0
    %1789 = vmatpush.bf16.msra.mxu0 0
    %1790 = vmatpush.bf16.msra.mxu0 0
    %1791 = vmatpush.bf16.msra.mxu0 %v177
    %1792 = vmatpush.bf16.msra.mxu0 %v176
    %1793 = vmatmul.bf16.gmra.mxu0 %v1630
    %v1794 = vpop.f32.mrf.mxu0
    %v1795 = vadd.f32 0.0, %v1794
    %v1796 = vpop.f32.mrf.mxu0
    %1797 = vdwg.mxu0
    %v1798 = vadd.f32 %v1784, %v1795
    %v1799 = vadd.f32 %v1798, %v79
    %v1800 = vxor.u32 %v1799, 2147483648
    %v1801 = vmul.f32 %v1800, 1.442695
    %v1802 = vpow.pop %v1801
    %v1803 = vadd.f32 %v1802, 1.0
    %v1804 = vrcp.pop %v1803
    %v1805 = vmul.f32 %v1803, %v1804
    %v1806 = vsub.f32 1.0, %v1805
    %v1807 = vmul.f32 %v1804, %v1806
    %v1808 = vadd.f32 %v1804, %v1807
    %vm1809 = vweird.f32 %v1803
    %vm1810 = vweird.f32 %v1804
    %vm1811 = vmor %vm1809, %vm1810
    %v1812 = vsel %vm1811, %v1804, %v1808
    %v1813 = vand.u32 2147483647, %v1803
    %vm1814 = vcmp.eq.f32.partialorder %v1813, 8.507059e+37
    %v1815 = vand.u32 %v1803, 2147483648
    %v1816 = vor.u32 1.1754944e-38, %v1815
    %v1817 = vsel %vm1814, %v1816, %v1812
    %v1818 = vmul.f32 1.0, %v1817
    %v1819 = vmul.f32 %v1818, 2.0
    %v1820 = vsub.f32 %v1819, 1.0
    %v1821 = vmul.f32 %v1818, %v1605
    %1823 = vrot.lane.b32.xlu0 %v1820, 64
    %v1824 = vpop.permute.xlu0 %1823
    %v1826 = vmul.f32 %v1818, %v1824
    %1828 = vrot.lane.b32.xlu0 %v1826, 32
    %v1829 = vpop.permute.xlu0 %1828
    %v1831 = vadd.f32 %v1821, %v1829
    %v1832 = vtanh.pop %v1831
    %1834 = vrot.lane.b32.xlu0 %v1832, 64
    %v1835 = vpop.permute.xlu0 %1834
    %v1837 = vmul.f32 %v1818, %v1835
    %v1838 = vpack.c.bf16 %v1837, %v1837
    %1839 = vmatpush.bf16.msra.mxu0 0
    %1840 = vmatpush.bf16.msra.mxu0 0
    %1841 = vmatpush.bf16.msra.mxu0 0
    %1842 = vmatpush.bf16.msra.mxu0 0
    %1843 = vmatpush.bf16.msra.mxu0 0
    %1844 = vmatpush.bf16.msra.mxu0 0
    %1845 = vmatpush.bf16.msra.mxu0 %v247
    %1846 = vmatpush.bf16.msra.mxu0 %v246
    %1847 = vmatmul.bf16.gmra.mxu0 %v1701
    %v1848 = vpop.f32.mrf.mxu0
    %v1849 = vadd.f32 0.0, %v1848
    %v1850 = vpop.f32.mrf.mxu0
    %1851 = vdwg.mxu0
    %1853 = vrot.lane.b32.xlu0 %v1838, 32
    %v1854 = vpop.permute.xlu0 %1853
    %v1856 = vsel %vm180, %v1854, 0
    %1858 = vmatpush.bf16.msra.mxu0 0
    %1859 = vmatpush.bf16.msra.mxu0 0
    %1860 = vmatpush.bf16.msra.mxu0 0
    %1861 = vmatpush.bf16.msra.mxu0 0
    %1862 = vmatpush.bf16.msra.mxu0 0
    %1863 = vmatpush.bf16.msra.mxu0 0
    %1864 = vmatpush.bf16.msra.mxu0 %v275
    %1865 = vmatpush.bf16.msra.mxu0 %v274
    %1866 = vmatmul.bf16.gmra.mxu0 %v1856
    %v1867 = vpop.f32.mrf.mxu0
    %v1868 = vadd.f32 %v1849, %v1867
    %v1869 = vpop.f32.mrf.mxu0
    %1870 = vdwg.mxu0
    %v1871 = vadd.f32 %v1868, %v80
    %v1872 = vxor.u32 %v1871, 2147483648
    %v1873 = vmul.f32 %v1872, 1.442695
    %v1874 = vpow.pop %v1873
    %v1875 = vadd.f32 %v1874, 1.0
    %v1876 = vrcp.pop %v1875
    %v1877 = vmul.f32 %v1875, %v1876
    %v1878 = vsub.f32 1.0, %v1877
    %v1879 = vmul.f32 %v1876, %v1878
    %v1880 = vadd.f32 %v1876, %v1879
    %vm1881 = vweird.f32 %v1875
    %vm1882 = vweird.f32 %v1876
    %vm1883 = vmor %vm1881, %vm1882
    %v1884 = vsel %vm1883, %v1876, %v1880
    %v1885 = vand.u32 2147483647, %v1875
    %vm1886 = vcmp.eq.f32.partialorder %v1885, 8.507059e+37
    %v1887 = vand.u32 %v1875, 2147483648
    %v1888 = vor.u32 1.1754944e-38, %v1887
    %v1889 = vsel %vm1886, %v1888, %v1884
    %v1890 = vmul.f32 1.0, %v1889
    %v1891 = vmul.f32 %v1890, 2.0
    %v1892 = vsub.f32 %v1891, 1.0
    %v1893 = vmul.f32 %v1890, %v1677
    %1895 = vrot.lane.b32.xlu0 %v1892, 64
    %v1896 = vpop.permute.xlu0 %1895
    %v1898 = vmul.f32 %v1890, %v1896
    %1900 = vrot.lane.b32.xlu0 %v1898, 32
    %v1901 = vpop.permute.xlu0 %1900
    %v1903 = vadd.f32 %v1893, %v1901
    %v1904 = vtanh.pop %v1903
    %1906 = vrot.lane.b32.xlu0 %v1904, 64
    %v1907 = vpop.permute.xlu0 %1906
    %v1909 = vmul.f32 %v1890, %v1907
    %v1910 = vpack.c.bf16 %v1909, %v1909
    %1912 = vrot.lane.b32.xlu0 %v1910, 32
    %v1913 = vpop.permute.xlu0 %1912
    %v1918 = vunpack.c.l.b16 %v116
    %v1919 = vunpack.c.l.b16 %v117
    %v1920 = vunpack.c.l.b16 %v118
    %v1921 = vunpack.c.l.b16 %v119
    %v1922 = vpack.c.b16 %v1919, %v1918
    %v1923 = vpack.c.b16 %v1921, %v1920
    %v1927 = vsel %vm180, %v1913, 0
    %1929 = vmatpush.bf16.msra.mxu0 0
    %1930 = vmatpush.bf16.msra.mxu0 0
    %1931 = vmatpush.bf16.msra.mxu0 0
    %1932 = vmatpush.bf16.msra.mxu0 0
    %1933 = vmatpush.bf16.msra.mxu0 0
    %1934 = vmatpush.bf16.msra.mxu0 0
    %1935 = vmatpush.bf16.msra.mxu0 %v1923
    %1936 = vmatpush.bf16.msra.mxu0 %v1922
    %1937 = vmatmul.bf16.gmra.mxu0 %v1927
    %v1938 = vpop.f32.mrf.mxu0
    %v1939 = vadd.f32 %v134, %v1938
    %v1940 = vpop.f32.mrf.mxu0
    %1941 = vdwg.mxu0
    %v1942 = vmul.f32 %v1939, 1.442695
    %v1943 = vpow.pop %v1942
    %v1944 = vsel %vm367, %v1943, 0.0
    %1945 = vadd.xlane.f32.xlu0 %v1944
    %v1946 = vpop.xlane.xlu0 %1945
    %v1947 = vrcp.pop %v1946
    %v1948 = vmul.f32 %v1946, %v1947
    %v1949 = vsub.f32 2.0, %v1948
    %v1950 = vmul.f32 %v1947, %v1949
    %v1951 = vmul.f32 %v1943, %v1950
    %1952 = vst.msk [vmem:[%s12 + $0x7] sm:$0x1] %vm367, %v1951
    %vm1953 = vcmp.le.f32.partialorder %v1951, %v150
    %v1954 = vsel %vm1953, 1, 0
    %v1955 = vcvt.s32.f32 %v1954
    %1957 = vrot.lane.b32.xlu0 %v1951, 1
    %v1958 = vpop.permute.xlu0 %1957
    %v1960 = vsub.f32 %v1951, %v1958
    %1962 = vrot.lane.b32.xlu0 %v1960, 127
    %v1963 = vpop.permute.xlu0 %1962
    %v1965 = vmul.f32 %v1955, %v1963
    %v1966 = vadd.f32 %v1951, %v1965
    %1967 = vrot.lane.b32.xlu0 %v1951, 127
    %v1968 = vpop.permute.xlu0 %1967
    %v1970 = vadd.f32 %v1951, %v1968
    %vm1971 = vcmp.le.f32.partialorder %v1970, %v150
    %v1972 = vsel %vm1971, 1, 0
    %v1973 = vcvt.s32.f32 %v1972
    %v1974 = vadd.f32 %v1955, %v1973
    %1975 = vrot.lane.b32.xlu0 %v1960, 126
    %v1976 = vpop.permute.xlu0 %1975
    %v1978 = vmul.f32 %v1973, %v1976
    %v1979 = vadd.f32 %v1966, %v1978
    %1980 = vrot.lane.b32.xlu0 %v1951, 126
    %v1981 = vpop.permute.xlu0 %1980
    %v1983 = vadd.f32 %v1970, %v1981
    %vm1984 = vcmp.le.f32.partialorder %v1983, %v150
    %v1985 = vsel %vm1984, 1, 0
    %v1986 = vcvt.s32.f32 %v1985
    %v1987 = vadd.f32 %v1974, %v1986
    %1988 = vrot.lane.b32.xlu0 %v1960, 125
    %v1989 = vpop.permute.xlu0 %1988
    %v1991 = vmul.f32 %v1986, %v1989
    %v1992 = vadd.f32 %v1979, %v1991
    %vm1993 = vcmp.ne.f32.partialorder %v166, -1.0
    %v1994 = vsel %vm1993, %v166, %v1987
    %v1995 = vcvt.f32.s32.to.zero.pseudo %v1994
    %1996 = vrot.lane.b32.xlu0 %v1995, 7
    %v1997 = vpop.permute.xlu0 %1996
    %vm1998 = vcmask 57400
    %1999 = vst.msk [vmem:[#allocation7] sm:$0x1] %vm1998, %v1997
    %2001 = vrot.lane.b32.xlu0 %v1992, 7
    %v2002 = vpop.permute.xlu0 %2001
    %2004 = vst.msk [vmem:[#allocation8] sm:$0x1] %vm1998, %v2002
    // Predicated region
    $region50: #{tpu_custom_call.1} parent=1 // pred_check
      _
    $region51: #{tpu_custom_call.1} parent=1 // pred_check_branch
      %2006 = sbr.rel (0) target = $region53
    $region52: #{tpu_custom_call.1} parent=1 // pred_region
      %2008 = vsyncadd [#allocation3], 0
      %s2010 = sshll.u32 [#allocation7], 4
      %s2011 = int_to_ptr.vmem [resolvable:$true] %s2010
      %s2012 = sshll.u32 %s10, 4
      %s2013 = int_to_ptr.hbm [resolvable:$true] %s2012
      %2015 = dma.vmem_to_hbm [thread:$0]  %s2011, 16, %s2013, [#allocation3]
    $region53: #{tpu_custom_call.1} parent=1 // pred_fallthru
      _
    // Predicated region
    $region54: #{tpu_custom_call.1} parent=1 // pred_check
      _
    $region55: #{tpu_custom_call.1} parent=1 // pred_check_branch
      %2017 = sbr.rel (0) target = $region57
    $region56: #{tpu_custom_call.1} parent=1 // pred_region
      %2019 = vsyncadd [#allocation9], 0
      %s2021 = sshll.u32 [#allocation8], 4
      %s2022 = int_to_ptr.vmem [resolvable:$true] %s2021
      %s2023 = sshll.u32 %s11, 4
      %s2024 = int_to_ptr.hbm [resolvable:$true] %s2023
      %2026 = dma.vmem_to_hbm [thread:$0]  %s2022, 16, %s2024, [#allocation9]
    $region57: #{tpu_custom_call.1} parent=1 // pred_fallthru
      _
    // Predicated region
    $region58: #{tpu_custom_call.1} parent=1 // pred_check
      _
    $region59: #{tpu_custom_call.1} parent=1 // pred_check_branch
      %2028 = sbr.rel (0) target = $region61
    $region60: #{tpu_custom_call.1} parent=1 // pred_region
      _
    $region61: #{tpu_custom_call.1} parent=1 // pred_fallthru
      _
    // Predicated region
    $region62: #{tpu_custom_call.1} parent=1 // pred_check
      _
    $region63: #{tpu_custom_call.1} parent=1 // pred_check_branch
      %2030 = sbr.rel (0) target = $region65
    $region64: #{tpu_custom_call.1} parent=1 // pred_region
      %2032 = dma.done [#allocation3], 16
    $region65: #{tpu_custom_call.1} parent=1 // pred_fallthru
      _
    // Predicated region
    $region66: #{tpu_custom_call.1} parent=1 // pred_check
      _
    $region67: #{tpu_custom_call.1} parent=1 // pred_check_branch
      %2034 = sbr.rel (0) target = $region69
    $region68: #{tpu_custom_call.1} parent=1 // pred_region
      %2036 = dma.done [#allocation9], 16
    $region69: #{tpu_custom_call.1} parent=1 // pred_fallthru
      _
    // Predicated region
    $region70: #{tpu_custom_call.1} parent=1 // pred_check
      _
    $region71: #{tpu_custom_call.1} parent=1 // pred_check_branch
      %2038 = sbr.rel (0) target = $region73
    $region72: #{tpu_custom_call.1} parent=1 // pred_region
      _
    $region73: #{tpu_custom_call.1} parent=1 // pred_fallthru
      _
    %2039 = vsyncpa [#allocation3], 1
    %2040 = vsyncpa [#allocation9], 1
    %2041 = vsyncpa [#allocation4], 1
    %2042 = vsyncpa [#allocation6], 1

</llo_original>
